<compile_context>
chip_gen: v6e
topology: v6e:2x2x1
jax: 0.10.0
libtpu: 0.0.40
codegen_flags: <defaults>
</compile_context>

<pallas_src>
import jax
import jax.numpy as jnp
import numpy as np
from jax.experimental import pallas as pl
from jax.experimental.pallas import tpu as pltpu  # noqa: F401  (TPU backend registration)

SHIFT_DIRECTION = 1

# Static tables folding torch.roll + the second unfold (+ boundary zeros):
#   row n = (o + kh - 1 - shift) mod 7, zeroed where o + kh - 1 falls outside [0, 7).
_ROLL_IDX = np.array(
    [[(o + kh - 1 - SHIFT_DIRECTION) % 7 for o in range(7)] for kh in range(3)],
    dtype=np.int32)
_ROLL_VALID = np.array(
    [[1.0 if 0 <= o + kh - 1 <= 6 else 0.0 for o in range(7)] for kh in range(3)],
    dtype=np.float32)


# ---------------------------------------------------------------------------
# Pallas kernel: one lane-dense GEMM, bf16 operands, f32 accumulation.
# ---------------------------------------------------------------------------
def _gemm_kernel(u_ref, w_ref, o_ref):
    o_ref[...] = jnp.dot(u_ref[...], w_ref[...],
                         preferred_element_type=jnp.float32)


# ---------------------------------------------------------------------------
# One-time weight preprocessing (off the per-forward critical path).
#   Wc[(kh, j, c), out] = sum_i w2[c, j, i] * w1[out, c//8, kh, j, i]
# Folded in f32 (HIGHEST), then a single bf16 cast of the composite weight.
# ---------------------------------------------------------------------------
def prepare_weights(w1, w2):
    w2r = w2.astype(jnp.float32).reshape(32, 8, 3, 8)            # [a, b, j, i]
    wc = jnp.einsum('abji,oakji->kjabo', w2r, w1.astype(jnp.float32),
                    precision=jax.lax.Precision.HIGHEST)         # [kh, j, a, b, out]
    return wc.reshape(2304, 512).astype(jnp.bfloat16)


# ---------------------------------------------------------------------------
# Forward
# ---------------------------------------------------------------------------
@jax.jit
def kernel_generated_5_forward(x, wc):
    # First unfold (k=3, pad=1 along the last spatial dim), channels last.
    x2 = x.reshape(256, 7, 7).astype(jnp.float32)                # [c, n, p]
    xp = jnp.pad(x2, ((0, 0), (0, 0), (1, 1)))                   # pad p
    uj = jnp.stack([xp[:, :, j:j + 7] for j in range(3)], 0)     # [j, c, n, p] = x[c,n,p+j-1]

    # Fold roll + second unfold + boundary zeros with static indexing.
    ukh = uj[:, :, _ROLL_IDX, :]                                 # [j, c, kh, o, p]
    ukh = ukh * _ROLL_VALID[None, None, :, :, None]

    # Lane-dense LHS: rows (o,p), columns (kh, j, c); pad rows 49 -> 56, cast bf16.
    u = ukh.transpose(3, 4, 2, 0, 1).reshape(49, 2304)           # [(o,p), (kh,j,c)]
    u = jnp.pad(u, ((0, 7), (0, 0))).astype(jnp.bfloat16)        # (56, 2304)

    y = pl.pallas_call(
        _gemm_kernel,
        out_shape=jax.ShapeDtypeStruct((56, 512), jnp.float32),
        grid=(1,),
        in_specs=[
            pl.BlockSpec((56, 2304), lambda i: (0, 0)),          # activations (bf16)
            pl.BlockSpec((2304, 512), lambda i: (0, 0)),         # composite weight (bf16)
        ],
        out_specs=pl.BlockSpec((56, 512), lambda i: (0, 0)),
        compiler_params=pltpu.CompilerParams(
            dimension_semantics=("arbitrary",)),
    )(u, wc)

    # Back to the module's NCHW output layout.
    return y[:49].T.reshape(1, 512, 7, 7)


# ---------------------------------------------------------------------------
# Pure-JAX reference mirroring the torch ops (correctness check).
# ---------------------------------------------------------------------------
def reference_forward(x, w1, w2):
    shift = SHIFT_DIRECTION
    t3 = x.reshape(1, 1792, 7, 1)
    t3p = jnp.pad(t3, ((0, 0), (0, 0), (1, 1), (0, 0)))[:, :, :, 0]       # (1,1792,9)
    t3u = jnp.stack([t3p[:, :, h:h + 3] for h in range(7)], axis=-1)      # (1,1792,3,7)
    t3r = t3u.reshape(1, 256, 7, 3, 7)
    t4 = jnp.einsum('lknjm,kji->lknjmi', t3r, w2)
    t5 = t4.reshape(1, 32, 8, 7, 3, 7, 8).sum(axis=2)
    t6 = jnp.roll(t5, shift, axis=2)
    t6r = t6.reshape(1, 32, 7, 168)
    t6p = jnp.pad(t6r, ((0, 0), (0, 0), (1, 1), (0, 0)))
    blk = jnp.stack([t6p[:, :, h:h + 3, :] for h in range(7)], axis=2)    # (1,32,7,3,168)
    t6u = jnp.transpose(blk, (0, 1, 3, 2, 4)).reshape(1, 32, 3, 7, 3, 7, 8)
    y = jnp.einsum('nlkojpm,ilkjm->niop', t6u, w1,
                   precision=jax.lax.Precision.HIGHEST)
    return y


if __name__ == "__main__":
    key = jax.random.PRNGKey(0)
    kx, k1, k2 = jax.random.split(key, 3)
    # Deterministic stand-ins for the torch.randn parameters / input
    # (shapes are pinned by the module's reshapes).
    x = jax.random.normal(kx, (1, 256, 7, 7), dtype=jnp.float32)
    w1 = jax.random.normal(k1, (512, 32, 3, 3, 8), dtype=jnp.float32)
    w2 = jax.random.normal(k2, (256, 3, 8), dtype=jnp.float32)

    # One-time weight fold (off the per-forward critical path).
    wc = jax.block_until_ready(prepare_weights(w1, w2))

    y = jax.block_until_ready(kernel_generated_5_forward(x, wc))
    assert y.shape == (1, 512, 7, 7) and y.dtype == jnp.float32

    y_ref = jax.block_until_ready(jax.jit(reference_forward)(x, w1, w2))
    np.testing.assert_allclose(np.asarray(y), np.asarray(y_ref),
                               rtol=2e-2, atol=2.0)
    print("KERNEL_OK")
</pallas_src>

<mosaic_0001>
module attributes {stable_mosaic.version = 11 : i64} {
  func.func @_gemm_kernel(%arg0: i32, %arg1: memref<56x2304xbf16, #tpu.memory_space<vmem>>, %arg2: memref<2304x512xbf16, #tpu.memory_space<vmem>>, %arg3: memref<56x512xf32, #tpu.memory_space<vmem>>) attributes {dimension_semantics = [#tpu.dimension_semantics<arbitrary>], iteration_bounds = array<i64: 1>, scalar_prefetch = 0 : i64, scratch_operands = 0 : i64, tpu.core_type = #tpu.core_type<tc>, window_params = [{pipeline_mode = #tpu.pipeline_mode<synchronous>, transform_indices = @transform_0, window_bounds = array<i64: 56, 2304>}, {pipeline_mode = #tpu.pipeline_mode<synchronous>, transform_indices = @transform_1, window_bounds = array<i64: 2304, 512>}, {pipeline_mode = #tpu.pipeline_mode<synchronous>, transform_indices = @transform_2, window_bounds = array<i64: 56, 512>}]} {
    %c0 = arith.constant 0 : index
    %c0_0 = arith.constant 0 : index
    %0 = vector.load %arg1[%c0, %c0_0] : memref<56x2304xbf16, #tpu.memory_space<vmem>>, vector<56x2304xbf16>
    %c0_1 = arith.constant 0 : index
    %c0_2 = arith.constant 0 : index
    %1 = vector.load %arg2[%c0_1, %c0_2] : memref<2304x512xbf16, #tpu.memory_space<vmem>>, vector<2304x512xbf16>
    %cst = arith.constant dense<0.000000e+00> : vector<56x512xf32>
    %2 = tpu.matmul %0, %1, %cst {dimension_numbers = #tpu.dot_dimension_numbers<[1], [0], [0], [1], [0, 0, 1, 1], [], []>} : vector<56x2304xbf16>, vector<2304x512xbf16>, vector<56x512xf32> -> vector<56x512xf32>
    %c0_3 = arith.constant 0 : index
    %c0_4 = arith.constant 0 : index
    %3 = vector.load %arg3[%c0_3, %c0_4] : memref<56x512xf32, #tpu.memory_space<vmem>>, vector<56x512xf32>
    tpu.vector_store %arg3[%c0_3, %c0_4], %2 {strides = array<i32>} : memref<56x512xf32, #tpu.memory_space<vmem>>, vector<56x512xf32>,
    return
  }
  func.func @transform_0(%arg0: i32) -> (i32, i32) {
    %c0_i32 = arith.constant 0 : i32
    %c0_i32_0 = arith.constant 0 : i32
    %c0_i32_1 = arith.constant 0 : i32
    return %c0_i32, %c0_i32_0 : i32, i32
  }
  func.func @transform_1(%arg0: i32) -> (i32, i32) {
    %c0_i32 = arith.constant 0 : i32
    %c0_i32_0 = arith.constant 0 : i32
    %c0_i32_1 = arith.constant 0 : i32
    return %c0_i32, %c0_i32_0 : i32, i32
  }
  func.func @transform_2(%arg0: i32) -> (i32, i32) {
    %c0_i32 = arith.constant 0 : i32
    %c0_i32_0 = arith.constant 0 : i32
    %c0_i32_1 = arith.constant 0 : i32
    return %c0_i32, %c0_i32_0 : i32, i32
  }
}

</mosaic_0001>

<llo_original>
// kernel: kernel_generated_5_forward.1
$region0: #{kernel_generated_5_forward.1}
  #allocation0 [shape = 'u32[]', space=smem, size = 0x4, offset = 0x4, fixed_abs, tag = 'smem constant byte address 0x4 - core index']
  #allocation1 [shape = 'u32[144,128]{1,0:T(1,128)}', space=vmem, size = 0x12000, scoped, tag = 'internal scratch']
  %s0 = inlined_call_operand.vmem [shape: bf16[56,2304], index: 0, kind: input, shape index: {}]
  %s1 = inlined_call_operand.vmem [shape: bf16[2304,512], index: 1, kind: input, shape index: {}]
  %s2 = inlined_call_operand.vmem [shape: f32[56,512], index: 2, kind: output, shape index: {}]
  %s3 = sld [smem:[#allocation0]]
  $region18: #{kernel_generated_5_forward.1} parent=0
    _
  %s5 = ssub.s32 1, %s3
  %s6 = scalar_select 0, %s5, %s3
  // Predicated region
  $region2: #{kernel_generated_5_forward.1} parent=0 // pred_check
    _
  $region3: #{kernel_generated_5_forward.1} parent=0 // pred_check_branch
    %8 = sbr.rel (0) target = $region5
  $region4: #{kernel_generated_5_forward.1} parent=0 // pred_region
    _
  $region5: #{kernel_generated_5_forward.1} parent=0 // pred_fallthru
    _
  // Predicated region
  $region6: #{kernel_generated_5_forward.1} parent=0 // pred_check
    _
  $region7: #{kernel_generated_5_forward.1} parent=0 // pred_check_branch
    %10 = sbr.rel (0) target = $region9
  $region8: #{kernel_generated_5_forward.1} parent=0 // pred_region
    _
  $region9: #{kernel_generated_5_forward.1} parent=0 // pred_fallthru
    _
  %v11 = vld [vmem:[%s0] sm:$0xff]
  %v12 = vld [vmem:[%s0 + $0x8] sm:$0xff]
  %v13 = vld [vmem:[%s0 + $0x10] sm:$0xff]
  %v14 = vld [vmem:[%s0 + $0x18] sm:$0xff]
  %v15 = vld [vmem:[%s0 + $0x20] sm:$0xff]
  %v16 = vld [vmem:[%s0 + $0x28] sm:$0xff]
  %v17 = vld [vmem:[%s0 + $0x30] sm:$0xff]
  %v18 = vld [vmem:[%s0 + $0x38] sm:$0xff]
  %v19 = vld [vmem:[%s0 + $0x40] sm:$0xff]
  %v20 = vld [vmem:[%s0 + $0x48] sm:$0xff]
  %v21 = vld [vmem:[%s0 + $0x50] sm:$0xff]
  %v22 = vld [vmem:[%s0 + $0x58] sm:$0xff]
  %v23 = vld [vmem:[%s0 + $0x60] sm:$0xff]
  %v24 = vld [vmem:[%s0 + $0x68] sm:$0xff]
  %v25 = vld [vmem:[%s0 + $0x70] sm:$0xff]
  %v26 = vld [vmem:[%s0 + $0x78] sm:$0xff]
  %v27 = vld [vmem:[%s0 + $0x80] sm:$0xff]
  %v28 = vld [vmem:[%s0 + $0x88] sm:$0xff]
  %v29 = vld [vmem:[%s0 + $0x90] sm:$0xff]
  %v30 = vld [vmem:[%s0 + $0x98] sm:$0xff]
  %v31 = vld [vmem:[%s0 + $0xa0] sm:$0xff]
  %v32 = vld [vmem:[%s0 + $0xa8] sm:$0xff]
  %v33 = vld [vmem:[%s0 + $0xb0] sm:$0xff]
  %v34 = vld [vmem:[%s0 + $0xb8] sm:$0xff]
  %v35 = vld [vmem:[%s0 + $0xc0] sm:$0xff]
  %v36 = vld [vmem:[%s0 + $0xc8] sm:$0xff]
  %v37 = vld [vmem:[%s0 + $0xd0] sm:$0xff]
  %v38 = vld [vmem:[%s0 + $0xd8] sm:$0xff]
  %v39 = vld [vmem:[%s0 + $0xe0] sm:$0xff]
  %v40 = vld [vmem:[%s0 + $0xe8] sm:$0xff]
  %v41 = vld [vmem:[%s0 + $0xf0] sm:$0xff]
  %v42 = vld [vmem:[%s0 + $0xf8] sm:$0xff]
  %v43 = vld [vmem:[%s0 + $0x100] sm:$0xff]
  %v44 = vld [vmem:[%s0 + $0x108] sm:$0xff]
  %v45 = vld [vmem:[%s0 + $0x110] sm:$0xff]
  %v46 = vld [vmem:[%s0 + $0x118] sm:$0xff]
  %v47 = vld [vmem:[%s0 + $0x120] sm:$0xff]
  %v48 = vld [vmem:[%s0 + $0x128] sm:$0xff]
  %v49 = vld [vmem:[%s0 + $0x130] sm:$0xff]
  %v50 = vld [vmem:[%s0 + $0x138] sm:$0xff]
  %v51 = vld [vmem:[%s0 + $0x140] sm:$0xff]
  %v52 = vld [vmem:[%s0 + $0x148] sm:$0xff]
  %v53 = vld [vmem:[%s0 + $0x150] sm:$0xff]
  %v54 = vld [vmem:[%s0 + $0x158] sm:$0xff]
  %v55 = vld [vmem:[%s0 + $0x160] sm:$0xff]
  %v56 = vld [vmem:[%s0 + $0x168] sm:$0xff]
  %v57 = vld [vmem:[%s0 + $0x170] sm:$0xff]
  %v58 = vld [vmem:[%s0 + $0x178] sm:$0xff]
  %v59 = vld [vmem:[%s0 + $0x180] sm:$0xff]
  %v60 = vld [vmem:[%s0 + $0x188] sm:$0xff]
  %v61 = vld [vmem:[%s0 + $0x190] sm:$0xff]
  %v62 = vld [vmem:[%s0 + $0x198] sm:$0xff]
  %v63 = vld [vmem:[%s0 + $0x1a0] sm:$0xff]
  %v64 = vld [vmem:[%s0 + $0x1a8] sm:$0xff]
  %v65 = vld [vmem:[%s0 + $0x1b0] sm:$0xff]
  %v66 = vld [vmem:[%s0 + $0x1b8] sm:$0xff]
  %v67 = vld [vmem:[%s0 + $0x1c0] sm:$0xff]
  %v68 = vld [vmem:[%s0 + $0x1c8] sm:$0xff]
  %v69 = vld [vmem:[%s0 + $0x1d0] sm:$0xff]
  %v70 = vld [vmem:[%s0 + $0x1d8] sm:$0xff]
  %v71 = vld [vmem:[%s0 + $0x1e0] sm:$0xff]
  %v72 = vld [vmem:[%s0 + $0x1e8] sm:$0xff]
  %v73 = vld [vmem:[%s0 + $0x1f0] sm:$0xff]
  %v74 = vld [vmem:[%s1] sm:$0xff]
  %v75 = vld [vmem:[%s1 + $0x8] sm:$0xff]
  %v76 = vld [vmem:[%s1 + $0x10] sm:$0xff]
  %v77 = vld [vmem:[%s1 + $0x18] sm:$0xff]
  %v78 = vld [vmem:[%s1 + $0x20] sm:$0xff]
  %v79 = vld [vmem:[%s1 + $0x28] sm:$0xff]
  %v80 = vld [vmem:[%s1 + $0x30] sm:$0xff]
  %v81 = vld [vmem:[%s1 + $0x38] sm:$0xff]
  %v82 = vld [vmem:[%s1 + $0x40] sm:$0xff]
  %v83 = vld [vmem:[%s1 + $0x48] sm:$0xff]
  %v84 = vld [vmem:[%s1 + $0x50] sm:$0xff]
  %v85 = vld [vmem:[%s1 + $0x58] sm:$0xff]
  %v86 = vld [vmem:[%s1 + $0x60] sm:$0xff]
  %v87 = vld [vmem:[%s1 + $0x68] sm:$0xff]
  %v88 = vld [vmem:[%s1 + $0x70] sm:$0xff]
  %v89 = vld [vmem:[%s1 + $0x78] sm:$0xff]
  %v90 = vld [vmem:[%s1 + $0x80] sm:$0xff]
  %v91 = vld [vmem:[%s1 + $0x88] sm:$0xff]
  %v92 = vld [vmem:[%s1 + $0x90] sm:$0xff]
  %v93 = vld [vmem:[%s1 + $0x98] sm:$0xff]
  %v94 = vld [vmem:[%s1 + $0xa0] sm:$0xff]
  %v95 = vld [vmem:[%s1 + $0xa8] sm:$0xff]
  %v96 = vld [vmem:[%s1 + $0xb0] sm:$0xff]
  %v97 = vld [vmem:[%s1 + $0xb8] sm:$0xff]
  %v98 = vld [vmem:[%s1 + $0xc0] sm:$0xff]
  %v99 = vld [vmem:[%s1 + $0xc8] sm:$0xff]
  %v100 = vld [vmem:[%s1 + $0xd0] sm:$0xff]
  %v101 = vld [vmem:[%s1 + $0xd8] sm:$0xff]
  %v102 = vld [vmem:[%s1 + $0xe0] sm:$0xff]
  %v103 = vld [vmem:[%s1 + $0xe8] sm:$0xff]
  %v104 = vld [vmem:[%s1 + $0xf0] sm:$0xff]
  %v105 = vld [vmem:[%s1 + $0xf8] sm:$0xff]
  %v106 = vld [vmem:[%s1 + $0x100] sm:$0xff]
  %v107 = vld [vmem:[%s1 + $0x108] sm:$0xff]
  %v108 = vld [vmem:[%s1 + $0x110] sm:$0xff]
  %v109 = vld [vmem:[%s1 + $0x118] sm:$0xff]
  %v110 = vld [vmem:[%s1 + $0x120] sm:$0xff]
  %v111 = vld [vmem:[%s1 + $0x128] sm:$0xff]
  %v112 = vld [vmem:[%s1 + $0x130] sm:$0xff]
  %v113 = vld [vmem:[%s1 + $0x138] sm:$0xff]
  %v114 = vld [vmem:[%s1 + $0x140] sm:$0xff]
  %v115 = vld [vmem:[%s1 + $0x148] sm:$0xff]
  %v116 = vld [vmem:[%s1 + $0x150] sm:$0xff]
  %v117 = vld [vmem:[%s1 + $0x158] sm:$0xff]
  %v118 = vld [vmem:[%s1 + $0x160] sm:$0xff]
  %v119 = vld [vmem:[%s1 + $0x168] sm:$0xff]
  %v120 = vld [vmem:[%s1 + $0x170] sm:$0xff]
  %v121 = vld [vmem:[%s1 + $0x178] sm:$0xff]
  %v122 = vld [vmem:[%s1 + $0x180] sm:$0xff]
  %v123 = vld [vmem:[%s1 + $0x188] sm:$0xff]
  %v124 = vld [vmem:[%s1 + $0x190] sm:$0xff]
  %v125 = vld [vmem:[%s1 + $0x198] sm:$0xff]
  %v126 = vld [vmem:[%s1 + $0x1a0] sm:$0xff]
  %v127 = vld [vmem:[%s1 + $0x1a8] sm:$0xff]
  %v128 = vld [vmem:[%s1 + $0x1b0] sm:$0xff]
  %v129 = vld [vmem:[%s1 + $0x1b8] sm:$0xff]
  %v130 = vld [vmem:[%s1 + $0x1c0] sm:$0xff]
  %v131 = vld [vmem:[%s1 + $0x1c8] sm:$0xff]
  %v132 = vld [vmem:[%s1 + $0x1d0] sm:$0xff]
  %v133 = vld [vmem:[%s1 + $0x1d8] sm:$0xff]
  %v134 = vld [vmem:[%s1 + $0x1e0] sm:$0xff]
  %v135 = vld [vmem:[%s1 + $0x1e8] sm:$0xff]
  %v136 = vld [vmem:[%s1 + $0x1f0] sm:$0xff]
  %v137 = vld [vmem:[%s1 + $0x1f8] sm:$0xff]
  %v138 = vld [vmem:[%s1 + $0x200] sm:$0xff]
  %v139 = vld [vmem:[%s1 + $0x208] sm:$0xff]
  %v140 = vld [vmem:[%s1 + $0x210] sm:$0xff]
  %v141 = vld [vmem:[%s1 + $0x218] sm:$0xff]
  %v142 = vld [vmem:[%s1 + $0x220] sm:$0xff]
  %v143 = vld [vmem:[%s1 + $0x228] sm:$0xff]
  %v144 = vld [vmem:[%s1 + $0x230] sm:$0xff]
  %v145 = vld [vmem:[%s1 + $0x238] sm:$0xff]
  %v146 = vld [vmem:[%s1 + $0x240] sm:$0xff]
  %v147 = vld [vmem:[%s1 + $0x248] sm:$0xff]
  %v148 = vld [vmem:[%s1 + $0x250] sm:$0xff]
  %v149 = vld [vmem:[%s1 + $0x258] sm:$0xff]
  %v150 = vld [vmem:[%s1 + $0x260] sm:$0xff]
  %v151 = vld [vmem:[%s1 + $0x268] sm:$0xff]
  %v152 = vld [vmem:[%s1 + $0x270] sm:$0xff]
  %v153 = vld [vmem:[%s1 + $0x278] sm:$0xff]
  %v154 = vld [vmem:[%s1 + $0x280] sm:$0xff]
  %v155 = vld [vmem:[%s1 + $0x288] sm:$0xff]
  %v156 = vld [vmem:[%s1 + $0x290] sm:$0xff]
  %v157 = vld [vmem:[%s1 + $0x298] sm:$0xff]
  %v158 = vld [vmem:[%s1 + $0x2a0] sm:$0xff]
  %v159 = vld [vmem:[%s1 + $0x2a8] sm:$0xff]
  %v160 = vld [vmem:[%s1 + $0x2b0] sm:$0xff]
  %v161 = vld [vmem:[%s1 + $0x2b8] sm:$0xff]
  %v162 = vld [vmem:[%s1 + $0x2c0] sm:$0xff]
  %v163 = vld [vmem:[%s1 + $0x2c8] sm:$0xff]
  %v164 = vld [vmem:[%s1 + $0x2d0] sm:$0xff]
  %v165 = vld [vmem:[%s1 + $0x2d8] sm:$0xff]
  %v166 = vld [vmem:[%s1 + $0x2e0] sm:$0xff]
  %v167 = vld [vmem:[%s1 + $0x2e8] sm:$0xff]
  %v168 = vld [vmem:[%s1 + $0x2f0] sm:$0xff]
  %v169 = vld [vmem:[%s1 + $0x2f8] sm:$0xff]
  %v170 = vld [vmem:[%s1 + $0x300] sm:$0xff]
  %v171 = vld [vmem:[%s1 + $0x308] sm:$0xff]
  %v172 = vld [vmem:[%s1 + $0x310] sm:$0xff]
  %v173 = vld [vmem:[%s1 + $0x318] sm:$0xff]
  %v174 = vld [vmem:[%s1 + $0x320] sm:$0xff]
  %v175 = vld [vmem:[%s1 + $0x328] sm:$0xff]
  %v176 = vld [vmem:[%s1 + $0x330] sm:$0xff]
  %v177 = vld [vmem:[%s1 + $0x338] sm:$0xff]
  %v178 = vld [vmem:[%s1 + $0x340] sm:$0xff]
  %v179 = vld [vmem:[%s1 + $0x348] sm:$0xff]
  %v180 = vld [vmem:[%s1 + $0x350] sm:$0xff]
  %v181 = vld [vmem:[%s1 + $0x358] sm:$0xff]
  %v182 = vld [vmem:[%s1 + $0x360] sm:$0xff]
  %v183 = vld [vmem:[%s1 + $0x368] sm:$0xff]
  %v184 = vld [vmem:[%s1 + $0x370] sm:$0xff]
  %v185 = vld [vmem:[%s1 + $0x378] sm:$0xff]
  %v186 = vld [vmem:[%s1 + $0x380] sm:$0xff]
  %v187 = vld [vmem:[%s1 + $0x388] sm:$0xff]
  %v188 = vld [vmem:[%s1 + $0x390] sm:$0xff]
  %v189 = vld [vmem:[%s1 + $0x398] sm:$0xff]
  %v190 = vld [vmem:[%s1 + $0x3a0] sm:$0xff]
  %v191 = vld [vmem:[%s1 + $0x3a8] sm:$0xff]
  %v192 = vld [vmem:[%s1 + $0x3b0] sm:$0xff]
  %v193 = vld [vmem:[%s1 + $0x3b8] sm:$0xff]
  %v194 = vld [vmem:[%s1 + $0x3c0] sm:$0xff]
  %v195 = vld [vmem:[%s1 + $0x3c8] sm:$0xff]
  %v196 = vld [vmem:[%s1 + $0x3d0] sm:$0xff]
  %v197 = vld [vmem:[%s1 + $0x3d8] sm:$0xff]
  %v198 = vld [vmem:[%s1 + $0x3e0] sm:$0xff]
  %v199 = vld [vmem:[%s1 + $0x3e8] sm:$0xff]
  %v200 = vld [vmem:[%s1 + $0x3f0] sm:$0xff]
  %v201 = vld [vmem:[%s1 + $0x3f8] sm:$0xff]
  %v202 = vld [vmem:[%s1 + $0x400] sm:$0xff]
  %v203 = vld [vmem:[%s1 + $0x408] sm:$0xff]
  %v204 = vld [vmem:[%s1 + $0x410] sm:$0xff]
  %v205 = vld [vmem:[%s1 + $0x418] sm:$0xff]
  %v206 = vld [vmem:[%s1 + $0x420] sm:$0xff]
  %v207 = vld [vmem:[%s1 + $0x428] sm:$0xff]
  %v208 = vld [vmem:[%s1 + $0x430] sm:$0xff]
  %v209 = vld [vmem:[%s1 + $0x438] sm:$0xff]
  %v210 = vld [vmem:[%s1 + $0x440] sm:$0xff]
  %v211 = vld [vmem:[%s1 + $0x448] sm:$0xff]
  %v212 = vld [vmem:[%s1 + $0x450] sm:$0xff]
  %v213 = vld [vmem:[%s1 + $0x458] sm:$0xff]
  %v214 = vld [vmem:[%s1 + $0x460] sm:$0xff]
  %v215 = vld [vmem:[%s1 + $0x468] sm:$0xff]
  %v216 = vld [vmem:[%s1 + $0x470] sm:$0xff]
  %v217 = vld [vmem:[%s1 + $0x478] sm:$0xff]
  %v218 = vld [vmem:[%s1 + $0x480] sm:$0xff]
  %v219 = vld [vmem:[%s1 + $0x488] sm:$0xff]
  %v220 = vld [vmem:[%s1 + $0x490] sm:$0xff]
  %v221 = vld [vmem:[%s1 + $0x498] sm:$0xff]
  %v222 = vld [vmem:[%s1 + $0x4a0] sm:$0xff]
  %v223 = vld [vmem:[%s1 + $0x4a8] sm:$0xff]
  %v224 = vld [vmem:[%s1 + $0x4b0] sm:$0xff]
  %v225 = vld [vmem:[%s1 + $0x4b8] sm:$0xff]
  %v226 = vld [vmem:[%s1 + $0x4c0] sm:$0xff]
  %v227 = vld [vmem:[%s1 + $0x4c8] sm:$0xff]
  %v228 = vld [vmem:[%s1 + $0x4d0] sm:$0xff]
  %v229 = vld [vmem:[%s1 + $0x4d8] sm:$0xff]
  %v230 = vld [vmem:[%s1 + $0x4e0] sm:$0xff]
  %v231 = vld [vmem:[%s1 + $0x4e8] sm:$0xff]
  %v232 = vld [vmem:[%s1 + $0x4f0] sm:$0xff]
  %v233 = vld [vmem:[%s1 + $0x4f8] sm:$0xff]
  %v234 = vld [vmem:[%s1 + $0x500] sm:$0xff]
  %v235 = vld [vmem:[%s1 + $0x508] sm:$0xff]
  %v236 = vld [vmem:[%s1 + $0x510] sm:$0xff]
  %v237 = vld [vmem:[%s1 + $0x518] sm:$0xff]
  %v238 = vld [vmem:[%s1 + $0x520] sm:$0xff]
  %v239 = vld [vmem:[%s1 + $0x528] sm:$0xff]
  %v240 = vld [vmem:[%s1 + $0x530] sm:$0xff]
  %v241 = vld [vmem:[%s1 + $0x538] sm:$0xff]
  %v242 = vld [vmem:[%s1 + $0x540] sm:$0xff]
  %v243 = vld [vmem:[%s1 + $0x548] sm:$0xff]
  %v244 = vld [vmem:[%s1 + $0x550] sm:$0xff]
  %v245 = vld [vmem:[%s1 + $0x558] sm:$0xff]
  %v246 = vld [vmem:[%s1 + $0x560] sm:$0xff]
  %v247 = vld [vmem:[%s1 + $0x568] sm:$0xff]
  %v248 = vld [vmem:[%s1 + $0x570] sm:$0xff]
  %v249 = vld [vmem:[%s1 + $0x578] sm:$0xff]
  %v250 = vld [vmem:[%s1 + $0x580] sm:$0xff]
  %v251 = vld [vmem:[%s1 + $0x588] sm:$0xff]
  %v252 = vld [vmem:[%s1 + $0x590] sm:$0xff]
  %v253 = vld [vmem:[%s1 + $0x598] sm:$0xff]
  %v254 = vld [vmem:[%s1 + $0x5a0] sm:$0xff]
  %v255 = vld [vmem:[%s1 + $0x5a8] sm:$0xff]
  %v256 = vld [vmem:[%s1 + $0x5b0] sm:$0xff]
  %v257 = vld [vmem:[%s1 + $0x5b8] sm:$0xff]
  %v258 = vld [vmem:[%s1 + $0x5c0] sm:$0xff]
  %v259 = vld [vmem:[%s1 + $0x5c8] sm:$0xff]
  %v260 = vld [vmem:[%s1 + $0x5d0] sm:$0xff]
  %v261 = vld [vmem:[%s1 + $0x5d8] sm:$0xff]
  %v262 = vld [vmem:[%s1 + $0x5e0] sm:$0xff]
  %v263 = vld [vmem:[%s1 + $0x5e8] sm:$0xff]
  %v264 = vld [vmem:[%s1 + $0x5f0] sm:$0xff]
  %v265 = vld [vmem:[%s1 + $0x5f8] sm:$0xff]
  %v266 = vld [vmem:[%s1 + $0x600] sm:$0xff]
  %v267 = vld [vmem:[%s1 + $0x608] sm:$0xff]
  %v268 = vld [vmem:[%s1 + $0x610] sm:$0xff]
  %v269 = vld [vmem:[%s1 + $0x618] sm:$0xff]
  %v270 = vld [vmem:[%s1 + $0x620] sm:$0xff]
  %v271 = vld [vmem:[%s1 + $0x628] sm:$0xff]
  %v272 = vld [vmem:[%s1 + $0x630] sm:$0xff]
  %v273 = vld [vmem:[%s1 + $0x638] sm:$0xff]
  %v274 = vld [vmem:[%s1 + $0x640] sm:$0xff]
  %v275 = vld [vmem:[%s1 + $0x648] sm:$0xff]
  %v276 = vld [vmem:[%s1 + $0x650] sm:$0xff]
  %v277 = vld [vmem:[%s1 + $0x658] sm:$0xff]
  %v278 = vld [vmem:[%s1 + $0x660] sm:$0xff]
  %v279 = vld [vmem:[%s1 + $0x668] sm:$0xff]
  %v280 = vld [vmem:[%s1 + $0x670] sm:$0xff]
  %v281 = vld [vmem:[%s1 + $0x678] sm:$0xff]
  %v282 = vld [vmem:[%s1 + $0x680] sm:$0xff]
  %v283 = vld [vmem:[%s1 + $0x688] sm:$0xff]
  %v284 = vld [vmem:[%s1 + $0x690] sm:$0xff]
  %v285 = vld [vmem:[%s1 + $0x698] sm:$0xff]
  %v286 = vld [vmem:[%s1 + $0x6a0] sm:$0xff]
  %v287 = vld [vmem:[%s1 + $0x6a8] sm:$0xff]
  %v288 = vld [vmem:[%s1 + $0x6b0] sm:$0xff]
  %v289 = vld [vmem:[%s1 + $0x6b8] sm:$0xff]
  %v290 = vld [vmem:[%s1 + $0x6c0] sm:$0xff]
  %v291 = vld [vmem:[%s1 + $0x6c8] sm:$0xff]
  %v292 = vld [vmem:[%s1 + $0x6d0] sm:$0xff]
  %v293 = vld [vmem:[%s1 + $0x6d8] sm:$0xff]
  %v294 = vld [vmem:[%s1 + $0x6e0] sm:$0xff]
  %v295 = vld [vmem:[%s1 + $0x6e8] sm:$0xff]
  %v296 = vld [vmem:[%s1 + $0x6f0] sm:$0xff]
  %v297 = vld [vmem:[%s1 + $0x6f8] sm:$0xff]
  %v298 = vld [vmem:[%s1 + $0x700] sm:$0xff]
  %v299 = vld [vmem:[%s1 + $0x708] sm:$0xff]
  %v300 = vld [vmem:[%s1 + $0x710] sm:$0xff]
  %v301 = vld [vmem:[%s1 + $0x718] sm:$0xff]
  %v302 = vld [vmem:[%s1 + $0x720] sm:$0xff]
  %v303 = vld [vmem:[%s1 + $0x728] sm:$0xff]
  %v304 = vld [vmem:[%s1 + $0x730] sm:$0xff]
  %v305 = vld [vmem:[%s1 + $0x738] sm:$0xff]
  %v306 = vld [vmem:[%s1 + $0x740] sm:$0xff]
  %v307 = vld [vmem:[%s1 + $0x748] sm:$0xff]
  %v308 = vld [vmem:[%s1 + $0x750] sm:$0xff]
  %v309 = vld [vmem:[%s1 + $0x758] sm:$0xff]
  %v310 = vld [vmem:[%s1 + $0x760] sm:$0xff]
  %v311 = vld [vmem:[%s1 + $0x768] sm:$0xff]
  %v312 = vld [vmem:[%s1 + $0x770] sm:$0xff]
  %v313 = vld [vmem:[%s1 + $0x778] sm:$0xff]
  %v314 = vld [vmem:[%s1 + $0x780] sm:$0xff]
  %v315 = vld [vmem:[%s1 + $0x788] sm:$0xff]
  %v316 = vld [vmem:[%s1 + $0x790] sm:$0xff]
  %v317 = vld [vmem:[%s1 + $0x798] sm:$0xff]
  %v318 = vld [vmem:[%s1 + $0x7a0] sm:$0xff]
  %v319 = vld [vmem:[%s1 + $0x7a8] sm:$0xff]
  %v320 = vld [vmem:[%s1 + $0x7b0] sm:$0xff]
  %v321 = vld [vmem:[%s1 + $0x7b8] sm:$0xff]
  %v322 = vld [vmem:[%s1 + $0x7c0] sm:$0xff]
  %v323 = vld [vmem:[%s1 + $0x7c8] sm:$0xff]
  %v324 = vld [vmem:[%s1 + $0x7d0] sm:$0xff]
  %v325 = vld [vmem:[%s1 + $0x7d8] sm:$0xff]
  %v326 = vld [vmem:[%s1 + $0x7e0] sm:$0xff]
  %v327 = vld [vmem:[%s1 + $0x7e8] sm:$0xff]
  %v328 = vld [vmem:[%s1 + $0x7f0] sm:$0xff]
  %v329 = vld [vmem:[%s1 + $0x7f8] sm:$0xff]
  %v330 = vld [vmem:[%s1 + $0x800] sm:$0xff]
  %v331 = vld [vmem:[%s1 + $0x808] sm:$0xff]
  %v332 = vld [vmem:[%s1 + $0x810] sm:$0xff]
  %v333 = vld [vmem:[%s1 + $0x818] sm:$0xff]
  %v334 = vld [vmem:[%s1 + $0x820] sm:$0xff]
  %v335 = vld [vmem:[%s1 + $0x828] sm:$0xff]
  %v336 = vld [vmem:[%s1 + $0x830] sm:$0xff]
  %v337 = vld [vmem:[%s1 + $0x838] sm:$0xff]
  %v338 = vld [vmem:[%s1 + $0x840] sm:$0xff]
  %v339 = vld [vmem:[%s1 + $0x848] sm:$0xff]
  %v340 = vld [vmem:[%s1 + $0x850] sm:$0xff]
  %v341 = vld [vmem:[%s1 + $0x858] sm:$0xff]
  %v342 = vld [vmem:[%s1 + $0x860] sm:$0xff]
  %v343 = vld [vmem:[%s1 + $0x868] sm:$0xff]
  %v344 = vld [vmem:[%s1 + $0x870] sm:$0xff]
  %v345 = vld [vmem:[%s1 + $0x878] sm:$0xff]
  %v346 = vld [vmem:[%s1 + $0x880] sm:$0xff]
  %v347 = vld [vmem:[%s1 + $0x888] sm:$0xff]
  %v348 = vld [vmem:[%s1 + $0x890] sm:$0xff]
  %v349 = vld [vmem:[%s1 + $0x898] sm:$0xff]
  %v350 = vld [vmem:[%s1 + $0x8a0] sm:$0xff]
  %v351 = vld [vmem:[%s1 + $0x8a8] sm:$0xff]
  %v352 = vld [vmem:[%s1 + $0x8b0] sm:$0xff]
  %v353 = vld [vmem:[%s1 + $0x8b8] sm:$0xff]
  %v354 = vld [vmem:[%s1 + $0x8c0] sm:$0xff]
  %v355 = vld [vmem:[%s1 + $0x8c8] sm:$0xff]
  %v356 = vld [vmem:[%s1 + $0x8d0] sm:$0xff]
  %v357 = vld [vmem:[%s1 + $0x8d8] sm:$0xff]
  %v358 = vld [vmem:[%s1 + $0x8e0] sm:$0xff]
  %v359 = vld [vmem:[%s1 + $0x8e8] sm:$0xff]
  %v360 = vld [vmem:[%s1 + $0x8f0] sm:$0xff]
  %v361 = vld [vmem:[%s1 + $0x8f8] sm:$0xff]
  %v362 = vld [vmem:[%s1 + $0x900] sm:$0xff]
  %v363 = vld [vmem:[%s1 + $0x908] sm:$0xff]
  %v364 = vld [vmem:[%s1 + $0x910] sm:$0xff]
  %v365 = vld [vmem:[%s1 + $0x918] sm:$0xff]
  %v366 = vld [vmem:[%s1 + $0x920] sm:$0xff]
  %v367 = vld [vmem:[%s1 + $0x928] sm:$0xff]
  %v368 = vld [vmem:[%s1 + $0x930] sm:$0xff]
  %v369 = vld [vmem:[%s1 + $0x938] sm:$0xff]
  %v370 = vld [vmem:[%s1 + $0x940] sm:$0xff]
  %v371 = vld [vmem:[%s1 + $0x948] sm:$0xff]
  %v372 = vld [vmem:[%s1 + $0x950] sm:$0xff]
  %v373 = vld [vmem:[%s1 + $0x958] sm:$0xff]
  %v374 = vld [vmem:[%s1 + $0x960] sm:$0xff]
  %v375 = vld [vmem:[%s1 + $0x968] sm:$0xff]
  %v376 = vld [vmem:[%s1 + $0x970] sm:$0xff]
  %v377 = vld [vmem:[%s1 + $0x978] sm:$0xff]
  %v378 = vld [vmem:[%s1 + $0x980] sm:$0xff]
  %v379 = vld [vmem:[%s1 + $0x988] sm:$0xff]
  %v380 = vld [vmem:[%s1 + $0x990] sm:$0xff]
  %v381 = vld [vmem:[%s1 + $0x998] sm:$0xff]
  %v382 = vld [vmem:[%s1 + $0x9a0] sm:$0xff]
  %v383 = vld [vmem:[%s1 + $0x9a8] sm:$0xff]
  %v384 = vld [vmem:[%s1 + $0x9b0] sm:$0xff]
  %v385 = vld [vmem:[%s1 + $0x9b8] sm:$0xff]
  %v386 = vld [vmem:[%s1 + $0x9c0] sm:$0xff]
  %v387 = vld [vmem:[%s1 + $0x9c8] sm:$0xff]
  %v388 = vld [vmem:[%s1 + $0x9d0] sm:$0xff]
  %v389 = vld [vmem:[%s1 + $0x9d8] sm:$0xff]
  %v390 = vld [vmem:[%s1 + $0x9e0] sm:$0xff]
  %v391 = vld [vmem:[%s1 + $0x9e8] sm:$0xff]
  %v392 = vld [vmem:[%s1 + $0x9f0] sm:$0xff]
  %v393 = vld [vmem:[%s1 + $0x9f8] sm:$0xff]
  %v394 = vld [vmem:[%s1 + $0xa00] sm:$0xff]
  %v395 = vld [vmem:[%s1 + $0xa08] sm:$0xff]
  %v396 = vld [vmem:[%s1 + $0xa10] sm:$0xff]
  %v397 = vld [vmem:[%s1 + $0xa18] sm:$0xff]
  %v398 = vld [vmem:[%s1 + $0xa20] sm:$0xff]
  %v399 = vld [vmem:[%s1 + $0xa28] sm:$0xff]
  %v400 = vld [vmem:[%s1 + $0xa30] sm:$0xff]
  %v401 = vld [vmem:[%s1 + $0xa38] sm:$0xff]
  %v402 = vld [vmem:[%s1 + $0xa40] sm:$0xff]
  %v403 = vld [vmem:[%s1 + $0xa48] sm:$0xff]
  %v404 = vld [vmem:[%s1 + $0xa50] sm:$0xff]
  %v405 = vld [vmem:[%s1 + $0xa58] sm:$0xff]
  %v406 = vld [vmem:[%s1 + $0xa60] sm:$0xff]
  %v407 = vld [vmem:[%s1 + $0xa68] sm:$0xff]
  %v408 = vld [vmem:[%s1 + $0xa70] sm:$0xff]
  %v409 = vld [vmem:[%s1 + $0xa78] sm:$0xff]
  %v410 = vld [vmem:[%s1 + $0xa80] sm:$0xff]
  %v411 = vld [vmem:[%s1 + $0xa88] sm:$0xff]
  %v412 = vld [vmem:[%s1 + $0xa90] sm:$0xff]
  %v413 = vld [vmem:[%s1 + $0xa98] sm:$0xff]
  %v414 = vld [vmem:[%s1 + $0xaa0] sm:$0xff]
  %v415 = vld [vmem:[%s1 + $0xaa8] sm:$0xff]
  %v416 = vld [vmem:[%s1 + $0xab0] sm:$0xff]
  %v417 = vld [vmem:[%s1 + $0xab8] sm:$0xff]
  %v418 = vld [vmem:[%s1 + $0xac0] sm:$0xff]
  %v419 = vld [vmem:[%s1 + $0xac8] sm:$0xff]
  %v420 = vld [vmem:[%s1 + $0xad0] sm:$0xff]
  %v421 = vld [vmem:[%s1 + $0xad8] sm:$0xff]
  %v422 = vld [vmem:[%s1 + $0xae0] sm:$0xff]
  %v423 = vld [vmem:[%s1 + $0xae8] sm:$0xff]
  %v424 = vld [vmem:[%s1 + $0xaf0] sm:$0xff]
  %v425 = vld [vmem:[%s1 + $0xaf8] sm:$0xff]
  %v426 = vld [vmem:[%s1 + $0xb00] sm:$0xff]
  %v427 = vld [vmem:[%s1 + $0xb08] sm:$0xff]
  %v428 = vld [vmem:[%s1 + $0xb10] sm:$0xff]
  %v429 = vld [vmem:[%s1 + $0xb18] sm:$0xff]
  %v430 = vld [vmem:[%s1 + $0xb20] sm:$0xff]
  %v431 = vld [vmem:[%s1 + $0xb28] sm:$0xff]
  %v432 = vld [vmem:[%s1 + $0xb30] sm:$0xff]
  %v433 = vld [vmem:[%s1 + $0xb38] sm:$0xff]
  %v434 = vld [vmem:[%s1 + $0xb40] sm:$0xff]
  %v435 = vld [vmem:[%s1 + $0xb48] sm:$0xff]
  %v436 = vld [vmem:[%s1 + $0xb50] sm:$0xff]
  %v437 = vld [vmem:[%s1 + $0xb58] sm:$0xff]
  %v438 = vld [vmem:[%s1 + $0xb60] sm:$0xff]
  %v439 = vld [vmem:[%s1 + $0xb68] sm:$0xff]
  %v440 = vld [vmem:[%s1 + $0xb70] sm:$0xff]
  %v441 = vld [vmem:[%s1 + $0xb78] sm:$0xff]
  %v442 = vld [vmem:[%s1 + $0xb80] sm:$0xff]
  %v443 = vld [vmem:[%s1 + $0xb88] sm:$0xff]
  %v444 = vld [vmem:[%s1 + $0xb90] sm:$0xff]
  %v445 = vld [vmem:[%s1 + $0xb98] sm:$0xff]
  %v446 = vld [vmem:[%s1 + $0xba0] sm:$0xff]
  %v447 = vld [vmem:[%s1 + $0xba8] sm:$0xff]
  %v448 = vld [vmem:[%s1 + $0xbb0] sm:$0xff]
  %v449 = vld [vmem:[%s1 + $0xbb8] sm:$0xff]
  %v450 = vld [vmem:[%s1 + $0xbc0] sm:$0xff]
  %v451 = vld [vmem:[%s1 + $0xbc8] sm:$0xff]
  %v452 = vld [vmem:[%s1 + $0xbd0] sm:$0xff]
  %v453 = vld [vmem:[%s1 + $0xbd8] sm:$0xff]
  %v454 = vld [vmem:[%s1 + $0xbe0] sm:$0xff]
  %v455 = vld [vmem:[%s1 + $0xbe8] sm:$0xff]
  %v456 = vld [vmem:[%s1 + $0xbf0] sm:$0xff]
  %v457 = vld [vmem:[%s1 + $0xbf8] sm:$0xff]
  %v458 = vld [vmem:[%s1 + $0xc00] sm:$0xff]
  %v459 = vld [vmem:[%s1 + $0xc08] sm:$0xff]
  %v460 = vld [vmem:[%s1 + $0xc10] sm:$0xff]
  %v461 = vld [vmem:[%s1 + $0xc18] sm:$0xff]
  %v462 = vld [vmem:[%s1 + $0xc20] sm:$0xff]
  %v463 = vld [vmem:[%s1 + $0xc28] sm:$0xff]
  %v464 = vld [vmem:[%s1 + $0xc30] sm:$0xff]
  %v465 = vld [vmem:[%s1 + $0xc38] sm:$0xff]
  %v466 = vld [vmem:[%s1 + $0xc40] sm:$0xff]
  %v467 = vld [vmem:[%s1 + $0xc48] sm:$0xff]
  %v468 = vld [vmem:[%s1 + $0xc50] sm:$0xff]
  %v469 = vld [vmem:[%s1 + $0xc58] sm:$0xff]
  %v470 = vld [vmem:[%s1 + $0xc60] sm:$0xff]
  %v471 = vld [vmem:[%s1 + $0xc68] sm:$0xff]
  %v472 = vld [vmem:[%s1 + $0xc70] sm:$0xff]
  %v473 = vld [vmem:[%s1 + $0xc78] sm:$0xff]
  %v474 = vld [vmem:[%s1 + $0xc80] sm:$0xff]
  %v475 = vld [vmem:[%s1 + $0xc88] sm:$0xff]
  %v476 = vld [vmem:[%s1 + $0xc90] sm:$0xff]
  %v477 = vld [vmem:[%s1 + $0xc98] sm:$0xff]
  %v478 = vld [vmem:[%s1 + $0xca0] sm:$0xff]
  %v479 = vld [vmem:[%s1 + $0xca8] sm:$0xff]
  %v480 = vld [vmem:[%s1 + $0xcb0] sm:$0xff]
  %v481 = vld [vmem:[%s1 + $0xcb8] sm:$0xff]
  %v482 = vld [vmem:[%s1 + $0xcc0] sm:$0xff]
  %v483 = vld [vmem:[%s1 + $0xcc8] sm:$0xff]
  %v484 = vld [vmem:[%s1 + $0xcd0] sm:$0xff]
  %v485 = vld [vmem:[%s1 + $0xcd8] sm:$0xff]
  %v486 = vld [vmem:[%s1 + $0xce0] sm:$0xff]
  %v487 = vld [vmem:[%s1 + $0xce8] sm:$0xff]
  %v488 = vld [vmem:[%s1 + $0xcf0] sm:$0xff]
  %v489 = vld [vmem:[%s1 + $0xcf8] sm:$0xff]
  %v490 = vld [vmem:[%s1 + $0xd00] sm:$0xff]
  %v491 = vld [vmem:[%s1 + $0xd08] sm:$0xff]
  %v492 = vld [vmem:[%s1 + $0xd10] sm:$0xff]
  %v493 = vld [vmem:[%s1 + $0xd18] sm:$0xff]
  %v494 = vld [vmem:[%s1 + $0xd20] sm:$0xff]
  %v495 = vld [vmem:[%s1 + $0xd28] sm:$0xff]
  %v496 = vld [vmem:[%s1 + $0xd30] sm:$0xff]
  %v497 = vld [vmem:[%s1 + $0xd38] sm:$0xff]
  %v498 = vld [vmem:[%s1 + $0xd40] sm:$0xff]
  %v499 = vld [vmem:[%s1 + $0xd48] sm:$0xff]
  %v500 = vld [vmem:[%s1 + $0xd50] sm:$0xff]
  %v501 = vld [vmem:[%s1 + $0xd58] sm:$0xff]
  %v502 = vld [vmem:[%s1 + $0xd60] sm:$0xff]
  %v503 = vld [vmem:[%s1 + $0xd68] sm:$0xff]
  %v504 = vld [vmem:[%s1 + $0xd70] sm:$0xff]
  %v505 = vld [vmem:[%s1 + $0xd78] sm:$0xff]
  %v506 = vld [vmem:[%s1 + $0xd80] sm:$0xff]
  %v507 = vld [vmem:[%s1 + $0xd88] sm:$0xff]
  %v508 = vld [vmem:[%s1 + $0xd90] sm:$0xff]
  %v509 = vld [vmem:[%s1 + $0xd98] sm:$0xff]
  %v510 = vld [vmem:[%s1 + $0xda0] sm:$0xff]
  %v511 = vld [vmem:[%s1 + $0xda8] sm:$0xff]
  %v512 = vld [vmem:[%s1 + $0xdb0] sm:$0xff]
  %v513 = vld [vmem:[%s1 + $0xdb8] sm:$0xff]
  %v514 = vld [vmem:[%s1 + $0xdc0] sm:$0xff]
  %v515 = vld [vmem:[%s1 + $0xdc8] sm:$0xff]
  %v516 = vld [vmem:[%s1 + $0xdd0] sm:$0xff]
  %v517 = vld [vmem:[%s1 + $0xdd8] sm:$0xff]
  %v518 = vld [vmem:[%s1 + $0xde0] sm:$0xff]
  %v519 = vld [vmem:[%s1 + $0xde8] sm:$0xff]
  %v520 = vld [vmem:[%s1 + $0xdf0] sm:$0xff]
  %v521 = vld [vmem:[%s1 + $0xdf8] sm:$0xff]
  %v522 = vld [vmem:[%s1 + $0xe00] sm:$0xff]
  %v523 = vld [vmem:[%s1 + $0xe08] sm:$0xff]
  %v524 = vld [vmem:[%s1 + $0xe10] sm:$0xff]
  %v525 = vld [vmem:[%s1 + $0xe18] sm:$0xff]
  %v526 = vld [vmem:[%s1 + $0xe20] sm:$0xff]
  %v527 = vld [vmem:[%s1 + $0xe28] sm:$0xff]
  %v528 = vld [vmem:[%s1 + $0xe30] sm:$0xff]
  %v529 = vld [vmem:[%s1 + $0xe38] sm:$0xff]
  %v530 = vld [vmem:[%s1 + $0xe40] sm:$0xff]
  %v531 = vld [vmem:[%s1 + $0xe48] sm:$0xff]
  %v532 = vld [vmem:[%s1 + $0xe50] sm:$0xff]
  %v533 = vld [vmem:[%s1 + $0xe58] sm:$0xff]
  %v534 = vld [vmem:[%s1 + $0xe60] sm:$0xff]
  %v535 = vld [vmem:[%s1 + $0xe68] sm:$0xff]
  %v536 = vld [vmem:[%s1 + $0xe70] sm:$0xff]
  %v537 = vld [vmem:[%s1 + $0xe78] sm:$0xff]
  %v538 = vld [vmem:[%s1 + $0xe80] sm:$0xff]
  %v539 = vld [vmem:[%s1 + $0xe88] sm:$0xff]
  %v540 = vld [vmem:[%s1 + $0xe90] sm:$0xff]
  %v541 = vld [vmem:[%s1 + $0xe98] sm:$0xff]
  %v542 = vld [vmem:[%s1 + $0xea0] sm:$0xff]
  %v543 = vld [vmem:[%s1 + $0xea8] sm:$0xff]
  %v544 = vld [vmem:[%s1 + $0xeb0] sm:$0xff]
  %v545 = vld [vmem:[%s1 + $0xeb8] sm:$0xff]
  %v546 = vld [vmem:[%s1 + $0xec0] sm:$0xff]
  %v547 = vld [vmem:[%s1 + $0xec8] sm:$0xff]
  %v548 = vld [vmem:[%s1 + $0xed0] sm:$0xff]
  %v549 = vld [vmem:[%s1 + $0xed8] sm:$0xff]
  %v550 = vld [vmem:[%s1 + $0xee0] sm:$0xff]
  %v551 = vld [vmem:[%s1 + $0xee8] sm:$0xff]
  %v552 = vld [vmem:[%s1 + $0xef0] sm:$0xff]
  %v553 = vld [vmem:[%s1 + $0xef8] sm:$0xff]
  %v554 = vld [vmem:[%s1 + $0xf00] sm:$0xff]
  %v555 = vld [vmem:[%s1 + $0xf08] sm:$0xff]
  %v556 = vld [vmem:[%s1 + $0xf10] sm:$0xff]
  %v557 = vld [vmem:[%s1 + $0xf18] sm:$0xff]
  %v558 = vld [vmem:[%s1 + $0xf20] sm:$0xff]
  %v559 = vld [vmem:[%s1 + $0xf28] sm:$0xff]
  %v560 = vld [vmem:[%s1 + $0xf30] sm:$0xff]
  %v561 = vld [vmem:[%s1 + $0xf38] sm:$0xff]
  %v562 = vld [vmem:[%s1 + $0xf40] sm:$0xff]
  %v563 = vld [vmem:[%s1 + $0xf48] sm:$0xff]
  %v564 = vld [vmem:[%s1 + $0xf50] sm:$0xff]
  %v565 = vld [vmem:[%s1 + $0xf58] sm:$0xff]
  %v566 = vld [vmem:[%s1 + $0xf60] sm:$0xff]
  %v567 = vld [vmem:[%s1 + $0xf68] sm:$0xff]
  %v568 = vld [vmem:[%s1 + $0xf70] sm:$0xff]
  %v569 = vld [vmem:[%s1 + $0xf78] sm:$0xff]
  %v570 = vld [vmem:[%s1 + $0xf80] sm:$0xff]
  %v571 = vld [vmem:[%s1 + $0xf88] sm:$0xff]
  %v572 = vld [vmem:[%s1 + $0xf90] sm:$0xff]
  %v573 = vld [vmem:[%s1 + $0xf98] sm:$0xff]
  %v574 = vld [vmem:[%s1 + $0xfa0] sm:$0xff]
  %v575 = vld [vmem:[%s1 + $0xfa8] sm:$0xff]
  %v576 = vld [vmem:[%s1 + $0xfb0] sm:$0xff]
  %v577 = vld [vmem:[%s1 + $0xfb8] sm:$0xff]
  %v578 = vld [vmem:[%s1 + $0xfc0] sm:$0xff]
  %v579 = vld [vmem:[%s1 + $0xfc8] sm:$0xff]
  %v580 = vld [vmem:[%s1 + $0xfd0] sm:$0xff]
  %v581 = vld [vmem:[%s1 + $0xfd8] sm:$0xff]
  %v582 = vld [vmem:[%s1 + $0xfe0] sm:$0xff]
  %v583 = vld [vmem:[%s1 + $0xfe8] sm:$0xff]
  %v584 = vld [vmem:[%s1 + $0xff0] sm:$0xff]
  %v585 = vld [vmem:[%s1 + $0xff8] sm:$0xff]
  %v586 = vld [vmem:[%s1 + $0x1000] sm:$0xff]
  %v587 = vld [vmem:[%s1 + $0x1008] sm:$0xff]
  %v588 = vld [vmem:[%s1 + $0x1010] sm:$0xff]
  %v589 = vld [vmem:[%s1 + $0x1018] sm:$0xff]
  %v590 = vld [vmem:[%s1 + $0x1020] sm:$0xff]
  %v591 = vld [vmem:[%s1 + $0x1028] sm:$0xff]
  %v592 = vld [vmem:[%s1 + $0x1030] sm:$0xff]
  %v593 = vld [vmem:[%s1 + $0x1038] sm:$0xff]
  %v594 = vld [vmem:[%s1 + $0x1040] sm:$0xff]
  %v595 = vld [vmem:[%s1 + $0x1048] sm:$0xff]
  %v596 = vld [vmem:[%s1 + $0x1050] sm:$0xff]
  %v597 = vld [vmem:[%s1 + $0x1058] sm:$0xff]
  %v598 = vld [vmem:[%s1 + $0x1060] sm:$0xff]
  %v599 = vld [vmem:[%s1 + $0x1068] sm:$0xff]
  %v600 = vld [vmem:[%s1 + $0x1070] sm:$0xff]
  %v601 = vld [vmem:[%s1 + $0x1078] sm:$0xff]
  %v602 = vld [vmem:[%s1 + $0x1080] sm:$0xff]
  %v603 = vld [vmem:[%s1 + $0x1088] sm:$0xff]
  %v604 = vld [vmem:[%s1 + $0x1090] sm:$0xff]
  %v605 = vld [vmem:[%s1 + $0x1098] sm:$0xff]
  %v606 = vld [vmem:[%s1 + $0x10a0] sm:$0xff]
  %v607 = vld [vmem:[%s1 + $0x10a8] sm:$0xff]
  %v608 = vld [vmem:[%s1 + $0x10b0] sm:$0xff]
  %v609 = vld [vmem:[%s1 + $0x10b8] sm:$0xff]
  %v610 = vld [vmem:[%s1 + $0x10c0] sm:$0xff]
  %v611 = vld [vmem:[%s1 + $0x10c8] sm:$0xff]
  %v612 = vld [vmem:[%s1 + $0x10d0] sm:$0xff]
  %v613 = vld [vmem:[%s1 + $0x10d8] sm:$0xff]
  %v614 = vld [vmem:[%s1 + $0x10e0] sm:$0xff]
  %v615 = vld [vmem:[%s1 + $0x10e8] sm:$0xff]
  %v616 = vld [vmem:[%s1 + $0x10f0] sm:$0xff]
  %v617 = vld [vmem:[%s1 + $0x10f8] sm:$0xff]
  %v618 = vld [vmem:[%s1 + $0x1100] sm:$0xff]
  %v619 = vld [vmem:[%s1 + $0x1108] sm:$0xff]
  %v620 = vld [vmem:[%s1 + $0x1110] sm:$0xff]
  %v621 = vld [vmem:[%s1 + $0x1118] sm:$0xff]
  %v622 = vld [vmem:[%s1 + $0x1120] sm:$0xff]
  %v623 = vld [vmem:[%s1 + $0x1128] sm:$0xff]
  %v624 = vld [vmem:[%s1 + $0x1130] sm:$0xff]
  %v625 = vld [vmem:[%s1 + $0x1138] sm:$0xff]
  %v626 = vld [vmem:[%s1 + $0x1140] sm:$0xff]
  %v627 = vld [vmem:[%s1 + $0x1148] sm:$0xff]
  %v628 = vld [vmem:[%s1 + $0x1150] sm:$0xff]
  %v629 = vld [vmem:[%s1 + $0x1158] sm:$0xff]
  %v630 = vld [vmem:[%s1 + $0x1160] sm:$0xff]
  %v631 = vld [vmem:[%s1 + $0x1168] sm:$0xff]
  %v632 = vld [vmem:[%s1 + $0x1170] sm:$0xff]
  %v633 = vld [vmem:[%s1 + $0x1178] sm:$0xff]
  %v634 = vld [vmem:[%s1 + $0x1180] sm:$0xff]
  %v635 = vld [vmem:[%s1 + $0x1188] sm:$0xff]
  %v636 = vld [vmem:[%s1 + $0x1190] sm:$0xff]
  %v637 = vld [vmem:[%s1 + $0x1198] sm:$0xff]
  %v638 = vld [vmem:[%s1 + $0x11a0] sm:$0xff]
  %v639 = vld [vmem:[%s1 + $0x11a8] sm:$0xff]
  %v640 = vld [vmem:[%s1 + $0x11b0] sm:$0xff]
  %v641 = vld [vmem:[%s1 + $0x11b8] sm:$0xff]
  %v642 = vld [vmem:[%s1 + $0x11c0] sm:$0xff]
  %v643 = vld [vmem:[%s1 + $0x11c8] sm:$0xff]
  %v644 = vld [vmem:[%s1 + $0x11d0] sm:$0xff]
  %v645 = vld [vmem:[%s1 + $0x11d8] sm:$0xff]
  %v646 = vld [vmem:[%s1 + $0x11e0] sm:$0xff]
  %v647 = vld [vmem:[%s1 + $0x11e8] sm:$0xff]
  %v648 = vld [vmem:[%s1 + $0x11f0] sm:$0xff]
  %v649 = vld [vmem:[%s1 + $0x11f8] sm:$0xff]
  %v713 = vunpack.c.l.b16 %v11
  %v714 = vunpack.c.h.b16 %v11
  %v715 = vunpack.c.l.b16 %v12
  %v716 = vunpack.c.h.b16 %v12
  %v717 = vunpack.c.l.b16 %v13
  %v718 = vunpack.c.h.b16 %v13
  %v719 = vunpack.c.l.b16 %v14
  %v720 = vunpack.c.h.b16 %v14
  %v721 = vunpack.c.l.b16 %v15
  %v722 = vunpack.c.h.b16 %v15
  %v723 = vunpack.c.l.b16 %v16
  %v724 = vunpack.c.h.b16 %v16
  %v725 = vunpack.c.l.b16 %v17
  %v726 = vunpack.c.h.b16 %v17
  %v727 = vunpack.c.l.b16 %v18
  %v728 = vunpack.c.h.b16 %v18
  %v729 = vunpack.c.l.b16 %v19
  %v730 = vunpack.c.h.b16 %v19
  %v731 = vunpack.c.l.b16 %v20
  %v732 = vunpack.c.h.b16 %v20
  %v733 = vunpack.c.l.b16 %v21
  %v734 = vunpack.c.h.b16 %v21
  %v735 = vunpack.c.l.b16 %v22
  %v736 = vunpack.c.h.b16 %v22
  %v737 = vunpack.c.l.b16 %v23
  %v738 = vunpack.c.h.b16 %v23
  %v739 = vunpack.c.l.b16 %v24
  %v740 = vunpack.c.h.b16 %v24
  %v741 = vunpack.c.l.b16 %v25
  %v742 = vunpack.c.h.b16 %v25
  %v743 = vunpack.c.l.b16 %v26
  %v744 = vunpack.c.h.b16 %v26
  %v745 = vunpack.c.l.b16 %v27
  %v746 = vunpack.c.h.b16 %v27
  %v747 = vunpack.c.l.b16 %v28
  %v748 = vunpack.c.h.b16 %v28
  %v749 = vunpack.c.l.b16 %v29
  %v750 = vunpack.c.h.b16 %v29
  %v751 = vunpack.c.l.b16 %v30
  %v752 = vunpack.c.h.b16 %v30
  %v753 = vunpack.c.l.b16 %v31
  %v754 = vunpack.c.h.b16 %v31
  %v755 = vunpack.c.l.b16 %v32
  %v756 = vunpack.c.h.b16 %v32
  %v757 = vunpack.c.l.b16 %v33
  %v758 = vunpack.c.h.b16 %v33
  %v759 = vunpack.c.l.b16 %v34
  %v760 = vunpack.c.h.b16 %v34
  %v761 = vunpack.c.l.b16 %v35
  %v762 = vunpack.c.h.b16 %v35
  %v763 = vunpack.c.l.b16 %v36
  %v764 = vunpack.c.h.b16 %v36
  %v765 = vunpack.c.l.b16 %v37
  %v766 = vunpack.c.h.b16 %v37
  %v767 = vunpack.c.l.b16 %v38
  %v768 = vunpack.c.h.b16 %v38
  %v769 = vunpack.c.l.b16 %v39
  %v770 = vunpack.c.h.b16 %v39
  %v771 = vunpack.c.l.b16 %v40
  %v772 = vunpack.c.h.b16 %v40
  %v773 = vunpack.c.l.b16 %v41
  %v774 = vunpack.c.h.b16 %v41
  %v775 = vunpack.c.l.b16 %v42
  %v776 = vunpack.c.h.b16 %v42
  %v777 = vunpack.c.l.b16 %v43
  %v778 = vunpack.c.h.b16 %v43
  %v779 = vunpack.c.l.b16 %v44
  %v780 = vunpack.c.h.b16 %v44
  %v781 = vunpack.c.l.b16 %v45
  %v782 = vunpack.c.h.b16 %v45
  %v783 = vunpack.c.l.b16 %v46
  %v784 = vunpack.c.h.b16 %v46
  %v785 = vunpack.c.l.b16 %v47
  %v786 = vunpack.c.h.b16 %v47
  %v787 = vunpack.c.l.b16 %v48
  %v788 = vunpack.c.h.b16 %v48
  %v789 = vunpack.c.l.b16 %v49
  %v790 = vunpack.c.h.b16 %v49
  %v791 = vunpack.c.l.b16 %v50
  %v792 = vunpack.c.h.b16 %v50
  %v793 = vunpack.c.l.b16 %v51
  %v794 = vunpack.c.h.b16 %v51
  %v795 = vunpack.c.l.b16 %v52
  %v796 = vunpack.c.h.b16 %v52
  %v797 = vunpack.c.l.b16 %v53
  %v798 = vunpack.c.h.b16 %v53
  %v799 = vunpack.c.l.b16 %v54
  %v800 = vunpack.c.h.b16 %v54
  %v801 = vunpack.c.l.b16 %v55
  %v802 = vunpack.c.h.b16 %v55
  %v803 = vunpack.c.l.b16 %v56
  %v804 = vunpack.c.h.b16 %v56
  %v805 = vunpack.c.l.b16 %v57
  %v806 = vunpack.c.h.b16 %v57
  %v807 = vunpack.c.l.b16 %v58
  %v808 = vunpack.c.h.b16 %v58
  %v809 = vunpack.c.l.b16 %v59
  %v810 = vunpack.c.h.b16 %v59
  %v811 = vunpack.c.l.b16 %v60
  %v812 = vunpack.c.h.b16 %v60
  %v813 = vunpack.c.l.b16 %v61
  %v814 = vunpack.c.h.b16 %v61
  %v815 = vunpack.c.l.b16 %v62
  %v816 = vunpack.c.h.b16 %v62
  %v817 = vunpack.c.l.b16 %v63
  %v818 = vunpack.c.h.b16 %v63
  %v819 = vunpack.c.l.b16 %v64
  %v820 = vunpack.c.h.b16 %v64
  %v821 = vunpack.c.l.b16 %v65
  %v822 = vunpack.c.h.b16 %v65
  %v823 = vunpack.c.l.b16 %v66
  %v824 = vunpack.c.h.b16 %v66
  %v825 = vunpack.c.l.b16 %v67
  %v826 = vunpack.c.h.b16 %v67
  %v827 = vunpack.c.l.b16 %v68
  %v828 = vunpack.c.h.b16 %v68
  %v829 = vunpack.c.l.b16 %v69
  %v830 = vunpack.c.h.b16 %v69
  %v831 = vunpack.c.l.b16 %v70
  %v832 = vunpack.c.h.b16 %v70
  %v833 = vunpack.c.l.b16 %v71
  %v834 = vunpack.c.h.b16 %v71
  %v835 = vunpack.c.l.b16 %v72
  %v836 = vunpack.c.h.b16 %v72
  %v837 = vunpack.c.l.b16 %v73
  %v838 = vunpack.c.h.b16 %v73
  %v839 = vpack.c.b16 %v731, %v713
  %v840 = vpack.c.b16 %v732, %v714
  %v841 = vpack.c.b16 %v733, %v715
  %v842 = vpack.c.b16 %v734, %v716
  %v843 = vpack.c.b16 %v735, %v717
  %v844 = vpack.c.b16 %v736, %v718
  %v845 = vpack.c.b16 %v737, %v719
  %v846 = vpack.c.b16 %v738, %v720
  %v847 = vpack.c.b16 %v739, %v721
  %v848 = vpack.c.b16 %v740, %v722
  %v849 = vpack.c.b16 %v741, %v723
  %v850 = vpack.c.b16 %v742, %v724
  %v851 = vpack.c.b16 %v743, %v725
  %v852 = vpack.c.b16 %v744, %v726
  %v853 = vpack.c.b16 %v745, %v727
  %v854 = vpack.c.b16 %v746, %v728
  %v855 = vpack.c.b16 %v747, %v729
  %v856 = vpack.c.b16 %v748, %v730
  %v857 = vpack.c.b16 %v767, %v749
  %v858 = vpack.c.b16 %v768, %v750
  %v859 = vpack.c.b16 %v769, %v751
  %v860 = vpack.c.b16 %v770, %v752
  %v861 = vpack.c.b16 %v771, %v753
  %v862 = vpack.c.b16 %v772, %v754
  %v863 = vpack.c.b16 %v773, %v755
  %v864 = vpack.c.b16 %v774, %v756
  %v865 = vpack.c.b16 %v775, %v757
  %v866 = vpack.c.b16 %v776, %v758
  %v867 = vpack.c.b16 %v777, %v759
  %v868 = vpack.c.b16 %v778, %v760
  %v869 = vpack.c.b16 %v779, %v761
  %v870 = vpack.c.b16 %v780, %v762
  %v871 = vpack.c.b16 %v781, %v763
  %v872 = vpack.c.b16 %v782, %v764
  %v873 = vpack.c.b16 %v783, %v765
  %v874 = vpack.c.b16 %v784, %v766
  %v875 = vpack.c.b16 %v803, %v785
  %v876 = vpack.c.b16 %v804, %v786
  %v877 = vpack.c.b16 %v805, %v787
  %v878 = vpack.c.b16 %v806, %v788
  %v879 = vpack.c.b16 %v807, %v789
  %v880 = vpack.c.b16 %v808, %v790
  %v881 = vpack.c.b16 %v809, %v791
  %v882 = vpack.c.b16 %v810, %v792
  %v883 = vpack.c.b16 %v811, %v793
  %v884 = vpack.c.b16 %v812, %v794
  %v885 = vpack.c.b16 %v813, %v795
  %v886 = vpack.c.b16 %v814, %v796
  %v887 = vpack.c.b16 %v815, %v797
  %v888 = vpack.c.b16 %v816, %v798
  %v889 = vpack.c.b16 %v817, %v799
  %v890 = vpack.c.b16 %v818, %v800
  %v891 = vpack.c.b16 %v819, %v801
  %v892 = vpack.c.b16 %v820, %v802
  %v893 = vpack.c.b16 %v821, %v821
  %v894 = vpack.c.b16 %v822, %v822
  %v895 = vpack.c.b16 %v823, %v823
  %v896 = vpack.c.b16 %v824, %v824
  %v897 = vpack.c.b16 %v825, %v825
  %v898 = vpack.c.b16 %v826, %v826
  %v899 = vpack.c.b16 %v827, %v827
  %v900 = vpack.c.b16 %v828, %v828
  %v901 = vpack.c.b16 %v829, %v829
  %v902 = vpack.c.b16 %v830, %v830
  %v903 = vpack.c.b16 %v831, %v831
  %v904 = vpack.c.b16 %v832, %v832
  %v905 = vpack.c.b16 %v833, %v833
  %v906 = vpack.c.b16 %v834, %v834
  %v907 = vpack.c.b16 %v835, %v835
  %v908 = vpack.c.b16 %v836, %v836
  %v909 = vpack.c.b16 %v837, %v837
  %v910 = vpack.c.b16 %v838, %v838
  %v1559 = vunpack.c.l.b16 %v74
  %v1560 = vunpack.c.h.b16 %v74
  %v1561 = vunpack.c.l.b16 %v75
  %v1562 = vunpack.c.h.b16 %v75
  %v1563 = vunpack.c.l.b16 %v76
  %v1564 = vunpack.c.h.b16 %v76
  %v1565 = vunpack.c.l.b16 %v77
  %v1566 = vunpack.c.h.b16 %v77
  %v1567 = vunpack.c.l.b16 %v78
  %v1568 = vunpack.c.h.b16 %v78
  %v1569 = vunpack.c.l.b16 %v79
  %v1570 = vunpack.c.h.b16 %v79
  %v1571 = vunpack.c.l.b16 %v80
  %v1572 = vunpack.c.h.b16 %v80
  %v1573 = vunpack.c.l.b16 %v81
  %v1574 = vunpack.c.h.b16 %v81
  %v1575 = vunpack.c.l.b16 %v82
  %v1576 = vunpack.c.h.b16 %v82
  %v1577 = vunpack.c.l.b16 %v83
  %v1578 = vunpack.c.h.b16 %v83
  %v1579 = vunpack.c.l.b16 %v84
  %v1580 = vunpack.c.h.b16 %v84
  %v1581 = vunpack.c.l.b16 %v85
  %v1582 = vunpack.c.h.b16 %v85
  %v1583 = vunpack.c.l.b16 %v86
  %v1584 = vunpack.c.h.b16 %v86
  %v1585 = vunpack.c.l.b16 %v87
  %v1586 = vunpack.c.h.b16 %v87
  %v1587 = vunpack.c.l.b16 %v88
  %v1588 = vunpack.c.h.b16 %v88
  %v1589 = vunpack.c.l.b16 %v89
  %v1590 = vunpack.c.h.b16 %v89
  %v1591 = vunpack.c.l.b16 %v90
  %v1592 = vunpack.c.h.b16 %v90
  %v1593 = vunpack.c.l.b16 %v91
  %v1594 = vunpack.c.h.b16 %v91
  %v1595 = vunpack.c.l.b16 %v92
  %v1596 = vunpack.c.h.b16 %v92
  %v1597 = vunpack.c.l.b16 %v93
  %v1598 = vunpack.c.h.b16 %v93
  %v1599 = vunpack.c.l.b16 %v94
  %v1600 = vunpack.c.h.b16 %v94
  %v1601 = vunpack.c.l.b16 %v95
  %v1602 = vunpack.c.h.b16 %v95
  %v1603 = vunpack.c.l.b16 %v96
  %v1604 = vunpack.c.h.b16 %v96
  %v1605 = vunpack.c.l.b16 %v97
  %v1606 = vunpack.c.h.b16 %v97
  %v1607 = vunpack.c.l.b16 %v98
  %v1608 = vunpack.c.h.b16 %v98
  %v1609 = vunpack.c.l.b16 %v99
  %v1610 = vunpack.c.h.b16 %v99
  %v1611 = vunpack.c.l.b16 %v100
  %v1612 = vunpack.c.h.b16 %v100
  %v1613 = vunpack.c.l.b16 %v101
  %v1614 = vunpack.c.h.b16 %v101
  %v1615 = vunpack.c.l.b16 %v102
  %v1616 = vunpack.c.h.b16 %v102
  %v1617 = vunpack.c.l.b16 %v103
  %v1618 = vunpack.c.h.b16 %v103
  %v1619 = vunpack.c.l.b16 %v104
  %v1620 = vunpack.c.h.b16 %v104
  %v1621 = vunpack.c.l.b16 %v105
  %v1622 = vunpack.c.h.b16 %v105
  %v1623 = vunpack.c.l.b16 %v106
  %v1624 = vunpack.c.h.b16 %v106
  %v1625 = vunpack.c.l.b16 %v107
  %v1626 = vunpack.c.h.b16 %v107
  %v1627 = vunpack.c.l.b16 %v108
  %v1628 = vunpack.c.h.b16 %v108
  %v1629 = vunpack.c.l.b16 %v109
  %v1630 = vunpack.c.h.b16 %v109
  %v1631 = vunpack.c.l.b16 %v110
  %v1632 = vunpack.c.h.b16 %v110
  %v1633 = vunpack.c.l.b16 %v111
  %v1634 = vunpack.c.h.b16 %v111
  %v1635 = vunpack.c.l.b16 %v112
  %v1636 = vunpack.c.h.b16 %v112
  %v1637 = vunpack.c.l.b16 %v113
  %v1638 = vunpack.c.h.b16 %v113
  %v1639 = vunpack.c.l.b16 %v114
  %v1640 = vunpack.c.h.b16 %v114
  %v1641 = vunpack.c.l.b16 %v115
  %v1642 = vunpack.c.h.b16 %v115
  %v1643 = vunpack.c.l.b16 %v116
  %v1644 = vunpack.c.h.b16 %v116
  %v1645 = vunpack.c.l.b16 %v117
  %v1646 = vunpack.c.h.b16 %v117
  %v1647 = vunpack.c.l.b16 %v118
  %v1648 = vunpack.c.h.b16 %v118
  %v1649 = vunpack.c.l.b16 %v119
  %v1650 = vunpack.c.h.b16 %v119
  %v1651 = vunpack.c.l.b16 %v120
  %v1652 = vunpack.c.h.b16 %v120
  %v1653 = vunpack.c.l.b16 %v121
  %v1654 = vunpack.c.h.b16 %v121
  %v1655 = vunpack.c.l.b16 %v122
  %v1656 = vunpack.c.h.b16 %v122
  %v1657 = vunpack.c.l.b16 %v123
  %v1658 = vunpack.c.h.b16 %v123
  %v1659 = vunpack.c.l.b16 %v124
  %v1660 = vunpack.c.h.b16 %v124
  %v1661 = vunpack.c.l.b16 %v125
  %v1662 = vunpack.c.h.b16 %v125
  %v1663 = vunpack.c.l.b16 %v126
  %v1664 = vunpack.c.h.b16 %v126
  %v1665 = vunpack.c.l.b16 %v127
  %v1666 = vunpack.c.h.b16 %v127
  %v1667 = vunpack.c.l.b16 %v128
  %v1668 = vunpack.c.h.b16 %v128
  %v1669 = vunpack.c.l.b16 %v129
  %v1670 = vunpack.c.h.b16 %v129
  %v1671 = vunpack.c.l.b16 %v130
  %v1672 = vunpack.c.h.b16 %v130
  %v1673 = vunpack.c.l.b16 %v131
  %v1674 = vunpack.c.h.b16 %v131
  %v1675 = vunpack.c.l.b16 %v132
  %v1676 = vunpack.c.h.b16 %v132
  %v1677 = vunpack.c.l.b16 %v133
  %v1678 = vunpack.c.h.b16 %v133
  %v1679 = vunpack.c.l.b16 %v134
  %v1680 = vunpack.c.h.b16 %v134
  %v1681 = vunpack.c.l.b16 %v135
  %v1682 = vunpack.c.h.b16 %v135
  %v1683 = vunpack.c.l.b16 %v136
  %v1684 = vunpack.c.h.b16 %v136
  %v1685 = vunpack.c.l.b16 %v137
  %v1686 = vunpack.c.h.b16 %v137
  %v1687 = vunpack.c.l.b16 %v138
  %v1688 = vunpack.c.h.b16 %v138
  %v1689 = vunpack.c.l.b16 %v139
  %v1690 = vunpack.c.h.b16 %v139
  %v1691 = vunpack.c.l.b16 %v140
  %v1692 = vunpack.c.h.b16 %v140
  %v1693 = vunpack.c.l.b16 %v141
  %v1694 = vunpack.c.h.b16 %v141
  %v1695 = vunpack.c.l.b16 %v142
  %v1696 = vunpack.c.h.b16 %v142
  %v1697 = vunpack.c.l.b16 %v143
  %v1698 = vunpack.c.h.b16 %v143
  %v1699 = vunpack.c.l.b16 %v144
  %v1700 = vunpack.c.h.b16 %v144
  %v1701 = vunpack.c.l.b16 %v145
  %v1702 = vunpack.c.h.b16 %v145
  %v1703 = vunpack.c.l.b16 %v146
  %v1704 = vunpack.c.h.b16 %v146
  %v1705 = vunpack.c.l.b16 %v147
  %v1706 = vunpack.c.h.b16 %v147
  %v1707 = vunpack.c.l.b16 %v148
  %v1708 = vunpack.c.h.b16 %v148
  %v1709 = vunpack.c.l.b16 %v149
  %v1710 = vunpack.c.h.b16 %v149
  %v1711 = vunpack.c.l.b16 %v150
  %v1712 = vunpack.c.h.b16 %v150
  %v1713 = vunpack.c.l.b16 %v151
  %v1714 = vunpack.c.h.b16 %v151
  %v1715 = vunpack.c.l.b16 %v152
  %v1716 = vunpack.c.h.b16 %v152
  %v1717 = vunpack.c.l.b16 %v153
  %v1718 = vunpack.c.h.b16 %v153
  %v1719 = vunpack.c.l.b16 %v154
  %v1720 = vunpack.c.h.b16 %v154
  %v1721 = vunpack.c.l.b16 %v155
  %v1722 = vunpack.c.h.b16 %v155
  %v1723 = vunpack.c.l.b16 %v156
  %v1724 = vunpack.c.h.b16 %v156
  %v1725 = vunpack.c.l.b16 %v157
  %v1726 = vunpack.c.h.b16 %v157
  %v1727 = vunpack.c.l.b16 %v158
  %v1728 = vunpack.c.h.b16 %v158
  %v1729 = vunpack.c.l.b16 %v159
  %v1730 = vunpack.c.h.b16 %v159
  %v1731 = vunpack.c.l.b16 %v160
  %v1732 = vunpack.c.h.b16 %v160
  %v1733 = vunpack.c.l.b16 %v161
  %v1734 = vunpack.c.h.b16 %v161
  %v1735 = vunpack.c.l.b16 %v162
  %v1736 = vunpack.c.h.b16 %v162
  %v1737 = vunpack.c.l.b16 %v163
  %v1738 = vunpack.c.h.b16 %v163
  %v1739 = vunpack.c.l.b16 %v164
  %v1740 = vunpack.c.h.b16 %v164
  %v1741 = vunpack.c.l.b16 %v165
  %v1742 = vunpack.c.h.b16 %v165
  %v1743 = vunpack.c.l.b16 %v166
  %v1744 = vunpack.c.h.b16 %v166
  %v1745 = vunpack.c.l.b16 %v167
  %v1746 = vunpack.c.h.b16 %v167
  %v1747 = vunpack.c.l.b16 %v168
  %v1748 = vunpack.c.h.b16 %v168
  %v1749 = vunpack.c.l.b16 %v169
  %v1750 = vunpack.c.h.b16 %v169
  %v1751 = vunpack.c.l.b16 %v170
  %v1752 = vunpack.c.h.b16 %v170
  %v1753 = vunpack.c.l.b16 %v171
  %v1754 = vunpack.c.h.b16 %v171
  %v1755 = vunpack.c.l.b16 %v172
  %v1756 = vunpack.c.h.b16 %v172
  %v1757 = vunpack.c.l.b16 %v173
  %v1758 = vunpack.c.h.b16 %v173
  %v1759 = vunpack.c.l.b16 %v174
  %v1760 = vunpack.c.h.b16 %v174
  %v1761 = vunpack.c.l.b16 %v175
  %v1762 = vunpack.c.h.b16 %v175
  %v1763 = vunpack.c.l.b16 %v176
  %v1764 = vunpack.c.h.b16 %v176
  %v1765 = vunpack.c.l.b16 %v177
  %v1766 = vunpack.c.h.b16 %v177
  %v1767 = vunpack.c.l.b16 %v178
  %v1768 = vunpack.c.h.b16 %v178
  %v1769 = vunpack.c.l.b16 %v179
  %v1770 = vunpack.c.h.b16 %v179
  %v1771 = vunpack.c.l.b16 %v180
  %v1772 = vunpack.c.h.b16 %v180
  %v1773 = vunpack.c.l.b16 %v181
  %v1774 = vunpack.c.h.b16 %v181
  %v1775 = vunpack.c.l.b16 %v182
  %v1776 = vunpack.c.h.b16 %v182
  %v1777 = vunpack.c.l.b16 %v183
  %v1778 = vunpack.c.h.b16 %v183
  %v1779 = vunpack.c.l.b16 %v184
  %v1780 = vunpack.c.h.b16 %v184
  %v1781 = vunpack.c.l.b16 %v185
  %v1782 = vunpack.c.h.b16 %v185
  %v1783 = vunpack.c.l.b16 %v186
  %v1784 = vunpack.c.h.b16 %v186
  %v1785 = vunpack.c.l.b16 %v187
  %v1786 = vunpack.c.h.b16 %v187
  %v1787 = vunpack.c.l.b16 %v188
  %v1788 = vunpack.c.h.b16 %v188
  %v1789 = vunpack.c.l.b16 %v189
  %v1790 = vunpack.c.h.b16 %v189
  %v1791 = vunpack.c.l.b16 %v190
  %v1792 = vunpack.c.h.b16 %v190
  %v1793 = vunpack.c.l.b16 %v191
  %v1794 = vunpack.c.h.b16 %v191
  %v1795 = vunpack.c.l.b16 %v192
  %v1796 = vunpack.c.h.b16 %v192
  %v1797 = vunpack.c.l.b16 %v193
  %v1798 = vunpack.c.h.b16 %v193
  %v1799 = vunpack.c.l.b16 %v194
  %v1800 = vunpack.c.h.b16 %v194
  %v1801 = vunpack.c.l.b16 %v195
  %v1802 = vunpack.c.h.b16 %v195
  %v1803 = vunpack.c.l.b16 %v196
  %v1804 = vunpack.c.h.b16 %v196
  %v1805 = vunpack.c.l.b16 %v197
  %v1806 = vunpack.c.h.b16 %v197
  %v1807 = vunpack.c.l.b16 %v198
  %v1808 = vunpack.c.h.b16 %v198
  %v1809 = vunpack.c.l.b16 %v199
  %v1810 = vunpack.c.h.b16 %v199
  %v1811 = vunpack.c.l.b16 %v200
  %v1812 = vunpack.c.h.b16 %v200
  %v1813 = vunpack.c.l.b16 %v201
  %v1814 = vunpack.c.h.b16 %v201
  %v1815 = vunpack.c.l.b16 %v202
  %v1816 = vunpack.c.h.b16 %v202
  %v1817 = vunpack.c.l.b16 %v203
  %v1818 = vunpack.c.h.b16 %v203
  %v1819 = vunpack.c.l.b16 %v204
  %v1820 = vunpack.c.h.b16 %v204
  %v1821 = vunpack.c.l.b16 %v205
  %v1822 = vunpack.c.h.b16 %v205
  %v1823 = vunpack.c.l.b16 %v206
  %v1824 = vunpack.c.h.b16 %v206
  %v1825 = vunpack.c.l.b16 %v207
  %v1826 = vunpack.c.h.b16 %v207
  %v1827 = vunpack.c.l.b16 %v208
  %v1828 = vunpack.c.h.b16 %v208
  %v1829 = vunpack.c.l.b16 %v209
  %v1830 = vunpack.c.h.b16 %v209
  %v1831 = vunpack.c.l.b16 %v210
  %v1832 = vunpack.c.h.b16 %v210
  %v1833 = vunpack.c.l.b16 %v211
  %v1834 = vunpack.c.h.b16 %v211
  %v1835 = vunpack.c.l.b16 %v212
  %v1836 = vunpack.c.h.b16 %v212
  %v1837 = vunpack.c.l.b16 %v213
  %v1838 = vunpack.c.h.b16 %v213
  %v1839 = vunpack.c.l.b16 %v214
  %v1840 = vunpack.c.h.b16 %v214
  %v1841 = vunpack.c.l.b16 %v215
  %v1842 = vunpack.c.h.b16 %v215
  %v1843 = vunpack.c.l.b16 %v216
  %v1844 = vunpack.c.h.b16 %v216
  %v1845 = vunpack.c.l.b16 %v217
  %v1846 = vunpack.c.h.b16 %v217
  %v1847 = vunpack.c.l.b16 %v218
  %v1848 = vunpack.c.h.b16 %v218
  %v1849 = vunpack.c.l.b16 %v219
  %v1850 = vunpack.c.h.b16 %v219
  %v1851 = vunpack.c.l.b16 %v220
  %v1852 = vunpack.c.h.b16 %v220
  %v1853 = vunpack.c.l.b16 %v221
  %v1854 = vunpack.c.h.b16 %v221
  %v1855 = vunpack.c.l.b16 %v222
  %v1856 = vunpack.c.h.b16 %v222
  %v1857 = vunpack.c.l.b16 %v223
  %v1858 = vunpack.c.h.b16 %v223
  %v1859 = vunpack.c.l.b16 %v224
  %v1860 = vunpack.c.h.b16 %v224
  %v1861 = vunpack.c.l.b16 %v225
  %v1862 = vunpack.c.h.b16 %v225
  %v1863 = vunpack.c.l.b16 %v226
  %v1864 = vunpack.c.h.b16 %v226
  %v1865 = vunpack.c.l.b16 %v227
  %v1866 = vunpack.c.h.b16 %v227
  %v1867 = vunpack.c.l.b16 %v228
  %v1868 = vunpack.c.h.b16 %v228
  %v1869 = vunpack.c.l.b16 %v229
  %v1870 = vunpack.c.h.b16 %v229
  %v1871 = vunpack.c.l.b16 %v230
  %v1872 = vunpack.c.h.b16 %v230
  %v1873 = vunpack.c.l.b16 %v231
  %v1874 = vunpack.c.h.b16 %v231
  %v1875 = vunpack.c.l.b16 %v232
  %v1876 = vunpack.c.h.b16 %v232
  %v1877 = vunpack.c.l.b16 %v233
  %v1878 = vunpack.c.h.b16 %v233
  %v1879 = vunpack.c.l.b16 %v234
  %v1880 = vunpack.c.h.b16 %v234
  %v1881 = vunpack.c.l.b16 %v235
  %v1882 = vunpack.c.h.b16 %v235
  %v1883 = vunpack.c.l.b16 %v236
  %v1884 = vunpack.c.h.b16 %v236
  %v1885 = vunpack.c.l.b16 %v237
  %v1886 = vunpack.c.h.b16 %v237
  %v1887 = vunpack.c.l.b16 %v238
  %v1888 = vunpack.c.h.b16 %v238
  %v1889 = vunpack.c.l.b16 %v239
  %v1890 = vunpack.c.h.b16 %v239
  %v1891 = vunpack.c.l.b16 %v240
  %v1892 = vunpack.c.h.b16 %v240
  %v1893 = vunpack.c.l.b16 %v241
  %v1894 = vunpack.c.h.b16 %v241
  %v1895 = vunpack.c.l.b16 %v242
  %v1896 = vunpack.c.h.b16 %v242
  %v1897 = vunpack.c.l.b16 %v243
  %v1898 = vunpack.c.h.b16 %v243
  %v1899 = vunpack.c.l.b16 %v244
  %v1900 = vunpack.c.h.b16 %v244
  %v1901 = vunpack.c.l.b16 %v245
  %v1902 = vunpack.c.h.b16 %v245
  %v1903 = vunpack.c.l.b16 %v246
  %v1904 = vunpack.c.h.b16 %v246
  %v1905 = vunpack.c.l.b16 %v247
  %v1906 = vunpack.c.h.b16 %v247
  %v1907 = vunpack.c.l.b16 %v248
  %v1908 = vunpack.c.h.b16 %v248
  %v1909 = vunpack.c.l.b16 %v249
  %v1910 = vunpack.c.h.b16 %v249
  %v1911 = vunpack.c.l.b16 %v250
  %v1912 = vunpack.c.h.b16 %v250
  %v1913 = vunpack.c.l.b16 %v251
  %v1914 = vunpack.c.h.b16 %v251
  %v1915 = vunpack.c.l.b16 %v252
  %v1916 = vunpack.c.h.b16 %v252
  %v1917 = vunpack.c.l.b16 %v253
  %v1918 = vunpack.c.h.b16 %v253
  %v1919 = vunpack.c.l.b16 %v254
  %v1920 = vunpack.c.h.b16 %v254
  %v1921 = vunpack.c.l.b16 %v255
  %v1922 = vunpack.c.h.b16 %v255
  %v1923 = vunpack.c.l.b16 %v256
  %v1924 = vunpack.c.h.b16 %v256
  %v1925 = vunpack.c.l.b16 %v257
  %v1926 = vunpack.c.h.b16 %v257
  %v1927 = vunpack.c.l.b16 %v258
  %v1928 = vunpack.c.h.b16 %v258
  %v1929 = vunpack.c.l.b16 %v259
  %v1930 = vunpack.c.h.b16 %v259
  %v1931 = vunpack.c.l.b16 %v260
  %v1932 = vunpack.c.h.b16 %v260
  %v1933 = vunpack.c.l.b16 %v261
  %v1934 = vunpack.c.h.b16 %v261
  %v1935 = vunpack.c.l.b16 %v262
  %v1936 = vunpack.c.h.b16 %v262
  %v1937 = vunpack.c.l.b16 %v263
  %v1938 = vunpack.c.h.b16 %v263
  %v1939 = vunpack.c.l.b16 %v264
  %v1940 = vunpack.c.h.b16 %v264
  %v1941 = vunpack.c.l.b16 %v265
  %v1942 = vunpack.c.h.b16 %v265
  %v1943 = vunpack.c.l.b16 %v266
  %v1944 = vunpack.c.h.b16 %v266
  %v1945 = vunpack.c.l.b16 %v267
  %v1946 = vunpack.c.h.b16 %v267
  %v1947 = vunpack.c.l.b16 %v268
  %v1948 = vunpack.c.h.b16 %v268
  %v1949 = vunpack.c.l.b16 %v269
  %v1950 = vunpack.c.h.b16 %v269
  %v1951 = vunpack.c.l.b16 %v270
  %v1952 = vunpack.c.h.b16 %v270
  %v1953 = vunpack.c.l.b16 %v271
  %v1954 = vunpack.c.h.b16 %v271
  %v1955 = vunpack.c.l.b16 %v272
  %v1956 = vunpack.c.h.b16 %v272
  %v1957 = vunpack.c.l.b16 %v273
  %v1958 = vunpack.c.h.b16 %v273
  %v1959 = vunpack.c.l.b16 %v274
  %v1960 = vunpack.c.h.b16 %v274
  %v1961 = vunpack.c.l.b16 %v275
  %v1962 = vunpack.c.h.b16 %v275
  %v1963 = vunpack.c.l.b16 %v276
  %v1964 = vunpack.c.h.b16 %v276
  %v1965 = vunpack.c.l.b16 %v277
  %v1966 = vunpack.c.h.b16 %v277
  %v1967 = vunpack.c.l.b16 %v278
  %v1968 = vunpack.c.h.b16 %v278
  %v1969 = vunpack.c.l.b16 %v279
  %v1970 = vunpack.c.h.b16 %v279
  %v1971 = vunpack.c.l.b16 %v280
  %v1972 = vunpack.c.h.b16 %v280
  %v1973 = vunpack.c.l.b16 %v281
  %v1974 = vunpack.c.h.b16 %v281
  %v1975 = vunpack.c.l.b16 %v282
  %v1976 = vunpack.c.h.b16 %v282
  %v1977 = vunpack.c.l.b16 %v283
  %v1978 = vunpack.c.h.b16 %v283
  %v1979 = vunpack.c.l.b16 %v284
  %v1980 = vunpack.c.h.b16 %v284
  %v1981 = vunpack.c.l.b16 %v285
  %v1982 = vunpack.c.h.b16 %v285
  %v1983 = vunpack.c.l.b16 %v286
  %v1984 = vunpack.c.h.b16 %v286
  %v1985 = vunpack.c.l.b16 %v287
  %v1986 = vunpack.c.h.b16 %v287
  %v1987 = vunpack.c.l.b16 %v288
  %v1988 = vunpack.c.h.b16 %v288
  %v1989 = vunpack.c.l.b16 %v289
  %v1990 = vunpack.c.h.b16 %v289
  %v1991 = vunpack.c.l.b16 %v290
  %v1992 = vunpack.c.h.b16 %v290
  %v1993 = vunpack.c.l.b16 %v291
  %v1994 = vunpack.c.h.b16 %v291
  %v1995 = vunpack.c.l.b16 %v292
  %v1996 = vunpack.c.h.b16 %v292
  %v1997 = vunpack.c.l.b16 %v293
  %v1998 = vunpack.c.h.b16 %v293
  %v1999 = vunpack.c.l.b16 %v294
  %v2000 = vunpack.c.h.b16 %v294
  %v2001 = vunpack.c.l.b16 %v295
  %v2002 = vunpack.c.h.b16 %v295
  %v2003 = vunpack.c.l.b16 %v296
  %v2004 = vunpack.c.h.b16 %v296
  %v2005 = vunpack.c.l.b16 %v297
  %v2006 = vunpack.c.h.b16 %v297
  %v2007 = vunpack.c.l.b16 %v298
  %v2008 = vunpack.c.h.b16 %v298
  %v2009 = vunpack.c.l.b16 %v299
  %v2010 = vunpack.c.h.b16 %v299
  %v2011 = vunpack.c.l.b16 %v300
  %v2012 = vunpack.c.h.b16 %v300
  %v2013 = vunpack.c.l.b16 %v301
  %v2014 = vunpack.c.h.b16 %v301
  %v2015 = vunpack.c.l.b16 %v302
  %v2016 = vunpack.c.h.b16 %v302
  %v2017 = vunpack.c.l.b16 %v303
  %v2018 = vunpack.c.h.b16 %v303
  %v2019 = vunpack.c.l.b16 %v304
  %v2020 = vunpack.c.h.b16 %v304
  %v2021 = vunpack.c.l.b16 %v305
  %v2022 = vunpack.c.h.b16 %v305
  %v2023 = vunpack.c.l.b16 %v306
  %v2024 = vunpack.c.h.b16 %v306
  %v2025 = vunpack.c.l.b16 %v307
  %v2026 = vunpack.c.h.b16 %v307
  %v2027 = vunpack.c.l.b16 %v308
  %v2028 = vunpack.c.h.b16 %v308
  %v2029 = vunpack.c.l.b16 %v309
  %v2030 = vunpack.c.h.b16 %v309
  %v2031 = vunpack.c.l.b16 %v310
  %v2032 = vunpack.c.h.b16 %v310
  %v2033 = vunpack.c.l.b16 %v311
  %v2034 = vunpack.c.h.b16 %v311
  %v2035 = vunpack.c.l.b16 %v312
  %v2036 = vunpack.c.h.b16 %v312
  %v2037 = vunpack.c.l.b16 %v313
  %v2038 = vunpack.c.h.b16 %v313
  %v2039 = vunpack.c.l.b16 %v314
  %v2040 = vunpack.c.h.b16 %v314
  %v2041 = vunpack.c.l.b16 %v315
  %v2042 = vunpack.c.h.b16 %v315
  %v2043 = vunpack.c.l.b16 %v316
  %v2044 = vunpack.c.h.b16 %v316
  %v2045 = vunpack.c.l.b16 %v317
  %v2046 = vunpack.c.h.b16 %v317
  %v2047 = vunpack.c.l.b16 %v318
  %v2048 = vunpack.c.h.b16 %v318
  %v2049 = vunpack.c.l.b16 %v319
  %v2050 = vunpack.c.h.b16 %v319
  %v2051 = vunpack.c.l.b16 %v320
  %v2052 = vunpack.c.h.b16 %v320
  %v2053 = vunpack.c.l.b16 %v321
  %v2054 = vunpack.c.h.b16 %v321
  %v2055 = vunpack.c.l.b16 %v322
  %v2056 = vunpack.c.h.b16 %v322
  %v2057 = vunpack.c.l.b16 %v323
  %v2058 = vunpack.c.h.b16 %v323
  %v2059 = vunpack.c.l.b16 %v324
  %v2060 = vunpack.c.h.b16 %v324
  %v2061 = vunpack.c.l.b16 %v325
  %v2062 = vunpack.c.h.b16 %v325
  %v2063 = vunpack.c.l.b16 %v326
  %v2064 = vunpack.c.h.b16 %v326
  %v2065 = vunpack.c.l.b16 %v327
  %v2066 = vunpack.c.h.b16 %v327
  %v2067 = vunpack.c.l.b16 %v328
  %v2068 = vunpack.c.h.b16 %v328
  %v2069 = vunpack.c.l.b16 %v329
  %v2070 = vunpack.c.h.b16 %v329
  %v2071 = vunpack.c.l.b16 %v330
  %v2072 = vunpack.c.h.b16 %v330
  %v2073 = vunpack.c.l.b16 %v331
  %v2074 = vunpack.c.h.b16 %v331
  %v2075 = vunpack.c.l.b16 %v332
  %v2076 = vunpack.c.h.b16 %v332
  %v2077 = vunpack.c.l.b16 %v333
  %v2078 = vunpack.c.h.b16 %v333
  %v2079 = vunpack.c.l.b16 %v334
  %v2080 = vunpack.c.h.b16 %v334
  %v2081 = vunpack.c.l.b16 %v335
  %v2082 = vunpack.c.h.b16 %v335
  %v2083 = vunpack.c.l.b16 %v336
  %v2084 = vunpack.c.h.b16 %v336
  %v2085 = vunpack.c.l.b16 %v337
  %v2086 = vunpack.c.h.b16 %v337
  %v2087 = vunpack.c.l.b16 %v338
  %v2088 = vunpack.c.h.b16 %v338
  %v2089 = vunpack.c.l.b16 %v339
  %v2090 = vunpack.c.h.b16 %v339
  %v2091 = vunpack.c.l.b16 %v340
  %v2092 = vunpack.c.h.b16 %v340
  %v2093 = vunpack.c.l.b16 %v341
  %v2094 = vunpack.c.h.b16 %v341
  %v2095 = vunpack.c.l.b16 %v342
  %v2096 = vunpack.c.h.b16 %v342
  %v2097 = vunpack.c.l.b16 %v343
  %v2098 = vunpack.c.h.b16 %v343
  %v2099 = vunpack.c.l.b16 %v344
  %v2100 = vunpack.c.h.b16 %v344
  %v2101 = vunpack.c.l.b16 %v345
  %v2102 = vunpack.c.h.b16 %v345
  %v2103 = vunpack.c.l.b16 %v346
  %v2104 = vunpack.c.h.b16 %v346
  %v2105 = vunpack.c.l.b16 %v347
  %v2106 = vunpack.c.h.b16 %v347
  %v2107 = vunpack.c.l.b16 %v348
  %v2108 = vunpack.c.h.b16 %v348
  %v2109 = vunpack.c.l.b16 %v349
  %v2110 = vunpack.c.h.b16 %v349
  %v2111 = vunpack.c.l.b16 %v350
  %v2112 = vunpack.c.h.b16 %v350
  %v2113 = vunpack.c.l.b16 %v351
  %v2114 = vunpack.c.h.b16 %v351
  %v2115 = vunpack.c.l.b16 %v352
  %v2116 = vunpack.c.h.b16 %v352
  %v2117 = vunpack.c.l.b16 %v353
  %v2118 = vunpack.c.h.b16 %v353
  %v2119 = vunpack.c.l.b16 %v354
  %v2120 = vunpack.c.h.b16 %v354
  %v2121 = vunpack.c.l.b16 %v355
  %v2122 = vunpack.c.h.b16 %v355
  %v2123 = vunpack.c.l.b16 %v356
  %v2124 = vunpack.c.h.b16 %v356
  %v2125 = vunpack.c.l.b16 %v357
  %v2126 = vunpack.c.h.b16 %v357
  %v2127 = vunpack.c.l.b16 %v358
  %v2128 = vunpack.c.h.b16 %v358
  %v2129 = vunpack.c.l.b16 %v359
  %v2130 = vunpack.c.h.b16 %v359
  %v2131 = vunpack.c.l.b16 %v360
  %v2132 = vunpack.c.h.b16 %v360
  %v2133 = vunpack.c.l.b16 %v361
  %v2134 = vunpack.c.h.b16 %v361
  %v2135 = vunpack.c.l.b16 %v362
  %v2136 = vunpack.c.h.b16 %v362
  %v2137 = vunpack.c.l.b16 %v363
  %v2138 = vunpack.c.h.b16 %v363
  %v2139 = vunpack.c.l.b16 %v364
  %v2140 = vunpack.c.h.b16 %v364
  %v2141 = vunpack.c.l.b16 %v365
  %v2142 = vunpack.c.h.b16 %v365
  %v2143 = vunpack.c.l.b16 %v366
  %v2144 = vunpack.c.h.b16 %v366
  %v2145 = vunpack.c.l.b16 %v367
  %v2146 = vunpack.c.h.b16 %v367
  %v2147 = vunpack.c.l.b16 %v368
  %v2148 = vunpack.c.h.b16 %v368
  %v2149 = vunpack.c.l.b16 %v369
  %v2150 = vunpack.c.h.b16 %v369
  %v2151 = vunpack.c.l.b16 %v370
  %v2152 = vunpack.c.h.b16 %v370
  %v2153 = vunpack.c.l.b16 %v371
  %v2154 = vunpack.c.h.b16 %v371
  %v2155 = vunpack.c.l.b16 %v372
  %v2156 = vunpack.c.h.b16 %v372
  %v2157 = vunpack.c.l.b16 %v373
  %v2158 = vunpack.c.h.b16 %v373
  %v2159 = vunpack.c.l.b16 %v374
  %v2160 = vunpack.c.h.b16 %v374
  %v2161 = vunpack.c.l.b16 %v375
  %v2162 = vunpack.c.h.b16 %v375
  %v2163 = vunpack.c.l.b16 %v376
  %v2164 = vunpack.c.h.b16 %v376
  %v2165 = vunpack.c.l.b16 %v377
  %v2166 = vunpack.c.h.b16 %v377
  %v2167 = vunpack.c.l.b16 %v378
  %v2168 = vunpack.c.h.b16 %v378
  %v2169 = vunpack.c.l.b16 %v379
  %v2170 = vunpack.c.h.b16 %v379
  %v2171 = vunpack.c.l.b16 %v380
  %v2172 = vunpack.c.h.b16 %v380
  %v2173 = vunpack.c.l.b16 %v381
  %v2174 = vunpack.c.h.b16 %v381
  %v2175 = vunpack.c.l.b16 %v382
  %v2176 = vunpack.c.h.b16 %v382
  %v2177 = vunpack.c.l.b16 %v383
  %v2178 = vunpack.c.h.b16 %v383
  %v2179 = vunpack.c.l.b16 %v384
  %v2180 = vunpack.c.h.b16 %v384
  %v2181 = vunpack.c.l.b16 %v385
  %v2182 = vunpack.c.h.b16 %v385
  %v2183 = vunpack.c.l.b16 %v386
  %v2184 = vunpack.c.h.b16 %v386
  %v2185 = vunpack.c.l.b16 %v387
  %v2186 = vunpack.c.h.b16 %v387
  %v2187 = vunpack.c.l.b16 %v388
  %v2188 = vunpack.c.h.b16 %v388
  %v2189 = vunpack.c.l.b16 %v389
  %v2190 = vunpack.c.h.b16 %v389
  %v2191 = vunpack.c.l.b16 %v390
  %v2192 = vunpack.c.h.b16 %v390
  %v2193 = vunpack.c.l.b16 %v391
  %v2194 = vunpack.c.h.b16 %v391
  %v2195 = vunpack.c.l.b16 %v392
  %v2196 = vunpack.c.h.b16 %v392
  %v2197 = vunpack.c.l.b16 %v393
  %v2198 = vunpack.c.h.b16 %v393
  %v2199 = vunpack.c.l.b16 %v394
  %v2200 = vunpack.c.h.b16 %v394
  %v2201 = vunpack.c.l.b16 %v395
  %v2202 = vunpack.c.h.b16 %v395
  %v2203 = vunpack.c.l.b16 %v396
  %v2204 = vunpack.c.h.b16 %v396
  %v2205 = vunpack.c.l.b16 %v397
  %v2206 = vunpack.c.h.b16 %v397
  %v2207 = vunpack.c.l.b16 %v398
  %v2208 = vunpack.c.h.b16 %v398
  %v2209 = vunpack.c.l.b16 %v399
  %v2210 = vunpack.c.h.b16 %v399
  %v2211 = vunpack.c.l.b16 %v400
  %v2212 = vunpack.c.h.b16 %v400
  %v2213 = vunpack.c.l.b16 %v401
  %v2214 = vunpack.c.h.b16 %v401
  %v2215 = vunpack.c.l.b16 %v402
  %v2216 = vunpack.c.h.b16 %v402
  %v2217 = vunpack.c.l.b16 %v403
  %v2218 = vunpack.c.h.b16 %v403
  %v2219 = vunpack.c.l.b16 %v404
  %v2220 = vunpack.c.h.b16 %v404
  %v2221 = vunpack.c.l.b16 %v405
  %v2222 = vunpack.c.h.b16 %v405
  %v2223 = vunpack.c.l.b16 %v406
  %v2224 = vunpack.c.h.b16 %v406
  %v2225 = vunpack.c.l.b16 %v407
  %v2226 = vunpack.c.h.b16 %v407
  %v2227 = vunpack.c.l.b16 %v408
  %v2228 = vunpack.c.h.b16 %v408
  %v2229 = vunpack.c.l.b16 %v409
  %v2230 = vunpack.c.h.b16 %v409
  %v2231 = vunpack.c.l.b16 %v410
  %v2232 = vunpack.c.h.b16 %v410
  %v2233 = vunpack.c.l.b16 %v411
  %v2234 = vunpack.c.h.b16 %v411
  %v2235 = vunpack.c.l.b16 %v412
  %v2236 = vunpack.c.h.b16 %v412
  %v2237 = vunpack.c.l.b16 %v413
  %v2238 = vunpack.c.h.b16 %v413
  %v2239 = vunpack.c.l.b16 %v414
  %v2240 = vunpack.c.h.b16 %v414
  %v2241 = vunpack.c.l.b16 %v415
  %v2242 = vunpack.c.h.b16 %v415
  %v2243 = vunpack.c.l.b16 %v416
  %v2244 = vunpack.c.h.b16 %v416
  %v2245 = vunpack.c.l.b16 %v417
  %v2246 = vunpack.c.h.b16 %v417
  %v2247 = vunpack.c.l.b16 %v418
  %v2248 = vunpack.c.h.b16 %v418
  %v2249 = vunpack.c.l.b16 %v419
  %v2250 = vunpack.c.h.b16 %v419
  %v2251 = vunpack.c.l.b16 %v420
  %v2252 = vunpack.c.h.b16 %v420
  %v2253 = vunpack.c.l.b16 %v421
  %v2254 = vunpack.c.h.b16 %v421
  %v2255 = vunpack.c.l.b16 %v422
  %v2256 = vunpack.c.h.b16 %v422
  %v2257 = vunpack.c.l.b16 %v423
  %v2258 = vunpack.c.h.b16 %v423
  %v2259 = vunpack.c.l.b16 %v424
  %v2260 = vunpack.c.h.b16 %v424
  %v2261 = vunpack.c.l.b16 %v425
  %v2262 = vunpack.c.h.b16 %v425
  %v2263 = vunpack.c.l.b16 %v426
  %v2264 = vunpack.c.h.b16 %v426
  %v2265 = vunpack.c.l.b16 %v427
  %v2266 = vunpack.c.h.b16 %v427
  %v2267 = vunpack.c.l.b16 %v428
  %v2268 = vunpack.c.h.b16 %v428
  %v2269 = vunpack.c.l.b16 %v429
  %v2270 = vunpack.c.h.b16 %v429
  %v2271 = vunpack.c.l.b16 %v430
  %v2272 = vunpack.c.h.b16 %v430
  %v2273 = vunpack.c.l.b16 %v431
  %v2274 = vunpack.c.h.b16 %v431
  %v2275 = vunpack.c.l.b16 %v432
  %v2276 = vunpack.c.h.b16 %v432
  %v2277 = vunpack.c.l.b16 %v433
  %v2278 = vunpack.c.h.b16 %v433
  %v2279 = vunpack.c.l.b16 %v434
  %v2280 = vunpack.c.h.b16 %v434
  %v2281 = vunpack.c.l.b16 %v435
  %v2282 = vunpack.c.h.b16 %v435
  %v2283 = vunpack.c.l.b16 %v436
  %v2284 = vunpack.c.h.b16 %v436
  %v2285 = vunpack.c.l.b16 %v437
  %v2286 = vunpack.c.h.b16 %v437
  %v2287 = vunpack.c.l.b16 %v438
  %v2288 = vunpack.c.h.b16 %v438
  %v2289 = vunpack.c.l.b16 %v439
  %v2290 = vunpack.c.h.b16 %v439
  %v2291 = vunpack.c.l.b16 %v440
  %v2292 = vunpack.c.h.b16 %v440
  %v2293 = vunpack.c.l.b16 %v441
  %v2294 = vunpack.c.h.b16 %v441
  %v2295 = vunpack.c.l.b16 %v442
  %v2296 = vunpack.c.h.b16 %v442
  %v2297 = vunpack.c.l.b16 %v443
  %v2298 = vunpack.c.h.b16 %v443
  %v2299 = vunpack.c.l.b16 %v444
  %v2300 = vunpack.c.h.b16 %v444
  %v2301 = vunpack.c.l.b16 %v445
  %v2302 = vunpack.c.h.b16 %v445
  %v2303 = vunpack.c.l.b16 %v446
  %v2304 = vunpack.c.h.b16 %v446
  %v2305 = vunpack.c.l.b16 %v447
  %v2306 = vunpack.c.h.b16 %v447
  %v2307 = vunpack.c.l.b16 %v448
  %v2308 = vunpack.c.h.b16 %v448
  %v2309 = vunpack.c.l.b16 %v449
  %v2310 = vunpack.c.h.b16 %v449
  %v2311 = vunpack.c.l.b16 %v450
  %v2312 = vunpack.c.h.b16 %v450
  %v2313 = vunpack.c.l.b16 %v451
  %v2314 = vunpack.c.h.b16 %v451
  %v2315 = vunpack.c.l.b16 %v452
  %v2316 = vunpack.c.h.b16 %v452
  %v2317 = vunpack.c.l.b16 %v453
  %v2318 = vunpack.c.h.b16 %v453
  %v2319 = vunpack.c.l.b16 %v454
  %v2320 = vunpack.c.h.b16 %v454
  %v2321 = vunpack.c.l.b16 %v455
  %v2322 = vunpack.c.h.b16 %v455
  %v2323 = vunpack.c.l.b16 %v456
  %v2324 = vunpack.c.h.b16 %v456
  %v2325 = vunpack.c.l.b16 %v457
  %v2326 = vunpack.c.h.b16 %v457
  %v2327 = vunpack.c.l.b16 %v458
  %v2328 = vunpack.c.h.b16 %v458
  %v2329 = vunpack.c.l.b16 %v459
  %v2330 = vunpack.c.h.b16 %v459
  %v2331 = vunpack.c.l.b16 %v460
  %v2332 = vunpack.c.h.b16 %v460
  %v2333 = vunpack.c.l.b16 %v461
  %v2334 = vunpack.c.h.b16 %v461
  %v2335 = vunpack.c.l.b16 %v462
  %v2336 = vunpack.c.h.b16 %v462
  %v2337 = vunpack.c.l.b16 %v463
  %v2338 = vunpack.c.h.b16 %v463
  %v2339 = vunpack.c.l.b16 %v464
  %v2340 = vunpack.c.h.b16 %v464
  %v2341 = vunpack.c.l.b16 %v465
  %v2342 = vunpack.c.h.b16 %v465
  %v2343 = vunpack.c.l.b16 %v466
  %v2344 = vunpack.c.h.b16 %v466
  %v2345 = vunpack.c.l.b16 %v467
  %v2346 = vunpack.c.h.b16 %v467
  %v2347 = vunpack.c.l.b16 %v468
  %v2348 = vunpack.c.h.b16 %v468
  %v2349 = vunpack.c.l.b16 %v469
  %v2350 = vunpack.c.h.b16 %v469
  %v2351 = vunpack.c.l.b16 %v470
  %v2352 = vunpack.c.h.b16 %v470
  %v2353 = vunpack.c.l.b16 %v471
  %v2354 = vunpack.c.h.b16 %v471
  %v2355 = vunpack.c.l.b16 %v472
  %v2356 = vunpack.c.h.b16 %v472
  %v2357 = vunpack.c.l.b16 %v473
  %v2358 = vunpack.c.h.b16 %v473
  %v2359 = vunpack.c.l.b16 %v474
  %v2360 = vunpack.c.h.b16 %v474
  %v2361 = vunpack.c.l.b16 %v475
  %v2362 = vunpack.c.h.b16 %v475
  %v2363 = vunpack.c.l.b16 %v476
  %v2364 = vunpack.c.h.b16 %v476
  %v2365 = vunpack.c.l.b16 %v477
  %v2366 = vunpack.c.h.b16 %v477
  %v2367 = vunpack.c.l.b16 %v478
  %v2368 = vunpack.c.h.b16 %v478
  %v2369 = vunpack.c.l.b16 %v479
  %v2370 = vunpack.c.h.b16 %v479
  %v2371 = vunpack.c.l.b16 %v480
  %v2372 = vunpack.c.h.b16 %v480
  %v2373 = vunpack.c.l.b16 %v481
  %v2374 = vunpack.c.h.b16 %v481
  %v2375 = vunpack.c.l.b16 %v482
  %v2376 = vunpack.c.h.b16 %v482
  %v2377 = vunpack.c.l.b16 %v483
  %v2378 = vunpack.c.h.b16 %v483
  %v2379 = vunpack.c.l.b16 %v484
  %v2380 = vunpack.c.h.b16 %v484
  %v2381 = vunpack.c.l.b16 %v485
  %v2382 = vunpack.c.h.b16 %v485
  %v2383 = vunpack.c.l.b16 %v486
  %v2384 = vunpack.c.h.b16 %v486
  %v2385 = vunpack.c.l.b16 %v487
  %v2386 = vunpack.c.h.b16 %v487
  %v2387 = vunpack.c.l.b16 %v488
  %v2388 = vunpack.c.h.b16 %v488
  %v2389 = vunpack.c.l.b16 %v489
  %v2390 = vunpack.c.h.b16 %v489
  %v2391 = vunpack.c.l.b16 %v490
  %v2392 = vunpack.c.h.b16 %v490
  %v2393 = vunpack.c.l.b16 %v491
  %v2394 = vunpack.c.h.b16 %v491
  %v2395 = vunpack.c.l.b16 %v492
  %v2396 = vunpack.c.h.b16 %v492
  %v2397 = vunpack.c.l.b16 %v493
  %v2398 = vunpack.c.h.b16 %v493
  %v2399 = vunpack.c.l.b16 %v494
  %v2400 = vunpack.c.h.b16 %v494
  %v2401 = vunpack.c.l.b16 %v495
  %v2402 = vunpack.c.h.b16 %v495
  %v2403 = vunpack.c.l.b16 %v496
  %v2404 = vunpack.c.h.b16 %v496
  %v2405 = vunpack.c.l.b16 %v497
  %v2406 = vunpack.c.h.b16 %v497
  %v2407 = vunpack.c.l.b16 %v498
  %v2408 = vunpack.c.h.b16 %v498
  %v2409 = vunpack.c.l.b16 %v499
  %v2410 = vunpack.c.h.b16 %v499
  %v2411 = vunpack.c.l.b16 %v500
  %v2412 = vunpack.c.h.b16 %v500
  %v2413 = vunpack.c.l.b16 %v501
  %v2414 = vunpack.c.h.b16 %v501
  %v2415 = vunpack.c.l.b16 %v502
  %v2416 = vunpack.c.h.b16 %v502
  %v2417 = vunpack.c.l.b16 %v503
  %v2418 = vunpack.c.h.b16 %v503
  %v2419 = vunpack.c.l.b16 %v504
  %v2420 = vunpack.c.h.b16 %v504
  %v2421 = vunpack.c.l.b16 %v505
  %v2422 = vunpack.c.h.b16 %v505
  %v2423 = vunpack.c.l.b16 %v506
  %v2424 = vunpack.c.h.b16 %v506
  %v2425 = vunpack.c.l.b16 %v507
  %v2426 = vunpack.c.h.b16 %v507
  %v2427 = vunpack.c.l.b16 %v508
  %v2428 = vunpack.c.h.b16 %v508
  %v2429 = vunpack.c.l.b16 %v509
  %v2430 = vunpack.c.h.b16 %v509
  %v2431 = vunpack.c.l.b16 %v510
  %v2432 = vunpack.c.h.b16 %v510
  %v2433 = vunpack.c.l.b16 %v511
  %v2434 = vunpack.c.h.b16 %v511
  %v2435 = vunpack.c.l.b16 %v512
  %v2436 = vunpack.c.h.b16 %v512
  %v2437 = vunpack.c.l.b16 %v513
  %v2438 = vunpack.c.h.b16 %v513
  %v2439 = vunpack.c.l.b16 %v514
  %v2440 = vunpack.c.h.b16 %v514
  %v2441 = vunpack.c.l.b16 %v515
  %v2442 = vunpack.c.h.b16 %v515
  %v2443 = vunpack.c.l.b16 %v516
  %v2444 = vunpack.c.h.b16 %v516
  %v2445 = vunpack.c.l.b16 %v517
  %v2446 = vunpack.c.h.b16 %v517
  %v2447 = vunpack.c.l.b16 %v518
  %v2448 = vunpack.c.h.b16 %v518
  %v2449 = vunpack.c.l.b16 %v519
  %v2450 = vunpack.c.h.b16 %v519
  %v2451 = vunpack.c.l.b16 %v520
  %v2452 = vunpack.c.h.b16 %v520
  %v2453 = vunpack.c.l.b16 %v521
  %v2454 = vunpack.c.h.b16 %v521
  %v2455 = vunpack.c.l.b16 %v522
  %v2456 = vunpack.c.h.b16 %v522
  %v2457 = vunpack.c.l.b16 %v523
  %v2458 = vunpack.c.h.b16 %v523
  %v2459 = vunpack.c.l.b16 %v524
  %v2460 = vunpack.c.h.b16 %v524
  %v2461 = vunpack.c.l.b16 %v525
  %v2462 = vunpack.c.h.b16 %v525
  %v2463 = vunpack.c.l.b16 %v526
  %v2464 = vunpack.c.h.b16 %v526
  %v2465 = vunpack.c.l.b16 %v527
  %v2466 = vunpack.c.h.b16 %v527
  %v2467 = vunpack.c.l.b16 %v528
  %v2468 = vunpack.c.h.b16 %v528
  %v2469 = vunpack.c.l.b16 %v529
  %v2470 = vunpack.c.h.b16 %v529
  %v2471 = vunpack.c.l.b16 %v530
  %v2472 = vunpack.c.h.b16 %v530
  %v2473 = vunpack.c.l.b16 %v531
  %v2474 = vunpack.c.h.b16 %v531
  %v2475 = vunpack.c.l.b16 %v532
  %v2476 = vunpack.c.h.b16 %v532
  %v2477 = vunpack.c.l.b16 %v533
  %v2478 = vunpack.c.h.b16 %v533
  %v2479 = vunpack.c.l.b16 %v534
  %v2480 = vunpack.c.h.b16 %v534
  %v2481 = vunpack.c.l.b16 %v535
  %v2482 = vunpack.c.h.b16 %v535
  %v2483 = vunpack.c.l.b16 %v536
  %v2484 = vunpack.c.h.b16 %v536
  %v2485 = vunpack.c.l.b16 %v537
  %v2486 = vunpack.c.h.b16 %v537
  %v2487 = vunpack.c.l.b16 %v538
  %v2488 = vunpack.c.h.b16 %v538
  %v2489 = vunpack.c.l.b16 %v539
  %v2490 = vunpack.c.h.b16 %v539
  %v2491 = vunpack.c.l.b16 %v540
  %v2492 = vunpack.c.h.b16 %v540
  %v2493 = vunpack.c.l.b16 %v541
  %v2494 = vunpack.c.h.b16 %v541
  %v2495 = vunpack.c.l.b16 %v542
  %v2496 = vunpack.c.h.b16 %v542
  %v2497 = vunpack.c.l.b16 %v543
  %v2498 = vunpack.c.h.b16 %v543
  %v2499 = vunpack.c.l.b16 %v544
  %v2500 = vunpack.c.h.b16 %v544
  %v2501 = vunpack.c.l.b16 %v545
  %v2502 = vunpack.c.h.b16 %v545
  %v2503 = vunpack.c.l.b16 %v546
  %v2504 = vunpack.c.h.b16 %v546
  %v2505 = vunpack.c.l.b16 %v547
  %v2506 = vunpack.c.h.b16 %v547
  %v2507 = vunpack.c.l.b16 %v548
  %v2508 = vunpack.c.h.b16 %v548
  %v2509 = vunpack.c.l.b16 %v549
  %v2510 = vunpack.c.h.b16 %v549
  %v2511 = vunpack.c.l.b16 %v550
  %v2512 = vunpack.c.h.b16 %v550
  %v2513 = vunpack.c.l.b16 %v551
  %v2514 = vunpack.c.h.b16 %v551
  %v2515 = vunpack.c.l.b16 %v552
  %v2516 = vunpack.c.h.b16 %v552
  %v2517 = vunpack.c.l.b16 %v553
  %v2518 = vunpack.c.h.b16 %v553
  %v2519 = vunpack.c.l.b16 %v554
  %v2520 = vunpack.c.h.b16 %v554
  %v2521 = vunpack.c.l.b16 %v555
  %v2522 = vunpack.c.h.b16 %v555
  %v2523 = vunpack.c.l.b16 %v556
  %v2524 = vunpack.c.h.b16 %v556
  %v2525 = vunpack.c.l.b16 %v557
  %v2526 = vunpack.c.h.b16 %v557
  %v2527 = vunpack.c.l.b16 %v558
  %v2528 = vunpack.c.h.b16 %v558
  %v2529 = vunpack.c.l.b16 %v559
  %v2530 = vunpack.c.h.b16 %v559
  %v2531 = vunpack.c.l.b16 %v560
  %v2532 = vunpack.c.h.b16 %v560
  %v2533 = vunpack.c.l.b16 %v561
  %v2534 = vunpack.c.h.b16 %v561
  %v2535 = vunpack.c.l.b16 %v562
  %v2536 = vunpack.c.h.b16 %v562
  %v2537 = vunpack.c.l.b16 %v563
  %v2538 = vunpack.c.h.b16 %v563
  %v2539 = vunpack.c.l.b16 %v564
  %v2540 = vunpack.c.h.b16 %v564
  %v2541 = vunpack.c.l.b16 %v565
  %v2542 = vunpack.c.h.b16 %v565
  %v2543 = vunpack.c.l.b16 %v566
  %v2544 = vunpack.c.h.b16 %v566
  %v2545 = vunpack.c.l.b16 %v567
  %v2546 = vunpack.c.h.b16 %v567
  %v2547 = vunpack.c.l.b16 %v568
  %v2548 = vunpack.c.h.b16 %v568
  %v2549 = vunpack.c.l.b16 %v569
  %v2550 = vunpack.c.h.b16 %v569
  %v2551 = vunpack.c.l.b16 %v570
  %v2552 = vunpack.c.h.b16 %v570
  %v2553 = vunpack.c.l.b16 %v571
  %v2554 = vunpack.c.h.b16 %v571
  %v2555 = vunpack.c.l.b16 %v572
  %v2556 = vunpack.c.h.b16 %v572
  %v2557 = vunpack.c.l.b16 %v573
  %v2558 = vunpack.c.h.b16 %v573
  %v2559 = vunpack.c.l.b16 %v574
  %v2560 = vunpack.c.h.b16 %v574
  %v2561 = vunpack.c.l.b16 %v575
  %v2562 = vunpack.c.h.b16 %v575
  %v2563 = vunpack.c.l.b16 %v576
  %v2564 = vunpack.c.h.b16 %v576
  %v2565 = vunpack.c.l.b16 %v577
  %v2566 = vunpack.c.h.b16 %v577
  %v2567 = vunpack.c.l.b16 %v578
  %v2568 = vunpack.c.h.b16 %v578
  %v2569 = vunpack.c.l.b16 %v579
  %v2570 = vunpack.c.h.b16 %v579
  %v2571 = vunpack.c.l.b16 %v580
  %v2572 = vunpack.c.h.b16 %v580
  %v2573 = vunpack.c.l.b16 %v581
  %v2574 = vunpack.c.h.b16 %v581
  %v2575 = vunpack.c.l.b16 %v582
  %v2576 = vunpack.c.h.b16 %v582
  %v2577 = vunpack.c.l.b16 %v583
  %v2578 = vunpack.c.h.b16 %v583
  %v2579 = vunpack.c.l.b16 %v584
  %v2580 = vunpack.c.h.b16 %v584
  %v2581 = vunpack.c.l.b16 %v585
  %v2582 = vunpack.c.h.b16 %v585
  %v2583 = vunpack.c.l.b16 %v586
  %v2584 = vunpack.c.h.b16 %v586
  %v2585 = vunpack.c.l.b16 %v587
  %v2586 = vunpack.c.h.b16 %v587
  %v2587 = vunpack.c.l.b16 %v588
  %v2588 = vunpack.c.h.b16 %v588
  %v2589 = vunpack.c.l.b16 %v589
  %v2590 = vunpack.c.h.b16 %v589
  %v2591 = vunpack.c.l.b16 %v590
  %v2592 = vunpack.c.h.b16 %v590
  %v2593 = vunpack.c.l.b16 %v591
  %v2594 = vunpack.c.h.b16 %v591
  %v2595 = vunpack.c.l.b16 %v592
  %v2596 = vunpack.c.h.b16 %v592
  %v2597 = vunpack.c.l.b16 %v593
  %v2598 = vunpack.c.h.b16 %v593
  %v2599 = vunpack.c.l.b16 %v594
  %v2600 = vunpack.c.h.b16 %v594
  %v2601 = vunpack.c.l.b16 %v595
  %v2602 = vunpack.c.h.b16 %v595
  %v2603 = vunpack.c.l.b16 %v596
  %v2604 = vunpack.c.h.b16 %v596
  %v2605 = vunpack.c.l.b16 %v597
  %v2606 = vunpack.c.h.b16 %v597
  %v2607 = vunpack.c.l.b16 %v598
  %v2608 = vunpack.c.h.b16 %v598
  %v2609 = vunpack.c.l.b16 %v599
  %v2610 = vunpack.c.h.b16 %v599
  %v2611 = vunpack.c.l.b16 %v600
  %v2612 = vunpack.c.h.b16 %v600
  %v2613 = vunpack.c.l.b16 %v601
  %v2614 = vunpack.c.h.b16 %v601
  %v2615 = vunpack.c.l.b16 %v602
  %v2616 = vunpack.c.h.b16 %v602
  %v2617 = vunpack.c.l.b16 %v603
  %v2618 = vunpack.c.h.b16 %v603
  %v2619 = vunpack.c.l.b16 %v604
  %v2620 = vunpack.c.h.b16 %v604
  %v2621 = vunpack.c.l.b16 %v605
  %v2622 = vunpack.c.h.b16 %v605
  %v2623 = vunpack.c.l.b16 %v606
  %v2624 = vunpack.c.h.b16 %v606
  %v2625 = vunpack.c.l.b16 %v607
  %v2626 = vunpack.c.h.b16 %v607
  %v2627 = vunpack.c.l.b16 %v608
  %v2628 = vunpack.c.h.b16 %v608
  %v2629 = vunpack.c.l.b16 %v609
  %v2630 = vunpack.c.h.b16 %v609
  %v2631 = vunpack.c.l.b16 %v610
  %v2632 = vunpack.c.h.b16 %v610
  %v2633 = vunpack.c.l.b16 %v611
  %v2634 = vunpack.c.h.b16 %v611
  %v2635 = vunpack.c.l.b16 %v612
  %v2636 = vunpack.c.h.b16 %v612
  %v2637 = vunpack.c.l.b16 %v613
  %v2638 = vunpack.c.h.b16 %v613
  %v2639 = vunpack.c.l.b16 %v614
  %v2640 = vunpack.c.h.b16 %v614
  %v2641 = vunpack.c.l.b16 %v615
  %v2642 = vunpack.c.h.b16 %v615
  %v2643 = vunpack.c.l.b16 %v616
  %v2644 = vunpack.c.h.b16 %v616
  %v2645 = vunpack.c.l.b16 %v617
  %v2646 = vunpack.c.h.b16 %v617
  %v2647 = vunpack.c.l.b16 %v618
  %v2648 = vunpack.c.h.b16 %v618
  %v2649 = vunpack.c.l.b16 %v619
  %v2650 = vunpack.c.h.b16 %v619
  %v2651 = vunpack.c.l.b16 %v620
  %v2652 = vunpack.c.h.b16 %v620
  %v2653 = vunpack.c.l.b16 %v621
  %v2654 = vunpack.c.h.b16 %v621
  %v2655 = vunpack.c.l.b16 %v622
  %v2656 = vunpack.c.h.b16 %v622
  %v2657 = vunpack.c.l.b16 %v623
  %v2658 = vunpack.c.h.b16 %v623
  %v2659 = vunpack.c.l.b16 %v624
  %v2660 = vunpack.c.h.b16 %v624
  %v2661 = vunpack.c.l.b16 %v625
  %v2662 = vunpack.c.h.b16 %v625
  %v2663 = vunpack.c.l.b16 %v626
  %v2664 = vunpack.c.h.b16 %v626
  %v2665 = vunpack.c.l.b16 %v627
  %v2666 = vunpack.c.h.b16 %v627
  %v2667 = vunpack.c.l.b16 %v628
  %v2668 = vunpack.c.h.b16 %v628
  %v2669 = vunpack.c.l.b16 %v629
  %v2670 = vunpack.c.h.b16 %v629
  %v2671 = vunpack.c.l.b16 %v630
  %v2672 = vunpack.c.h.b16 %v630
  %v2673 = vunpack.c.l.b16 %v631
  %v2674 = vunpack.c.h.b16 %v631
  %v2675 = vunpack.c.l.b16 %v632
  %v2676 = vunpack.c.h.b16 %v632
  %v2677 = vunpack.c.l.b16 %v633
  %v2678 = vunpack.c.h.b16 %v633
  %v2679 = vunpack.c.l.b16 %v634
  %v2680 = vunpack.c.h.b16 %v634
  %v2681 = vunpack.c.l.b16 %v635
  %v2682 = vunpack.c.h.b16 %v635
  %v2683 = vunpack.c.l.b16 %v636
  %v2684 = vunpack.c.h.b16 %v636
  %v2685 = vunpack.c.l.b16 %v637
  %v2686 = vunpack.c.h.b16 %v637
  %v2687 = vunpack.c.l.b16 %v638
  %v2688 = vunpack.c.h.b16 %v638
  %v2689 = vunpack.c.l.b16 %v639
  %v2690 = vunpack.c.h.b16 %v639
  %v2691 = vunpack.c.l.b16 %v640
  %v2692 = vunpack.c.h.b16 %v640
  %v2693 = vunpack.c.l.b16 %v641
  %v2694 = vunpack.c.h.b16 %v641
  %v2695 = vunpack.c.l.b16 %v642
  %v2696 = vunpack.c.h.b16 %v642
  %v2697 = vunpack.c.l.b16 %v643
  %v2698 = vunpack.c.h.b16 %v643
  %v2699 = vunpack.c.l.b16 %v644
  %v2700 = vunpack.c.h.b16 %v644
  %v2701 = vunpack.c.l.b16 %v645
  %v2702 = vunpack.c.h.b16 %v645
  %v2703 = vunpack.c.l.b16 %v646
  %v2704 = vunpack.c.h.b16 %v646
  %v2705 = vunpack.c.l.b16 %v647
  %v2706 = vunpack.c.h.b16 %v647
  %v2707 = vunpack.c.l.b16 %v648
  %v2708 = vunpack.c.h.b16 %v648
  %v2709 = vunpack.c.l.b16 %v649
  %v2710 = vunpack.c.h.b16 %v649
  %v2711 = vpack.c.b16 %v1563, %v1559
  %v2712 = vpack.c.b16 %v1564, %v1560
  %v2713 = vpack.c.b16 %v1565, %v1561
  %v2714 = vpack.c.b16 %v1566, %v1562
  %v2715 = vpack.c.b16 %v1571, %v1567
  %v2716 = vpack.c.b16 %v1572, %v1568
  %v2717 = vpack.c.b16 %v1573, %v1569
  %v2718 = vpack.c.b16 %v1574, %v1570
  %v2719 = vpack.c.b16 %v1579, %v1575
  %v2720 = vpack.c.b16 %v1580, %v1576
  %v2721 = vpack.c.b16 %v1581, %v1577
  %v2722 = vpack.c.b16 %v1582, %v1578
  %v2723 = vpack.c.b16 %v1587, %v1583
  %v2724 = vpack.c.b16 %v1588, %v1584
  %v2725 = vpack.c.b16 %v1589, %v1585
  %v2726 = vpack.c.b16 %v1590, %v1586
  %v2727 = vpack.c.b16 %v1595, %v1591
  %v2728 = vpack.c.b16 %v1596, %v1592
  %v2729 = vpack.c.b16 %v1597, %v1593
  %v2730 = vpack.c.b16 %v1598, %v1594
  %v2731 = vpack.c.b16 %v1603, %v1599
  %v2732 = vpack.c.b16 %v1604, %v1600
  %v2733 = vpack.c.b16 %v1605, %v1601
  %v2734 = vpack.c.b16 %v1606, %v1602
  %v2735 = vpack.c.b16 %v1611, %v1607
  %v2736 = vpack.c.b16 %v1612, %v1608
  %v2737 = vpack.c.b16 %v1613, %v1609
  %v2738 = vpack.c.b16 %v1614, %v1610
  %v2739 = vpack.c.b16 %v1619, %v1615
  %v2740 = vpack.c.b16 %v1620, %v1616
  %v2741 = vpack.c.b16 %v1621, %v1617
  %v2742 = vpack.c.b16 %v1622, %v1618
  %v2743 = vpack.c.b16 %v1627, %v1623
  %v2744 = vpack.c.b16 %v1628, %v1624
  %v2745 = vpack.c.b16 %v1629, %v1625
  %v2746 = vpack.c.b16 %v1630, %v1626
  %v2747 = vpack.c.b16 %v1635, %v1631
  %v2748 = vpack.c.b16 %v1636, %v1632
  %v2749 = vpack.c.b16 %v1637, %v1633
  %v2750 = vpack.c.b16 %v1638, %v1634
  %v2751 = vpack.c.b16 %v1643, %v1639
  %v2752 = vpack.c.b16 %v1644, %v1640
  %v2753 = vpack.c.b16 %v1645, %v1641
  %v2754 = vpack.c.b16 %v1646, %v1642
  %v2755 = vpack.c.b16 %v1651, %v1647
  %v2756 = vpack.c.b16 %v1652, %v1648
  %v2757 = vpack.c.b16 %v1653, %v1649
  %v2758 = vpack.c.b16 %v1654, %v1650
  %v2759 = vpack.c.b16 %v1659, %v1655
  %v2760 = vpack.c.b16 %v1660, %v1656
  %v2761 = vpack.c.b16 %v1661, %v1657
  %v2762 = vpack.c.b16 %v1662, %v1658
  %v2763 = vpack.c.b16 %v1667, %v1663
  %v2764 = vpack.c.b16 %v1668, %v1664
  %v2765 = vpack.c.b16 %v1669, %v1665
  %v2766 = vpack.c.b16 %v1670, %v1666
  %v2767 = vpack.c.b16 %v1675, %v1671
  %v2768 = vpack.c.b16 %v1676, %v1672
  %v2769 = vpack.c.b16 %v1677, %v1673
  %v2770 = vpack.c.b16 %v1678, %v1674
  %v2771 = vpack.c.b16 %v1683, %v1679
  %v2772 = vpack.c.b16 %v1684, %v1680
  %v2773 = vpack.c.b16 %v1685, %v1681
  %v2774 = vpack.c.b16 %v1686, %v1682
  %v2775 = vpack.c.b16 %v1691, %v1687
  %v2776 = vpack.c.b16 %v1692, %v1688
  %v2777 = vpack.c.b16 %v1693, %v1689
  %v2778 = vpack.c.b16 %v1694, %v1690
  %v2779 = vpack.c.b16 %v1699, %v1695
  %v2780 = vpack.c.b16 %v1700, %v1696
  %v2781 = vpack.c.b16 %v1701, %v1697
  %v2782 = vpack.c.b16 %v1702, %v1698
  %v2783 = vpack.c.b16 %v1707, %v1703
  %v2784 = vpack.c.b16 %v1708, %v1704
  %v2785 = vpack.c.b16 %v1709, %v1705
  %v2786 = vpack.c.b16 %v1710, %v1706
  %v2787 = vpack.c.b16 %v1715, %v1711
  %v2788 = vpack.c.b16 %v1716, %v1712
  %v2789 = vpack.c.b16 %v1717, %v1713
  %v2790 = vpack.c.b16 %v1718, %v1714
  %v2791 = vpack.c.b16 %v1723, %v1719
  %v2792 = vpack.c.b16 %v1724, %v1720
  %v2793 = vpack.c.b16 %v1725, %v1721
  %v2794 = vpack.c.b16 %v1726, %v1722
  %v2795 = vpack.c.b16 %v1731, %v1727
  %v2796 = vpack.c.b16 %v1732, %v1728
  %v2797 = vpack.c.b16 %v1733, %v1729
  %v2798 = vpack.c.b16 %v1734, %v1730
  %v2799 = vpack.c.b16 %v1739, %v1735
  %v2800 = vpack.c.b16 %v1740, %v1736
  %v2801 = vpack.c.b16 %v1741, %v1737
  %v2802 = vpack.c.b16 %v1742, %v1738
  %v2803 = vpack.c.b16 %v1747, %v1743
  %v2804 = vpack.c.b16 %v1748, %v1744
  %v2805 = vpack.c.b16 %v1749, %v1745
  %v2806 = vpack.c.b16 %v1750, %v1746
  %v2807 = vpack.c.b16 %v1755, %v1751
  %v2808 = vpack.c.b16 %v1756, %v1752
  %v2809 = vpack.c.b16 %v1757, %v1753
  %v2810 = vpack.c.b16 %v1758, %v1754
  %v2811 = vpack.c.b16 %v1763, %v1759
  %v2812 = vpack.c.b16 %v1764, %v1760
  %v2813 = vpack.c.b16 %v1765, %v1761
  %v2814 = vpack.c.b16 %v1766, %v1762
  %v2815 = vpack.c.b16 %v1771, %v1767
  %v2816 = vpack.c.b16 %v1772, %v1768
  %v2817 = vpack.c.b16 %v1773, %v1769
  %v2818 = vpack.c.b16 %v1774, %v1770
  %v2819 = vpack.c.b16 %v1779, %v1775
  %v2820 = vpack.c.b16 %v1780, %v1776
  %v2821 = vpack.c.b16 %v1781, %v1777
  %v2822 = vpack.c.b16 %v1782, %v1778
  %v2823 = vpack.c.b16 %v1787, %v1783
  %v2824 = vpack.c.b16 %v1788, %v1784
  %v2825 = vpack.c.b16 %v1789, %v1785
  %v2826 = vpack.c.b16 %v1790, %v1786
  %v2827 = vpack.c.b16 %v1795, %v1791
  %v2828 = vpack.c.b16 %v1796, %v1792
  %v2829 = vpack.c.b16 %v1797, %v1793
  %v2830 = vpack.c.b16 %v1798, %v1794
  %v2831 = vpack.c.b16 %v1803, %v1799
  %v2832 = vpack.c.b16 %v1804, %v1800
  %v2833 = vpack.c.b16 %v1805, %v1801
  %v2834 = vpack.c.b16 %v1806, %v1802
  %v2835 = vpack.c.b16 %v1811, %v1807
  %v2836 = vpack.c.b16 %v1812, %v1808
  %v2837 = vpack.c.b16 %v1813, %v1809
  %v2838 = vpack.c.b16 %v1814, %v1810
  %v2839 = vpack.c.b16 %v1819, %v1815
  %v2840 = vpack.c.b16 %v1820, %v1816
  %v2841 = vpack.c.b16 %v1821, %v1817
  %v2842 = vpack.c.b16 %v1822, %v1818
  %v2843 = vpack.c.b16 %v1827, %v1823
  %v2844 = vpack.c.b16 %v1828, %v1824
  %v2845 = vpack.c.b16 %v1829, %v1825
  %v2846 = vpack.c.b16 %v1830, %v1826
  %v2847 = vpack.c.b16 %v1835, %v1831
  %v2848 = vpack.c.b16 %v1836, %v1832
  %v2849 = vpack.c.b16 %v1837, %v1833
  %v2850 = vpack.c.b16 %v1838, %v1834
  %v2851 = vpack.c.b16 %v1843, %v1839
  %v2852 = vpack.c.b16 %v1844, %v1840
  %v2853 = vpack.c.b16 %v1845, %v1841
  %v2854 = vpack.c.b16 %v1846, %v1842
  %v2855 = vpack.c.b16 %v1851, %v1847
  %v2856 = vpack.c.b16 %v1852, %v1848
  %v2857 = vpack.c.b16 %v1853, %v1849
  %v2858 = vpack.c.b16 %v1854, %v1850
  %v2859 = vpack.c.b16 %v1859, %v1855
  %v2860 = vpack.c.b16 %v1860, %v1856
  %v2861 = vpack.c.b16 %v1861, %v1857
  %v2862 = vpack.c.b16 %v1862, %v1858
  %v2863 = vpack.c.b16 %v1867, %v1863
  %v2864 = vpack.c.b16 %v1868, %v1864
  %v2865 = vpack.c.b16 %v1869, %v1865
  %v2866 = vpack.c.b16 %v1870, %v1866
  %v2867 = vpack.c.b16 %v1875, %v1871
  %v2868 = vpack.c.b16 %v1876, %v1872
  %v2869 = vpack.c.b16 %v1877, %v1873
  %v2870 = vpack.c.b16 %v1878, %v1874
  %v2871 = vpack.c.b16 %v1883, %v1879
  %v2872 = vpack.c.b16 %v1884, %v1880
  %v2873 = vpack.c.b16 %v1885, %v1881
  %v2874 = vpack.c.b16 %v1886, %v1882
  %v2875 = vpack.c.b16 %v1891, %v1887
  %v2876 = vpack.c.b16 %v1892, %v1888
  %v2877 = vpack.c.b16 %v1893, %v1889
  %v2878 = vpack.c.b16 %v1894, %v1890
  %v2879 = vpack.c.b16 %v1899, %v1895
  %v2880 = vpack.c.b16 %v1900, %v1896
  %v2881 = vpack.c.b16 %v1901, %v1897
  %v2882 = vpack.c.b16 %v1902, %v1898
  %v2883 = vpack.c.b16 %v1907, %v1903
  %v2884 = vpack.c.b16 %v1908, %v1904
  %v2885 = vpack.c.b16 %v1909, %v1905
  %v2886 = vpack.c.b16 %v1910, %v1906
  %v2887 = vpack.c.b16 %v1915, %v1911
  %v2888 = vpack.c.b16 %v1916, %v1912
  %v2889 = vpack.c.b16 %v1917, %v1913
  %v2890 = vpack.c.b16 %v1918, %v1914
  %v2891 = vpack.c.b16 %v1923, %v1919
  %v2892 = vpack.c.b16 %v1924, %v1920
  %v2893 = vpack.c.b16 %v1925, %v1921
  %v2894 = vpack.c.b16 %v1926, %v1922
  %v2895 = vpack.c.b16 %v1931, %v1927
  %v2896 = vpack.c.b16 %v1932, %v1928
  %v2897 = vpack.c.b16 %v1933, %v1929
  %v2898 = vpack.c.b16 %v1934, %v1930
  %v2899 = vpack.c.b16 %v1939, %v1935
  %v2900 = vpack.c.b16 %v1940, %v1936
  %v2901 = vpack.c.b16 %v1941, %v1937
  %v2902 = vpack.c.b16 %v1942, %v1938
  %v2903 = vpack.c.b16 %v1947, %v1943
  %v2904 = vpack.c.b16 %v1948, %v1944
  %v2905 = vpack.c.b16 %v1949, %v1945
  %v2906 = vpack.c.b16 %v1950, %v1946
  %v2907 = vpack.c.b16 %v1955, %v1951
  %v2908 = vpack.c.b16 %v1956, %v1952
  %v2909 = vpack.c.b16 %v1957, %v1953
  %v2910 = vpack.c.b16 %v1958, %v1954
  %v2911 = vpack.c.b16 %v1963, %v1959
  %v2912 = vpack.c.b16 %v1964, %v1960
  %v2913 = vpack.c.b16 %v1965, %v1961
  %v2914 = vpack.c.b16 %v1966, %v1962
  %v2915 = vpack.c.b16 %v1971, %v1967
  %v2916 = vpack.c.b16 %v1972, %v1968
  %v2917 = vpack.c.b16 %v1973, %v1969
  %v2918 = vpack.c.b16 %v1974, %v1970
  %v2919 = vpack.c.b16 %v1979, %v1975
  %v2920 = vpack.c.b16 %v1980, %v1976
  %v2921 = vpack.c.b16 %v1981, %v1977
  %v2922 = vpack.c.b16 %v1982, %v1978
  %v2923 = vpack.c.b16 %v1987, %v1983
  %v2924 = vpack.c.b16 %v1988, %v1984
  %v2925 = vpack.c.b16 %v1989, %v1985
  %v2926 = vpack.c.b16 %v1990, %v1986
  %v2927 = vpack.c.b16 %v1995, %v1991
  %v2928 = vpack.c.b16 %v1996, %v1992
  %v2929 = vpack.c.b16 %v1997, %v1993
  %v2930 = vpack.c.b16 %v1998, %v1994
  %v2931 = vpack.c.b16 %v2003, %v1999
  %v2932 = vpack.c.b16 %v2004, %v2000
  %v2933 = vpack.c.b16 %v2005, %v2001
  %v2934 = vpack.c.b16 %v2006, %v2002
  %v2935 = vpack.c.b16 %v2011, %v2007
  %v2936 = vpack.c.b16 %v2012, %v2008
  %v2937 = vpack.c.b16 %v2013, %v2009
  %v2938 = vpack.c.b16 %v2014, %v2010
  %v2939 = vpack.c.b16 %v2019, %v2015
  %v2940 = vpack.c.b16 %v2020, %v2016
  %v2941 = vpack.c.b16 %v2021, %v2017
  %v2942 = vpack.c.b16 %v2022, %v2018
  %v2943 = vpack.c.b16 %v2027, %v2023
  %v2944 = vpack.c.b16 %v2028, %v2024
  %v2945 = vpack.c.b16 %v2029, %v2025
  %v2946 = vpack.c.b16 %v2030, %v2026
  %v2947 = vpack.c.b16 %v2035, %v2031
  %v2948 = vpack.c.b16 %v2036, %v2032
  %v2949 = vpack.c.b16 %v2037, %v2033
  %v2950 = vpack.c.b16 %v2038, %v2034
  %v2951 = vpack.c.b16 %v2043, %v2039
  %v2952 = vpack.c.b16 %v2044, %v2040
  %v2953 = vpack.c.b16 %v2045, %v2041
  %v2954 = vpack.c.b16 %v2046, %v2042
  %v2955 = vpack.c.b16 %v2051, %v2047
  %v2956 = vpack.c.b16 %v2052, %v2048
  %v2957 = vpack.c.b16 %v2053, %v2049
  %v2958 = vpack.c.b16 %v2054, %v2050
  %v2959 = vpack.c.b16 %v2059, %v2055
  %v2960 = vpack.c.b16 %v2060, %v2056
  %v2961 = vpack.c.b16 %v2061, %v2057
  %v2962 = vpack.c.b16 %v2062, %v2058
  %v2963 = vpack.c.b16 %v2067, %v2063
  %v2964 = vpack.c.b16 %v2068, %v2064
  %v2965 = vpack.c.b16 %v2069, %v2065
  %v2966 = vpack.c.b16 %v2070, %v2066
  %v2967 = vpack.c.b16 %v2075, %v2071
  %v2968 = vpack.c.b16 %v2076, %v2072
  %v2969 = vpack.c.b16 %v2077, %v2073
  %v2970 = vpack.c.b16 %v2078, %v2074
  %v2971 = vpack.c.b16 %v2083, %v2079
  %v2972 = vpack.c.b16 %v2084, %v2080
  %v2973 = vpack.c.b16 %v2085, %v2081
  %v2974 = vpack.c.b16 %v2086, %v2082
  %v2975 = vpack.c.b16 %v2091, %v2087
  %v2976 = vpack.c.b16 %v2092, %v2088
  %v2977 = vpack.c.b16 %v2093, %v2089
  %v2978 = vpack.c.b16 %v2094, %v2090
  %v2979 = vpack.c.b16 %v2099, %v2095
  %v2980 = vpack.c.b16 %v2100, %v2096
  %v2981 = vpack.c.b16 %v2101, %v2097
  %v2982 = vpack.c.b16 %v2102, %v2098
  %v2983 = vpack.c.b16 %v2107, %v2103
  %v2984 = vpack.c.b16 %v2108, %v2104
  %v2985 = vpack.c.b16 %v2109, %v2105
  %v2986 = vpack.c.b16 %v2110, %v2106
  %v2987 = vpack.c.b16 %v2115, %v2111
  %v2988 = vpack.c.b16 %v2116, %v2112
  %v2989 = vpack.c.b16 %v2117, %v2113
  %v2990 = vpack.c.b16 %v2118, %v2114
  %v2991 = vpack.c.b16 %v2123, %v2119
  %v2992 = vpack.c.b16 %v2124, %v2120
  %v2993 = vpack.c.b16 %v2125, %v2121
  %v2994 = vpack.c.b16 %v2126, %v2122
  %v2995 = vpack.c.b16 %v2131, %v2127
  %v2996 = vpack.c.b16 %v2132, %v2128
  %v2997 = vpack.c.b16 %v2133, %v2129
  %v2998 = vpack.c.b16 %v2134, %v2130
  %v2999 = vpack.c.b16 %v2139, %v2135
  %v3000 = vpack.c.b16 %v2140, %v2136
  %v3001 = vpack.c.b16 %v2141, %v2137
  %v3002 = vpack.c.b16 %v2142, %v2138
  %v3003 = vpack.c.b16 %v2147, %v2143
  %v3004 = vpack.c.b16 %v2148, %v2144
  %v3005 = vpack.c.b16 %v2149, %v2145
  %v3006 = vpack.c.b16 %v2150, %v2146
  %v3007 = vpack.c.b16 %v2155, %v2151
  %v3008 = vpack.c.b16 %v2156, %v2152
  %v3009 = vpack.c.b16 %v2157, %v2153
  %v3010 = vpack.c.b16 %v2158, %v2154
  %v3011 = vpack.c.b16 %v2163, %v2159
  %v3012 = vpack.c.b16 %v2164, %v2160
  %v3013 = vpack.c.b16 %v2165, %v2161
  %v3014 = vpack.c.b16 %v2166, %v2162
  %v3015 = vpack.c.b16 %v2171, %v2167
  %v3016 = vpack.c.b16 %v2172, %v2168
  %v3017 = vpack.c.b16 %v2173, %v2169
  %v3018 = vpack.c.b16 %v2174, %v2170
  %v3019 = vpack.c.b16 %v2179, %v2175
  %v3020 = vpack.c.b16 %v2180, %v2176
  %v3021 = vpack.c.b16 %v2181, %v2177
  %v3022 = vpack.c.b16 %v2182, %v2178
  %v3023 = vpack.c.b16 %v2187, %v2183
  %v3024 = vpack.c.b16 %v2188, %v2184
  %v3025 = vpack.c.b16 %v2189, %v2185
  %v3026 = vpack.c.b16 %v2190, %v2186
  %v3027 = vpack.c.b16 %v2195, %v2191
  %v3028 = vpack.c.b16 %v2196, %v2192
  %v3029 = vpack.c.b16 %v2197, %v2193
  %v3030 = vpack.c.b16 %v2198, %v2194
  %v3031 = vpack.c.b16 %v2203, %v2199
  %v3032 = vpack.c.b16 %v2204, %v2200
  %v3033 = vpack.c.b16 %v2205, %v2201
  %v3034 = vpack.c.b16 %v2206, %v2202
  %v3035 = vpack.c.b16 %v2211, %v2207
  %v3036 = vpack.c.b16 %v2212, %v2208
  %v3037 = vpack.c.b16 %v2213, %v2209
  %v3038 = vpack.c.b16 %v2214, %v2210
  %v3039 = vpack.c.b16 %v2219, %v2215
  %v3040 = vpack.c.b16 %v2220, %v2216
  %v3041 = vpack.c.b16 %v2221, %v2217
  %v3042 = vpack.c.b16 %v2222, %v2218
  %v3043 = vpack.c.b16 %v2227, %v2223
  %v3044 = vpack.c.b16 %v2228, %v2224
  %v3045 = vpack.c.b16 %v2229, %v2225
  %v3046 = vpack.c.b16 %v2230, %v2226
  %v3047 = vpack.c.b16 %v2235, %v2231
  %v3048 = vpack.c.b16 %v2236, %v2232
  %v3049 = vpack.c.b16 %v2237, %v2233
  %v3050 = vpack.c.b16 %v2238, %v2234
  %v3051 = vpack.c.b16 %v2243, %v2239
  %v3052 = vpack.c.b16 %v2244, %v2240
  %v3053 = vpack.c.b16 %v2245, %v2241
  %v3054 = vpack.c.b16 %v2246, %v2242
  %v3055 = vpack.c.b16 %v2251, %v2247
  %v3056 = vpack.c.b16 %v2252, %v2248
  %v3057 = vpack.c.b16 %v2253, %v2249
  %v3058 = vpack.c.b16 %v2254, %v2250
  %v3059 = vpack.c.b16 %v2259, %v2255
  %v3060 = vpack.c.b16 %v2260, %v2256
  %v3061 = vpack.c.b16 %v2261, %v2257
  %v3062 = vpack.c.b16 %v2262, %v2258
  %v3063 = vpack.c.b16 %v2267, %v2263
  %v3064 = vpack.c.b16 %v2268, %v2264
  %v3065 = vpack.c.b16 %v2269, %v2265
  %v3066 = vpack.c.b16 %v2270, %v2266
  %v3067 = vpack.c.b16 %v2275, %v2271
  %v3068 = vpack.c.b16 %v2276, %v2272
  %v3069 = vpack.c.b16 %v2277, %v2273
  %v3070 = vpack.c.b16 %v2278, %v2274
  %v3071 = vpack.c.b16 %v2283, %v2279
  %v3072 = vpack.c.b16 %v2284, %v2280
  %v3073 = vpack.c.b16 %v2285, %v2281
  %v3074 = vpack.c.b16 %v2286, %v2282
  %v3075 = vpack.c.b16 %v2291, %v2287
  %v3076 = vpack.c.b16 %v2292, %v2288
  %v3077 = vpack.c.b16 %v2293, %v2289
  %v3078 = vpack.c.b16 %v2294, %v2290
  %v3079 = vpack.c.b16 %v2299, %v2295
  %v3080 = vpack.c.b16 %v2300, %v2296
  %v3081 = vpack.c.b16 %v2301, %v2297
  %v3082 = vpack.c.b16 %v2302, %v2298
  %v3083 = vpack.c.b16 %v2307, %v2303
  %v3084 = vpack.c.b16 %v2308, %v2304
  %v3085 = vpack.c.b16 %v2309, %v2305
  %v3086 = vpack.c.b16 %v2310, %v2306
  %v3087 = vpack.c.b16 %v2315, %v2311
  %v3088 = vpack.c.b16 %v2316, %v2312
  %v3089 = vpack.c.b16 %v2317, %v2313
  %v3090 = vpack.c.b16 %v2318, %v2314
  %v3091 = vpack.c.b16 %v2323, %v2319
  %v3092 = vpack.c.b16 %v2324, %v2320
  %v3093 = vpack.c.b16 %v2325, %v2321
  %v3094 = vpack.c.b16 %v2326, %v2322
  %v3095 = vpack.c.b16 %v2331, %v2327
  %v3096 = vpack.c.b16 %v2332, %v2328
  %v3097 = vpack.c.b16 %v2333, %v2329
  %v3098 = vpack.c.b16 %v2334, %v2330
  %v3099 = vpack.c.b16 %v2339, %v2335
  %v3100 = vpack.c.b16 %v2340, %v2336
  %v3101 = vpack.c.b16 %v2341, %v2337
  %v3102 = vpack.c.b16 %v2342, %v2338
  %v3103 = vpack.c.b16 %v2347, %v2343
  %v3104 = vpack.c.b16 %v2348, %v2344
  %v3105 = vpack.c.b16 %v2349, %v2345
  %v3106 = vpack.c.b16 %v2350, %v2346
  %v3107 = vpack.c.b16 %v2355, %v2351
  %v3108 = vpack.c.b16 %v2356, %v2352
  %v3109 = vpack.c.b16 %v2357, %v2353
  %v3110 = vpack.c.b16 %v2358, %v2354
  %v3111 = vpack.c.b16 %v2363, %v2359
  %v3112 = vpack.c.b16 %v2364, %v2360
  %v3113 = vpack.c.b16 %v2365, %v2361
  %v3114 = vpack.c.b16 %v2366, %v2362
  %v3115 = vpack.c.b16 %v2371, %v2367
  %v3116 = vpack.c.b16 %v2372, %v2368
  %v3117 = vpack.c.b16 %v2373, %v2369
  %v3118 = vpack.c.b16 %v2374, %v2370
  %v3119 = vpack.c.b16 %v2379, %v2375
  %v3120 = vpack.c.b16 %v2380, %v2376
  %v3121 = vpack.c.b16 %v2381, %v2377
  %v3122 = vpack.c.b16 %v2382, %v2378
  %v3123 = vpack.c.b16 %v2387, %v2383
  %v3124 = vpack.c.b16 %v2388, %v2384
  %v3125 = vpack.c.b16 %v2389, %v2385
  %v3126 = vpack.c.b16 %v2390, %v2386
  %v3127 = vpack.c.b16 %v2395, %v2391
  %v3128 = vpack.c.b16 %v2396, %v2392
  %v3129 = vpack.c.b16 %v2397, %v2393
  %v3130 = vpack.c.b16 %v2398, %v2394
  %v3131 = vpack.c.b16 %v2403, %v2399
  %v3132 = vpack.c.b16 %v2404, %v2400
  %v3133 = vpack.c.b16 %v2405, %v2401
  %v3134 = vpack.c.b16 %v2406, %v2402
  %v3135 = vpack.c.b16 %v2411, %v2407
  %v3136 = vpack.c.b16 %v2412, %v2408
  %v3137 = vpack.c.b16 %v2413, %v2409
  %v3138 = vpack.c.b16 %v2414, %v2410
  %v3139 = vpack.c.b16 %v2419, %v2415
  %v3140 = vpack.c.b16 %v2420, %v2416
  %v3141 = vpack.c.b16 %v2421, %v2417
  %v3142 = vpack.c.b16 %v2422, %v2418
  %v3143 = vpack.c.b16 %v2427, %v2423
  %v3144 = vpack.c.b16 %v2428, %v2424
  %v3145 = vpack.c.b16 %v2429, %v2425
  %v3146 = vpack.c.b16 %v2430, %v2426
  %v3147 = vpack.c.b16 %v2435, %v2431
  %v3148 = vpack.c.b16 %v2436, %v2432
  %v3149 = vpack.c.b16 %v2437, %v2433
  %v3150 = vpack.c.b16 %v2438, %v2434
  %v3151 = vpack.c.b16 %v2443, %v2439
  %v3152 = vpack.c.b16 %v2444, %v2440
  %v3153 = vpack.c.b16 %v2445, %v2441
  %v3154 = vpack.c.b16 %v2446, %v2442
  %v3155 = vpack.c.b16 %v2451, %v2447
  %v3156 = vpack.c.b16 %v2452, %v2448
  %v3157 = vpack.c.b16 %v2453, %v2449
  %v3158 = vpack.c.b16 %v2454, %v2450
  %v3159 = vpack.c.b16 %v2459, %v2455
  %v3160 = vpack.c.b16 %v2460, %v2456
  %v3161 = vpack.c.b16 %v2461, %v2457
  %v3162 = vpack.c.b16 %v2462, %v2458
  %v3163 = vpack.c.b16 %v2467, %v2463
  %v3164 = vpack.c.b16 %v2468, %v2464
  %v3165 = vpack.c.b16 %v2469, %v2465
  %v3166 = vpack.c.b16 %v2470, %v2466
  %v3167 = vpack.c.b16 %v2475, %v2471
  %v3168 = vpack.c.b16 %v2476, %v2472
  %v3169 = vpack.c.b16 %v2477, %v2473
  %v3170 = vpack.c.b16 %v2478, %v2474
  %v3171 = vpack.c.b16 %v2483, %v2479
  %v3172 = vpack.c.b16 %v2484, %v2480
  %v3173 = vpack.c.b16 %v2485, %v2481
  %v3174 = vpack.c.b16 %v2486, %v2482
  %v3175 = vpack.c.b16 %v2491, %v2487
  %v3176 = vpack.c.b16 %v2492, %v2488
  %v3177 = vpack.c.b16 %v2493, %v2489
  %v3178 = vpack.c.b16 %v2494, %v2490
  %v3179 = vpack.c.b16 %v2499, %v2495
  %v3180 = vpack.c.b16 %v2500, %v2496
  %v3181 = vpack.c.b16 %v2501, %v2497
  %v3182 = vpack.c.b16 %v2502, %v2498
  %v3183 = vpack.c.b16 %v2507, %v2503
  %v3184 = vpack.c.b16 %v2508, %v2504
  %v3185 = vpack.c.b16 %v2509, %v2505
  %v3186 = vpack.c.b16 %v2510, %v2506
  %v3187 = vpack.c.b16 %v2515, %v2511
  %v3188 = vpack.c.b16 %v2516, %v2512
  %v3189 = vpack.c.b16 %v2517, %v2513
  %v3190 = vpack.c.b16 %v2518, %v2514
  %v3191 = vpack.c.b16 %v2523, %v2519
  %v3192 = vpack.c.b16 %v2524, %v2520
  %v3193 = vpack.c.b16 %v2525, %v2521
  %v3194 = vpack.c.b16 %v2526, %v2522
  %v3195 = vpack.c.b16 %v2531, %v2527
  %v3196 = vpack.c.b16 %v2532, %v2528
  %v3197 = vpack.c.b16 %v2533, %v2529
  %v3198 = vpack.c.b16 %v2534, %v2530
  %v3199 = vpack.c.b16 %v2539, %v2535
  %v3200 = vpack.c.b16 %v2540, %v2536
  %v3201 = vpack.c.b16 %v2541, %v2537
  %v3202 = vpack.c.b16 %v2542, %v2538
  %v3203 = vpack.c.b16 %v2547, %v2543
  %v3204 = vpack.c.b16 %v2548, %v2544
  %v3205 = vpack.c.b16 %v2549, %v2545
  %v3206 = vpack.c.b16 %v2550, %v2546
  %v3207 = vpack.c.b16 %v2555, %v2551
  %v3208 = vpack.c.b16 %v2556, %v2552
  %v3209 = vpack.c.b16 %v2557, %v2553
  %v3210 = vpack.c.b16 %v2558, %v2554
  %v3211 = vpack.c.b16 %v2563, %v2559
  %v3212 = vpack.c.b16 %v2564, %v2560
  %v3213 = vpack.c.b16 %v2565, %v2561
  %v3214 = vpack.c.b16 %v2566, %v2562
  %v3215 = vpack.c.b16 %v2571, %v2567
  %v3216 = vpack.c.b16 %v2572, %v2568
  %v3217 = vpack.c.b16 %v2573, %v2569
  %v3218 = vpack.c.b16 %v2574, %v2570
  %v3219 = vpack.c.b16 %v2579, %v2575
  %v3220 = vpack.c.b16 %v2580, %v2576
  %v3221 = vpack.c.b16 %v2581, %v2577
  %v3222 = vpack.c.b16 %v2582, %v2578
  %v3223 = vpack.c.b16 %v2587, %v2583
  %v3224 = vpack.c.b16 %v2588, %v2584
  %v3225 = vpack.c.b16 %v2589, %v2585
  %v3226 = vpack.c.b16 %v2590, %v2586
  %v3227 = vpack.c.b16 %v2595, %v2591
  %v3228 = vpack.c.b16 %v2596, %v2592
  %v3229 = vpack.c.b16 %v2597, %v2593
  %v3230 = vpack.c.b16 %v2598, %v2594
  %v3231 = vpack.c.b16 %v2603, %v2599
  %v3232 = vpack.c.b16 %v2604, %v2600
  %v3233 = vpack.c.b16 %v2605, %v2601
  %v3234 = vpack.c.b16 %v2606, %v2602
  %v3235 = vpack.c.b16 %v2611, %v2607
  %v3236 = vpack.c.b16 %v2612, %v2608
  %v3237 = vpack.c.b16 %v2613, %v2609
  %v3238 = vpack.c.b16 %v2614, %v2610
  %v3239 = vpack.c.b16 %v2619, %v2615
  %v3240 = vpack.c.b16 %v2620, %v2616
  %v3241 = vpack.c.b16 %v2621, %v2617
  %v3242 = vpack.c.b16 %v2622, %v2618
  %v3243 = vpack.c.b16 %v2627, %v2623
  %v3244 = vpack.c.b16 %v2628, %v2624
  %v3245 = vpack.c.b16 %v2629, %v2625
  %v3246 = vpack.c.b16 %v2630, %v2626
  %v3247 = vpack.c.b16 %v2635, %v2631
  %v3248 = vpack.c.b16 %v2636, %v2632
  %v3249 = vpack.c.b16 %v2637, %v2633
  %v3250 = vpack.c.b16 %v2638, %v2634
  %v3251 = vpack.c.b16 %v2643, %v2639
  %v3252 = vpack.c.b16 %v2644, %v2640
  %v3253 = vpack.c.b16 %v2645, %v2641
  %v3254 = vpack.c.b16 %v2646, %v2642
  %v3255 = vpack.c.b16 %v2651, %v2647
  %v3256 = vpack.c.b16 %v2652, %v2648
  %v3257 = vpack.c.b16 %v2653, %v2649
  %v3258 = vpack.c.b16 %v2654, %v2650
  %v3259 = vpack.c.b16 %v2659, %v2655
  %v3260 = vpack.c.b16 %v2660, %v2656
  %v3261 = vpack.c.b16 %v2661, %v2657
  %v3262 = vpack.c.b16 %v2662, %v2658
  %v3263 = vpack.c.b16 %v2667, %v2663
  %v3264 = vpack.c.b16 %v2668, %v2664
  %v3265 = vpack.c.b16 %v2669, %v2665
  %v3266 = vpack.c.b16 %v2670, %v2666
  %v3267 = vpack.c.b16 %v2675, %v2671
  %v3268 = vpack.c.b16 %v2676, %v2672
  %v3269 = vpack.c.b16 %v2677, %v2673
  %v3270 = vpack.c.b16 %v2678, %v2674
  %v3271 = vpack.c.b16 %v2683, %v2679
  %v3272 = vpack.c.b16 %v2684, %v2680
  %v3273 = vpack.c.b16 %v2685, %v2681
  %v3274 = vpack.c.b16 %v2686, %v2682
  %v3275 = vpack.c.b16 %v2691, %v2687
  %v3276 = vpack.c.b16 %v2692, %v2688
  %v3277 = vpack.c.b16 %v2693, %v2689
  %v3278 = vpack.c.b16 %v2694, %v2690
  %v3279 = vpack.c.b16 %v2699, %v2695
  %v3280 = vpack.c.b16 %v2700, %v2696
  %v3281 = vpack.c.b16 %v2701, %v2697
  %v3282 = vpack.c.b16 %v2702, %v2698
  %v3283 = vpack.c.b16 %v2707, %v2703
  %v3284 = vpack.c.b16 %v2708, %v2704
  %v3285 = vpack.c.b16 %v2709, %v2705
  %v3286 = vpack.c.b16 %v2710, %v2706
  %3863 = vmatprep.subr.bf16.mxu0 %v2740
  %3864 = vmatpush1.bf16.msra.mxu0 %v2739
  %3865 = vmatprep.subr.bf16.mxu0 %v2736
  %3866 = vmatpush1.bf16.msra.mxu0 %v2735
  %3867 = vmatprep.subr.bf16.mxu0 %v2732
  %3868 = vmatpush1.bf16.msra.mxu0 %v2731
  %3869 = vmatprep.subr.bf16.mxu0 %v2728
  %3870 = vmatpush1.bf16.msra.mxu0 %v2727
  %3871 = vmatprep.subr.bf16.mxu0 %v2724
  %3872 = vmatpush1.bf16.msra.mxu0 %v2723
  %3873 = vmatprep.subr.bf16.mxu0 %v2720
  %3874 = vmatpush1.bf16.msra.mxu0 %v2719
  %3875 = vmatprep.subr.bf16.mxu0 %v2716
  %3876 = vmatpush1.bf16.msra.mxu0 %v2715
  %3877 = vmatprep.subr.bf16.mxu0 %v2712
  %3878 = vmatpush1.bf16.msra.mxu0 %v2711
  %3879 = vmatprep.subr.bf16.mxu0 %v2772
  %3880 = vmatpush2.bf16.msra.mxu0 %v2771
  %3881 = vmatprep.subr.bf16.mxu0 %v2768
  %3882 = vmatpush2.bf16.msra.mxu0 %v2767
  %3883 = vmatprep.subr.bf16.mxu0 %v2764
  %3884 = vmatpush2.bf16.msra.mxu0 %v2763
  %3885 = vmatprep.subr.bf16.mxu0 %v2760
  %3886 = vmatpush2.bf16.msra.mxu0 %v2759
  %3887 = vmatprep.subr.bf16.mxu0 %v2756
  %3888 = vmatpush2.bf16.msra.mxu0 %v2755
  %3889 = vmatprep.subr.bf16.mxu0 %v2752
  %3890 = vmatpush2.bf16.msra.mxu0 %v2751
  %3891 = vmatprep.subr.bf16.mxu0 %v2748
  %3892 = vmatpush2.bf16.msra.mxu0 %v2747
  %3893 = vmatprep.subr.bf16.mxu0 %v2744
  %3894 = vmatpush2.bf16.msra.mxu0 %v2743
  %3895 = vmatprep.mubr.bf16.mxu0 %v840
  %3896 = vmatmul.mubr.bf16.gmra.mxu0 %v839
  %v3897 = vpop.f32.mrf.mxu0
  %v3898 = vadd.f32 0.0, %v3897
  %v3899 = vpop.f32.mrf.mxu0
  %v3900 = vadd.f32 0.0, %v3899
  %v3901 = vpop.f32.mrf.mxu0
  %v3902 = vadd.f32 0.0, %v3901
  %v3903 = vpop.f32.mrf.mxu0
  %v3904 = vadd.f32 0.0, %v3903
  %3905 = vmatprep.mubr.bf16.mxu0 %v858
  %3906 = vmatmul.mubr.bf16.gmra.mxu0 %v857
  %v3907 = vpop.f32.mrf.mxu0
  %v3908 = vadd.f32 0.0, %v3907
  %v3909 = vpop.f32.mrf.mxu0
  %v3910 = vadd.f32 0.0, %v3909
  %v3911 = vpop.f32.mrf.mxu0
  %v3912 = vadd.f32 0.0, %v3911
  %v3913 = vpop.f32.mrf.mxu0
  %v3914 = vadd.f32 0.0, %v3913
  %3915 = vmatprep.mubr.bf16.mxu0 %v876
  %3916 = vmatmul.mubr.bf16.gmra.mxu0 %v875
  %v3917 = vpop.f32.mrf.mxu0
  %v3918 = vadd.f32 0.0, %v3917
  %v3919 = vpop.f32.mrf.mxu0
  %v3920 = vadd.f32 0.0, %v3919
  %v3921 = vpop.f32.mrf.mxu0
  %v3922 = vadd.f32 0.0, %v3921
  %v3923 = vpop.f32.mrf.mxu0
  %v3924 = vadd.f32 0.0, %v3923
  %3925 = vmatprep.mubr.bf16.mxu0 %v894
  %3926 = vmatmul.mubr.bf16.gmra.mxu0 %v893
  %v3927 = vpop.f32.mrf.mxu0
  %v3928 = vadd.f32 0.0, %v3927
  %v3929 = vpop.f32.mrf.mxu0
  %v3930 = vadd.f32 0.0, %v3929
  %v3931 = vpop.f32.mrf.mxu0
  %v3932 = vpop.f32.mrf.mxu0
  %3933 = vdwg.mxu0
  %3934 = vmatprep.subr.bf16.mxu0 %v2804
  %3935 = vmatpush1.bf16.msra.mxu0 %v2803
  %3936 = vmatprep.subr.bf16.mxu0 %v2800
  %3937 = vmatpush1.bf16.msra.mxu0 %v2799
  %3938 = vmatprep.subr.bf16.mxu0 %v2796
  %3939 = vmatpush1.bf16.msra.mxu0 %v2795
  %3940 = vmatprep.subr.bf16.mxu0 %v2792
  %3941 = vmatpush1.bf16.msra.mxu0 %v2791
  %3942 = vmatprep.subr.bf16.mxu0 %v2788
  %3943 = vmatpush1.bf16.msra.mxu0 %v2787
  %3944 = vmatprep.subr.bf16.mxu0 %v2784
  %3945 = vmatpush1.bf16.msra.mxu0 %v2783
  %3946 = vmatprep.subr.bf16.mxu0 %v2780
  %3947 = vmatpush1.bf16.msra.mxu0 %v2779
  %3948 = vmatprep.subr.bf16.mxu0 %v2776
  %3949 = vmatpush1.bf16.msra.mxu0 %v2775
  %3950 = vmatprep.subr.bf16.mxu0 %v2836
  %3951 = vmatpush2.bf16.msra.mxu0 %v2835
  %3952 = vmatprep.subr.bf16.mxu0 %v2832
  %3953 = vmatpush2.bf16.msra.mxu0 %v2831
  %3954 = vmatprep.subr.bf16.mxu0 %v2828
  %3955 = vmatpush2.bf16.msra.mxu0 %v2827
  %3956 = vmatprep.subr.bf16.mxu0 %v2824
  %3957 = vmatpush2.bf16.msra.mxu0 %v2823
  %3958 = vmatprep.subr.bf16.mxu0 %v2820
  %3959 = vmatpush2.bf16.msra.mxu0 %v2819
  %3960 = vmatprep.subr.bf16.mxu0 %v2816
  %3961 = vmatpush2.bf16.msra.mxu0 %v2815
  %3962 = vmatprep.subr.bf16.mxu0 %v2812
  %3963 = vmatpush2.bf16.msra.mxu0 %v2811
  %3964 = vmatprep.subr.bf16.mxu0 %v2808
  %3965 = vmatpush2.bf16.msra.mxu0 %v2807
  %3966 = vmatprep.mubr.bf16.mxu0 %v842
  %3967 = vmatmul.mubr.bf16.gmra.mxu0 %v841
  %v3968 = vpop.f32.mrf.mxu0
  %v3969 = vadd.f32 %v3898, %v3968
  %v3970 = vpop.f32.mrf.mxu0
  %v3971 = vadd.f32 %v3900, %v3970
  %v3972 = vpop.f32.mrf.mxu0
  %v3973 = vadd.f32 %v3902, %v3972
  %v3974 = vpop.f32.mrf.mxu0
  %v3975 = vadd.f32 %v3904, %v3974
  %3976 = vmatprep.mubr.bf16.mxu0 %v860
  %3977 = vmatmul.mubr.bf16.gmra.mxu0 %v859
  %v3978 = vpop.f32.mrf.mxu0
  %v3979 = vadd.f32 %v3908, %v3978
  %v3980 = vpop.f32.mrf.mxu0
  %v3981 = vadd.f32 %v3910, %v3980
  %v3982 = vpop.f32.mrf.mxu0
  %v3983 = vadd.f32 %v3912, %v3982
  %v3984 = vpop.f32.mrf.mxu0
  %v3985 = vadd.f32 %v3914, %v3984
  %3986 = vmatprep.mubr.bf16.mxu0 %v878
  %3987 = vmatmul.mubr.bf16.gmra.mxu0 %v877
  %v3988 = vpop.f32.mrf.mxu0
  %v3989 = vadd.f32 %v3918, %v3988
  %v3990 = vpop.f32.mrf.mxu0
  %v3991 = vadd.f32 %v3920, %v3990
  %v3992 = vpop.f32.mrf.mxu0
  %v3993 = vadd.f32 %v3922, %v3992
  %v3994 = vpop.f32.mrf.mxu0
  %v3995 = vadd.f32 %v3924, %v3994
  %3996 = vmatprep.mubr.bf16.mxu0 %v896
  %3997 = vmatmul.mubr.bf16.gmra.mxu0 %v895
  %v3998 = vpop.f32.mrf.mxu0
  %v3999 = vadd.f32 %v3928, %v3998
  %v4000 = vpop.f32.mrf.mxu0
  %v4001 = vadd.f32 %v3930, %v4000
  %v4002 = vpop.f32.mrf.mxu0
  %v4003 = vpop.f32.mrf.mxu0
  %4004 = vdwg.mxu0
  %4005 = vmatprep.subr.bf16.mxu0 %v2868
  %4006 = vmatpush1.bf16.msra.mxu0 %v2867
  %4007 = vmatprep.subr.bf16.mxu0 %v2864
  %4008 = vmatpush1.bf16.msra.mxu0 %v2863
  %4009 = vmatprep.subr.bf16.mxu0 %v2860
  %4010 = vmatpush1.bf16.msra.mxu0 %v2859
  %4011 = vmatprep.subr.bf16.mxu0 %v2856
  %4012 = vmatpush1.bf16.msra.mxu0 %v2855
  %4013 = vmatprep.subr.bf16.mxu0 %v2852
  %4014 = vmatpush1.bf16.msra.mxu0 %v2851
  %4015 = vmatprep.subr.bf16.mxu0 %v2848
  %4016 = vmatpush1.bf16.msra.mxu0 %v2847
  %4017 = vmatprep.subr.bf16.mxu0 %v2844
  %4018 = vmatpush1.bf16.msra.mxu0 %v2843
  %4019 = vmatprep.subr.bf16.mxu0 %v2840
  %4020 = vmatpush1.bf16.msra.mxu0 %v2839
  %4021 = vmatprep.subr.bf16.mxu0 %v2900
  %4022 = vmatpush2.bf16.msra.mxu0 %v2899
  %4023 = vmatprep.subr.bf16.mxu0 %v2896
  %4024 = vmatpush2.bf16.msra.mxu0 %v2895
  %4025 = vmatprep.subr.bf16.mxu0 %v2892
  %4026 = vmatpush2.bf16.msra.mxu0 %v2891
  %4027 = vmatprep.subr.bf16.mxu0 %v2888
  %4028 = vmatpush2.bf16.msra.mxu0 %v2887
  %4029 = vmatprep.subr.bf16.mxu0 %v2884
  %4030 = vmatpush2.bf16.msra.mxu0 %v2883
  %4031 = vmatprep.subr.bf16.mxu0 %v2880
  %4032 = vmatpush2.bf16.msra.mxu0 %v2879
  %4033 = vmatprep.subr.bf16.mxu0 %v2876
  %4034 = vmatpush2.bf16.msra.mxu0 %v2875
  %4035 = vmatprep.subr.bf16.mxu0 %v2872
  %4036 = vmatpush2.bf16.msra.mxu0 %v2871
  %4037 = vmatprep.mubr.bf16.mxu0 %v844
  %4038 = vmatmul.mubr.bf16.gmra.mxu0 %v843
  %v4039 = vpop.f32.mrf.mxu0
  %v4040 = vadd.f32 %v3969, %v4039
  %v4041 = vpop.f32.mrf.mxu0
  %v4042 = vadd.f32 %v3971, %v4041
  %v4043 = vpop.f32.mrf.mxu0
  %v4044 = vadd.f32 %v3973, %v4043
  %v4045 = vpop.f32.mrf.mxu0
  %v4046 = vadd.f32 %v3975, %v4045
  %4047 = vmatprep.mubr.bf16.mxu0 %v862
  %4048 = vmatmul.mubr.bf16.gmra.mxu0 %v861
  %v4049 = vpop.f32.mrf.mxu0
  %v4050 = vadd.f32 %v3979, %v4049
  %v4051 = vpop.f32.mrf.mxu0
  %v4052 = vadd.f32 %v3981, %v4051
  %v4053 = vpop.f32.mrf.mxu0
  %v4054 = vadd.f32 %v3983, %v4053
  %v4055 = vpop.f32.mrf.mxu0
  %v4056 = vadd.f32 %v3985, %v4055
  %4057 = vmatprep.mubr.bf16.mxu0 %v880
  %4058 = vmatmul.mubr.bf16.gmra.mxu0 %v879
  %v4059 = vpop.f32.mrf.mxu0
  %v4060 = vadd.f32 %v3989, %v4059
  %v4061 = vpop.f32.mrf.mxu0
  %v4062 = vadd.f32 %v3991, %v4061
  %v4063 = vpop.f32.mrf.mxu0
  %v4064 = vadd.f32 %v3993, %v4063
  %v4065 = vpop.f32.mrf.mxu0
  %v4066 = vadd.f32 %v3995, %v4065
  %4067 = vmatprep.mubr.bf16.mxu0 %v898
  %4068 = vmatmul.mubr.bf16.gmra.mxu0 %v897
  %v4069 = vpop.f32.mrf.mxu0
  %v4070 = vadd.f32 %v3999, %v4069
  %v4071 = vpop.f32.mrf.mxu0
  %v4072 = vadd.f32 %v4001, %v4071
  %v4073 = vpop.f32.mrf.mxu0
  %v4074 = vpop.f32.mrf.mxu0
  %4075 = vdwg.mxu0
  %4076 = vmatprep.subr.bf16.mxu0 %v2932
  %4077 = vmatpush1.bf16.msra.mxu0 %v2931
  %4078 = vmatprep.subr.bf16.mxu0 %v2928
  %4079 = vmatpush1.bf16.msra.mxu0 %v2927
  %4080 = vmatprep.subr.bf16.mxu0 %v2924
  %4081 = vmatpush1.bf16.msra.mxu0 %v2923
  %4082 = vmatprep.subr.bf16.mxu0 %v2920
  %4083 = vmatpush1.bf16.msra.mxu0 %v2919
  %4084 = vmatprep.subr.bf16.mxu0 %v2916
  %4085 = vmatpush1.bf16.msra.mxu0 %v2915
  %4086 = vmatprep.subr.bf16.mxu0 %v2912
  %4087 = vmatpush1.bf16.msra.mxu0 %v2911
  %4088 = vmatprep.subr.bf16.mxu0 %v2908
  %4089 = vmatpush1.bf16.msra.mxu0 %v2907
  %4090 = vmatprep.subr.bf16.mxu0 %v2904
  %4091 = vmatpush1.bf16.msra.mxu0 %v2903
  %4092 = vmatprep.subr.bf16.mxu0 %v2964
  %4093 = vmatpush2.bf16.msra.mxu0 %v2963
  %4094 = vmatprep.subr.bf16.mxu0 %v2960
  %4095 = vmatpush2.bf16.msra.mxu0 %v2959
  %4096 = vmatprep.subr.bf16.mxu0 %v2956
  %4097 = vmatpush2.bf16.msra.mxu0 %v2955
  %4098 = vmatprep.subr.bf16.mxu0 %v2952
  %4099 = vmatpush2.bf16.msra.mxu0 %v2951
  %4100 = vmatprep.subr.bf16.mxu0 %v2948
  %4101 = vmatpush2.bf16.msra.mxu0 %v2947
  %4102 = vmatprep.subr.bf16.mxu0 %v2944
  %4103 = vmatpush2.bf16.msra.mxu0 %v2943
  %4104 = vmatprep.subr.bf16.mxu0 %v2940
  %4105 = vmatpush2.bf16.msra.mxu0 %v2939
  %4106 = vmatprep.subr.bf16.mxu0 %v2936
  %4107 = vmatpush2.bf16.msra.mxu0 %v2935
  %4108 = vmatprep.mubr.bf16.mxu0 %v846
  %4109 = vmatmul.mubr.bf16.gmra.mxu0 %v845
  %v4110 = vpop.f32.mrf.mxu0
  %v4111 = vadd.f32 %v4040, %v4110
  %v4112 = vpop.f32.mrf.mxu0
  %v4113 = vadd.f32 %v4042, %v4112
  %v4114 = vpop.f32.mrf.mxu0
  %v4115 = vadd.f32 %v4044, %v4114
  %v4116 = vpop.f32.mrf.mxu0
  %v4117 = vadd.f32 %v4046, %v4116
  %4118 = vmatprep.mubr.bf16.mxu0 %v864
  %4119 = vmatmul.mubr.bf16.gmra.mxu0 %v863
  %v4120 = vpop.f32.mrf.mxu0
  %v4121 = vadd.f32 %v4050, %v4120
  %v4122 = vpop.f32.mrf.mxu0
  %v4123 = vadd.f32 %v4052, %v4122
  %v4124 = vpop.f32.mrf.mxu0
  %v4125 = vadd.f32 %v4054, %v4124
  %v4126 = vpop.f32.mrf.mxu0
  %v4127 = vadd.f32 %v4056, %v4126
  %4128 = vmatprep.mubr.bf16.mxu0 %v882
  %4129 = vmatmul.mubr.bf16.gmra.mxu0 %v881
  %v4130 = vpop.f32.mrf.mxu0
  %v4131 = vadd.f32 %v4060, %v4130
  %v4132 = vpop.f32.mrf.mxu0
  %v4133 = vadd.f32 %v4062, %v4132
  %v4134 = vpop.f32.mrf.mxu0
  %v4135 = vadd.f32 %v4064, %v4134
  %v4136 = vpop.f32.mrf.mxu0
  %v4137 = vadd.f32 %v4066, %v4136
  %4138 = vmatprep.mubr.bf16.mxu0 %v900
  %4139 = vmatmul.mubr.bf16.gmra.mxu0 %v899
  %v4140 = vpop.f32.mrf.mxu0
  %v4141 = vadd.f32 %v4070, %v4140
  %v4142 = vpop.f32.mrf.mxu0
  %v4143 = vadd.f32 %v4072, %v4142
  %v4144 = vpop.f32.mrf.mxu0
  %v4145 = vpop.f32.mrf.mxu0
  %4146 = vdwg.mxu0
  %4147 = vmatprep.subr.bf16.mxu0 %v2996
  %4148 = vmatpush1.bf16.msra.mxu0 %v2995
  %4149 = vmatprep.subr.bf16.mxu0 %v2992
  %4150 = vmatpush1.bf16.msra.mxu0 %v2991
  %4151 = vmatprep.subr.bf16.mxu0 %v2988
  %4152 = vmatpush1.bf16.msra.mxu0 %v2987
  %4153 = vmatprep.subr.bf16.mxu0 %v2984
  %4154 = vmatpush1.bf16.msra.mxu0 %v2983
  %4155 = vmatprep.subr.bf16.mxu0 %v2980
  %4156 = vmatpush1.bf16.msra.mxu0 %v2979
  %4157 = vmatprep.subr.bf16.mxu0 %v2976
  %4158 = vmatpush1.bf16.msra.mxu0 %v2975
  %4159 = vmatprep.subr.bf16.mxu0 %v2972
  %4160 = vmatpush1.bf16.msra.mxu0 %v2971
  %4161 = vmatprep.subr.bf16.mxu0 %v2968
  %4162 = vmatpush1.bf16.msra.mxu0 %v2967
  %4163 = vmatprep.subr.bf16.mxu0 %v3028
  %4164 = vmatpush2.bf16.msra.mxu0 %v3027
  %4165 = vmatprep.subr.bf16.mxu0 %v3024
  %4166 = vmatpush2.bf16.msra.mxu0 %v3023
  %4167 = vmatprep.subr.bf16.mxu0 %v3020
  %4168 = vmatpush2.bf16.msra.mxu0 %v3019
  %4169 = vmatprep.subr.bf16.mxu0 %v3016
  %4170 = vmatpush2.bf16.msra.mxu0 %v3015
  %4171 = vmatprep.subr.bf16.mxu0 %v3012
  %4172 = vmatpush2.bf16.msra.mxu0 %v3011
  %4173 = vmatprep.subr.bf16.mxu0 %v3008
  %4174 = vmatpush2.bf16.msra.mxu0 %v3007
  %4175 = vmatprep.subr.bf16.mxu0 %v3004
  %4176 = vmatpush2.bf16.msra.mxu0 %v3003
  %4177 = vmatprep.subr.bf16.mxu0 %v3000
  %4178 = vmatpush2.bf16.msra.mxu0 %v2999
  %4179 = vmatprep.mubr.bf16.mxu0 %v848
  %4180 = vmatmul.mubr.bf16.gmra.mxu0 %v847
  %v4181 = vpop.f32.mrf.mxu0
  %v4182 = vadd.f32 %v4111, %v4181
  %v4183 = vpop.f32.mrf.mxu0
  %v4184 = vadd.f32 %v4113, %v4183
  %v4185 = vpop.f32.mrf.mxu0
  %v4186 = vadd.f32 %v4115, %v4185
  %v4187 = vpop.f32.mrf.mxu0
  %v4188 = vadd.f32 %v4117, %v4187
  %4189 = vmatprep.mubr.bf16.mxu0 %v866
  %4190 = vmatmul.mubr.bf16.gmra.mxu0 %v865
  %v4191 = vpop.f32.mrf.mxu0
  %v4192 = vadd.f32 %v4121, %v4191
  %v4193 = vpop.f32.mrf.mxu0
  %v4194 = vadd.f32 %v4123, %v4193
  %v4195 = vpop.f32.mrf.mxu0
  %v4196 = vadd.f32 %v4125, %v4195
  %v4197 = vpop.f32.mrf.mxu0
  %v4198 = vadd.f32 %v4127, %v4197
  %4199 = vmatprep.mubr.bf16.mxu0 %v884
  %4200 = vmatmul.mubr.bf16.gmra.mxu0 %v883
  %v4201 = vpop.f32.mrf.mxu0
  %v4202 = vadd.f32 %v4131, %v4201
  %v4203 = vpop.f32.mrf.mxu0
  %v4204 = vadd.f32 %v4133, %v4203
  %v4205 = vpop.f32.mrf.mxu0
  %v4206 = vadd.f32 %v4135, %v4205
  %v4207 = vpop.f32.mrf.mxu0
  %v4208 = vadd.f32 %v4137, %v4207
  %4209 = vmatprep.mubr.bf16.mxu0 %v902
  %4210 = vmatmul.mubr.bf16.gmra.mxu0 %v901
  %v4211 = vpop.f32.mrf.mxu0
  %v4212 = vadd.f32 %v4141, %v4211
  %v4213 = vpop.f32.mrf.mxu0
  %v4214 = vadd.f32 %v4143, %v4213
  %v4215 = vpop.f32.mrf.mxu0
  %v4216 = vpop.f32.mrf.mxu0
  %4217 = vdwg.mxu0
  %4218 = vmatprep.subr.bf16.mxu0 %v3060
  %4219 = vmatpush1.bf16.msra.mxu0 %v3059
  %4220 = vmatprep.subr.bf16.mxu0 %v3056
  %4221 = vmatpush1.bf16.msra.mxu0 %v3055
  %4222 = vmatprep.subr.bf16.mxu0 %v3052
  %4223 = vmatpush1.bf16.msra.mxu0 %v3051
  %4224 = vmatprep.subr.bf16.mxu0 %v3048
  %4225 = vmatpush1.bf16.msra.mxu0 %v3047
  %4226 = vmatprep.subr.bf16.mxu0 %v3044
  %4227 = vmatpush1.bf16.msra.mxu0 %v3043
  %4228 = vmatprep.subr.bf16.mxu0 %v3040
  %4229 = vmatpush1.bf16.msra.mxu0 %v3039
  %4230 = vmatprep.subr.bf16.mxu0 %v3036
  %4231 = vmatpush1.bf16.msra.mxu0 %v3035
  %4232 = vmatprep.subr.bf16.mxu0 %v3032
  %4233 = vmatpush1.bf16.msra.mxu0 %v3031
  %4234 = vmatprep.subr.bf16.mxu0 %v3092
  %4235 = vmatpush2.bf16.msra.mxu0 %v3091
  %4236 = vmatprep.subr.bf16.mxu0 %v3088
  %4237 = vmatpush2.bf16.msra.mxu0 %v3087
  %4238 = vmatprep.subr.bf16.mxu0 %v3084
  %4239 = vmatpush2.bf16.msra.mxu0 %v3083
  %4240 = vmatprep.subr.bf16.mxu0 %v3080
  %4241 = vmatpush2.bf16.msra.mxu0 %v3079
  %4242 = vmatprep.subr.bf16.mxu0 %v3076
  %4243 = vmatpush2.bf16.msra.mxu0 %v3075
  %4244 = vmatprep.subr.bf16.mxu0 %v3072
  %4245 = vmatpush2.bf16.msra.mxu0 %v3071
  %4246 = vmatprep.subr.bf16.mxu0 %v3068
  %4247 = vmatpush2.bf16.msra.mxu0 %v3067
  %4248 = vmatprep.subr.bf16.mxu0 %v3064
  %4249 = vmatpush2.bf16.msra.mxu0 %v3063
  %4250 = vmatprep.mubr.bf16.mxu0 %v850
  %4251 = vmatmul.mubr.bf16.gmra.mxu0 %v849
  %v4252 = vpop.f32.mrf.mxu0
  %v4253 = vadd.f32 %v4182, %v4252
  %v4254 = vpop.f32.mrf.mxu0
  %v4255 = vadd.f32 %v4184, %v4254
  %v4256 = vpop.f32.mrf.mxu0
  %v4257 = vadd.f32 %v4186, %v4256
  %v4258 = vpop.f32.mrf.mxu0
  %v4259 = vadd.f32 %v4188, %v4258
  %4260 = vmatprep.mubr.bf16.mxu0 %v868
  %4261 = vmatmul.mubr.bf16.gmra.mxu0 %v867
  %v4262 = vpop.f32.mrf.mxu0
  %v4263 = vadd.f32 %v4192, %v4262
  %v4264 = vpop.f32.mrf.mxu0
  %v4265 = vadd.f32 %v4194, %v4264
  %v4266 = vpop.f32.mrf.mxu0
  %v4267 = vadd.f32 %v4196, %v4266
  %v4268 = vpop.f32.mrf.mxu0
  %v4269 = vadd.f32 %v4198, %v4268
  %4270 = vmatprep.mubr.bf16.mxu0 %v886
  %4271 = vmatmul.mubr.bf16.gmra.mxu0 %v885
  %v4272 = vpop.f32.mrf.mxu0
  %v4273 = vadd.f32 %v4202, %v4272
  %v4274 = vpop.f32.mrf.mxu0
  %v4275 = vadd.f32 %v4204, %v4274
  %v4276 = vpop.f32.mrf.mxu0
  %v4277 = vadd.f32 %v4206, %v4276
  %v4278 = vpop.f32.mrf.mxu0
  %v4279 = vadd.f32 %v4208, %v4278
  %4280 = vmatprep.mubr.bf16.mxu0 %v904
  %4281 = vmatmul.mubr.bf16.gmra.mxu0 %v903
  %v4282 = vpop.f32.mrf.mxu0
  %v4283 = vadd.f32 %v4212, %v4282
  %v4284 = vpop.f32.mrf.mxu0
  %v4285 = vadd.f32 %v4214, %v4284
  %v4286 = vpop.f32.mrf.mxu0
  %v4287 = vpop.f32.mrf.mxu0
  %4288 = vdwg.mxu0
  %4289 = vmatprep.subr.bf16.mxu0 %v3124
  %4290 = vmatpush1.bf16.msra.mxu0 %v3123
  %4291 = vmatprep.subr.bf16.mxu0 %v3120
  %4292 = vmatpush1.bf16.msra.mxu0 %v3119
  %4293 = vmatprep.subr.bf16.mxu0 %v3116
  %4294 = vmatpush1.bf16.msra.mxu0 %v3115
  %4295 = vmatprep.subr.bf16.mxu0 %v3112
  %4296 = vmatpush1.bf16.msra.mxu0 %v3111
  %4297 = vmatprep.subr.bf16.mxu0 %v3108
  %4298 = vmatpush1.bf16.msra.mxu0 %v3107
  %4299 = vmatprep.subr.bf16.mxu0 %v3104
  %4300 = vmatpush1.bf16.msra.mxu0 %v3103
  %4301 = vmatprep.subr.bf16.mxu0 %v3100
  %4302 = vmatpush1.bf16.msra.mxu0 %v3099
  %4303 = vmatprep.subr.bf16.mxu0 %v3096
  %4304 = vmatpush1.bf16.msra.mxu0 %v3095
  %4305 = vmatprep.subr.bf16.mxu0 %v3156
  %4306 = vmatpush2.bf16.msra.mxu0 %v3155
  %4307 = vmatprep.subr.bf16.mxu0 %v3152
  %4308 = vmatpush2.bf16.msra.mxu0 %v3151
  %4309 = vmatprep.subr.bf16.mxu0 %v3148
  %4310 = vmatpush2.bf16.msra.mxu0 %v3147
  %4311 = vmatprep.subr.bf16.mxu0 %v3144
  %4312 = vmatpush2.bf16.msra.mxu0 %v3143
  %4313 = vmatprep.subr.bf16.mxu0 %v3140
  %4314 = vmatpush2.bf16.msra.mxu0 %v3139
  %4315 = vmatprep.subr.bf16.mxu0 %v3136
  %4316 = vmatpush2.bf16.msra.mxu0 %v3135
  %4317 = vmatprep.subr.bf16.mxu0 %v3132
  %4318 = vmatpush2.bf16.msra.mxu0 %v3131
  %4319 = vmatprep.subr.bf16.mxu0 %v3128
  %4320 = vmatpush2.bf16.msra.mxu0 %v3127
  %4321 = vmatprep.mubr.bf16.mxu0 %v852
  %4322 = vmatmul.mubr.bf16.gmra.mxu0 %v851
  %v4323 = vpop.f32.mrf.mxu0
  %v4324 = vadd.f32 %v4253, %v4323
  %v4325 = vpop.f32.mrf.mxu0
  %v4326 = vadd.f32 %v4255, %v4325
  %v4327 = vpop.f32.mrf.mxu0
  %v4328 = vadd.f32 %v4257, %v4327
  %v4329 = vpop.f32.mrf.mxu0
  %v4330 = vadd.f32 %v4259, %v4329
  %4331 = vmatprep.mubr.bf16.mxu0 %v870
  %4332 = vmatmul.mubr.bf16.gmra.mxu0 %v869
  %v4333 = vpop.f32.mrf.mxu0
  %v4334 = vadd.f32 %v4263, %v4333
  %v4335 = vpop.f32.mrf.mxu0
  %v4336 = vadd.f32 %v4265, %v4335
  %v4337 = vpop.f32.mrf.mxu0
  %v4338 = vadd.f32 %v4267, %v4337
  %v4339 = vpop.f32.mrf.mxu0
  %v4340 = vadd.f32 %v4269, %v4339
  %4341 = vmatprep.mubr.bf16.mxu0 %v888
  %4342 = vmatmul.mubr.bf16.gmra.mxu0 %v887
  %v4343 = vpop.f32.mrf.mxu0
  %v4344 = vadd.f32 %v4273, %v4343
  %v4345 = vpop.f32.mrf.mxu0
  %v4346 = vadd.f32 %v4275, %v4345
  %v4347 = vpop.f32.mrf.mxu0
  %v4348 = vadd.f32 %v4277, %v4347
  %v4349 = vpop.f32.mrf.mxu0
  %v4350 = vadd.f32 %v4279, %v4349
  %4351 = vmatprep.mubr.bf16.mxu0 %v906
  %4352 = vmatmul.mubr.bf16.gmra.mxu0 %v905
  %v4353 = vpop.f32.mrf.mxu0
  %v4354 = vadd.f32 %v4283, %v4353
  %v4355 = vpop.f32.mrf.mxu0
  %v4356 = vadd.f32 %v4285, %v4355
  %v4357 = vpop.f32.mrf.mxu0
  %v4358 = vpop.f32.mrf.mxu0
  %4359 = vdwg.mxu0
  %4360 = vmatprep.subr.bf16.mxu0 %v3188
  %4361 = vmatpush1.bf16.msra.mxu0 %v3187
  %4362 = vmatprep.subr.bf16.mxu0 %v3184
  %4363 = vmatpush1.bf16.msra.mxu0 %v3183
  %4364 = vmatprep.subr.bf16.mxu0 %v3180
  %4365 = vmatpush1.bf16.msra.mxu0 %v3179
  %4366 = vmatprep.subr.bf16.mxu0 %v3176
  %4367 = vmatpush1.bf16.msra.mxu0 %v3175
  %4368 = vmatprep.subr.bf16.mxu0 %v3172
  %4369 = vmatpush1.bf16.msra.mxu0 %v3171
  %4370 = vmatprep.subr.bf16.mxu0 %v3168
  %4371 = vmatpush1.bf16.msra.mxu0 %v3167
  %4372 = vmatprep.subr.bf16.mxu0 %v3164
  %4373 = vmatpush1.bf16.msra.mxu0 %v3163
  %4374 = vmatprep.subr.bf16.mxu0 %v3160
  %4375 = vmatpush1.bf16.msra.mxu0 %v3159
  %4376 = vmatprep.subr.bf16.mxu0 %v3220
  %4377 = vmatpush2.bf16.msra.mxu0 %v3219
  %4378 = vmatprep.subr.bf16.mxu0 %v3216
  %4379 = vmatpush2.bf16.msra.mxu0 %v3215
  %4380 = vmatprep.subr.bf16.mxu0 %v3212
  %4381 = vmatpush2.bf16.msra.mxu0 %v3211
  %4382 = vmatprep.subr.bf16.mxu0 %v3208
  %4383 = vmatpush2.bf16.msra.mxu0 %v3207
  %4384 = vmatprep.subr.bf16.mxu0 %v3204
  %4385 = vmatpush2.bf16.msra.mxu0 %v3203
  %4386 = vmatprep.subr.bf16.mxu0 %v3200
  %4387 = vmatpush2.bf16.msra.mxu0 %v3199
  %4388 = vmatprep.subr.bf16.mxu0 %v3196
  %4389 = vmatpush2.bf16.msra.mxu0 %v3195
  %4390 = vmatprep.subr.bf16.mxu0 %v3192
  %4391 = vmatpush2.bf16.msra.mxu0 %v3191
  %4392 = vmatprep.mubr.bf16.mxu0 %v854
  %4393 = vmatmul.mubr.bf16.gmra.mxu0 %v853
  %v4394 = vpop.f32.mrf.mxu0
  %v4395 = vadd.f32 %v4324, %v4394
  %v4396 = vpop.f32.mrf.mxu0
  %v4397 = vadd.f32 %v4326, %v4396
  %v4398 = vpop.f32.mrf.mxu0
  %v4399 = vadd.f32 %v4328, %v4398
  %v4400 = vpop.f32.mrf.mxu0
  %v4401 = vadd.f32 %v4330, %v4400
  %4402 = vmatprep.mubr.bf16.mxu0 %v872
  %4403 = vmatmul.mubr.bf16.gmra.mxu0 %v871
  %v4404 = vpop.f32.mrf.mxu0
  %v4405 = vadd.f32 %v4334, %v4404
  %v4406 = vpop.f32.mrf.mxu0
  %v4407 = vadd.f32 %v4336, %v4406
  %v4408 = vpop.f32.mrf.mxu0
  %v4409 = vadd.f32 %v4338, %v4408
  %v4410 = vpop.f32.mrf.mxu0
  %v4411 = vadd.f32 %v4340, %v4410
  %4412 = vmatprep.mubr.bf16.mxu0 %v890
  %4413 = vmatmul.mubr.bf16.gmra.mxu0 %v889
  %v4414 = vpop.f32.mrf.mxu0
  %v4415 = vadd.f32 %v4344, %v4414
  %v4416 = vpop.f32.mrf.mxu0
  %v4417 = vadd.f32 %v4346, %v4416
  %v4418 = vpop.f32.mrf.mxu0
  %v4419 = vadd.f32 %v4348, %v4418
  %v4420 = vpop.f32.mrf.mxu0
  %v4421 = vadd.f32 %v4350, %v4420
  %4422 = vmatprep.mubr.bf16.mxu0 %v908
  %4423 = vmatmul.mubr.bf16.gmra.mxu0 %v907
  %v4424 = vpop.f32.mrf.mxu0
  %v4425 = vadd.f32 %v4354, %v4424
  %v4426 = vpop.f32.mrf.mxu0
  %v4427 = vadd.f32 %v4356, %v4426
  %v4428 = vpop.f32.mrf.mxu0
  %v4429 = vpop.f32.mrf.mxu0
  %4430 = vdwg.mxu0
  %4431 = vmatprep.subr.bf16.mxu0 %v3252
  %4432 = vmatpush1.bf16.msra.mxu0 %v3251
  %4433 = vmatprep.subr.bf16.mxu0 %v3248
  %4434 = vmatpush1.bf16.msra.mxu0 %v3247
  %4435 = vmatprep.subr.bf16.mxu0 %v3244
  %4436 = vmatpush1.bf16.msra.mxu0 %v3243
  %4437 = vmatprep.subr.bf16.mxu0 %v3240
  %4438 = vmatpush1.bf16.msra.mxu0 %v3239
  %4439 = vmatprep.subr.bf16.mxu0 %v3236
  %4440 = vmatpush1.bf16.msra.mxu0 %v3235
  %4441 = vmatprep.subr.bf16.mxu0 %v3232
  %4442 = vmatpush1.bf16.msra.mxu0 %v3231
  %4443 = vmatprep.subr.bf16.mxu0 %v3228
  %4444 = vmatpush1.bf16.msra.mxu0 %v3227
  %4445 = vmatprep.subr.bf16.mxu0 %v3224
  %4446 = vmatpush1.bf16.msra.mxu0 %v3223
  %4447 = vmatprep.subr.bf16.mxu0 %v3284
  %4448 = vmatpush2.bf16.msra.mxu0 %v3283
  %4449 = vmatprep.subr.bf16.mxu0 %v3280
  %4450 = vmatpush2.bf16.msra.mxu0 %v3279
  %4451 = vmatprep.subr.bf16.mxu0 %v3276
  %4452 = vmatpush2.bf16.msra.mxu0 %v3275
  %4453 = vmatprep.subr.bf16.mxu0 %v3272
  %4454 = vmatpush2.bf16.msra.mxu0 %v3271
  %4455 = vmatprep.subr.bf16.mxu0 %v3268
  %4456 = vmatpush2.bf16.msra.mxu0 %v3267
  %4457 = vmatprep.subr.bf16.mxu0 %v3264
  %4458 = vmatpush2.bf16.msra.mxu0 %v3263
  %4459 = vmatprep.subr.bf16.mxu0 %v3260
  %4460 = vmatpush2.bf16.msra.mxu0 %v3259
  %4461 = vmatprep.subr.bf16.mxu0 %v3256
  %4462 = vmatpush2.bf16.msra.mxu0 %v3255
  %4463 = vmatprep.mubr.bf16.mxu0 %v856
  %4464 = vmatmul.mubr.bf16.gmra.mxu0 %v855
  %v4465 = vpop.f32.mrf.mxu0
  %v4466 = vadd.f32 %v4395, %v4465
  %v4467 = vpop.f32.mrf.mxu0
  %v4468 = vadd.f32 %v4397, %v4467
  %v4469 = vpop.f32.mrf.mxu0
  %v4470 = vadd.f32 %v4399, %v4469
  %v4471 = vpop.f32.mrf.mxu0
  %v4472 = vadd.f32 %v4401, %v4471
  %4473 = vmatprep.mubr.bf16.mxu0 %v874
  %4474 = vmatmul.mubr.bf16.gmra.mxu0 %v873
  %v4475 = vpop.f32.mrf.mxu0
  %v4476 = vadd.f32 %v4405, %v4475
  %v4477 = vpop.f32.mrf.mxu0
  %v4478 = vadd.f32 %v4407, %v4477
  %v4479 = vpop.f32.mrf.mxu0
  %v4480 = vadd.f32 %v4409, %v4479
  %v4481 = vpop.f32.mrf.mxu0
  %v4482 = vadd.f32 %v4411, %v4481
  %4483 = vmatprep.mubr.bf16.mxu0 %v892
  %4484 = vmatmul.mubr.bf16.gmra.mxu0 %v891
  %v4485 = vpop.f32.mrf.mxu0
  %v4486 = vadd.f32 %v4415, %v4485
  %v4487 = vpop.f32.mrf.mxu0
  %v4488 = vadd.f32 %v4417, %v4487
  %v4489 = vpop.f32.mrf.mxu0
  %v4490 = vadd.f32 %v4419, %v4489
  %v4491 = vpop.f32.mrf.mxu0
  %v4492 = vadd.f32 %v4421, %v4491
  %4493 = vmatprep.mubr.bf16.mxu0 %v910
  %4494 = vmatmul.mubr.bf16.gmra.mxu0 %v909
  %v4495 = vpop.f32.mrf.mxu0
  %v4496 = vadd.f32 %v4425, %v4495
  %v4497 = vpop.f32.mrf.mxu0
  %v4498 = vadd.f32 %v4427, %v4497
  %v4499 = vpop.f32.mrf.mxu0
  %v4500 = vpop.f32.mrf.mxu0
  %4501 = vdwg.mxu0
  %4502 = vmatprep.subr.bf16.mxu0 %v2742
  %4503 = vmatpush1.bf16.msra.mxu0 %v2741
  %4504 = vmatprep.subr.bf16.mxu0 %v2738
  %4505 = vmatpush1.bf16.msra.mxu0 %v2737
  %4506 = vmatprep.subr.bf16.mxu0 %v2734
  %4507 = vmatpush1.bf16.msra.mxu0 %v2733
  %4508 = vmatprep.subr.bf16.mxu0 %v2730
  %4509 = vmatpush1.bf16.msra.mxu0 %v2729
  %4510 = vmatprep.subr.bf16.mxu0 %v2726
  %4511 = vmatpush1.bf16.msra.mxu0 %v2725
  %4512 = vmatprep.subr.bf16.mxu0 %v2722
  %4513 = vmatpush1.bf16.msra.mxu0 %v2721
  %4514 = vmatprep.subr.bf16.mxu0 %v2718
  %4515 = vmatpush1.bf16.msra.mxu0 %v2717
  %4516 = vmatprep.subr.bf16.mxu0 %v2714
  %4517 = vmatpush1.bf16.msra.mxu0 %v2713
  %4518 = vmatprep.subr.bf16.mxu0 %v2774
  %4519 = vmatpush2.bf16.msra.mxu0 %v2773
  %4520 = vmatprep.subr.bf16.mxu0 %v2770
  %4521 = vmatpush2.bf16.msra.mxu0 %v2769
  %4522 = vmatprep.subr.bf16.mxu0 %v2766
  %4523 = vmatpush2.bf16.msra.mxu0 %v2765
  %4524 = vmatprep.subr.bf16.mxu0 %v2762
  %4525 = vmatpush2.bf16.msra.mxu0 %v2761
  %4526 = vmatprep.subr.bf16.mxu0 %v2758
  %4527 = vmatpush2.bf16.msra.mxu0 %v2757
  %4528 = vmatprep.subr.bf16.mxu0 %v2754
  %4529 = vmatpush2.bf16.msra.mxu0 %v2753
  %4530 = vmatprep.subr.bf16.mxu0 %v2750
  %4531 = vmatpush2.bf16.msra.mxu0 %v2749
  %4532 = vmatprep.subr.bf16.mxu0 %v2746
  %4533 = vmatpush2.bf16.msra.mxu0 %v2745
  %4534 = vmatprep.mubr.bf16.mxu0 %v840
  %4535 = vmatmul.mubr.bf16.gmra.mxu0 %v839
  %v4536 = vpop.f32.mrf.mxu0
  %v4537 = vadd.f32 0.0, %v4536
  %v4538 = vpop.f32.mrf.mxu0
  %v4539 = vadd.f32 0.0, %v4538
  %v4540 = vpop.f32.mrf.mxu0
  %v4541 = vadd.f32 0.0, %v4540
  %v4542 = vpop.f32.mrf.mxu0
  %v4543 = vadd.f32 0.0, %v4542
  %4544 = vmatprep.mubr.bf16.mxu0 %v858
  %4545 = vmatmul.mubr.bf16.gmra.mxu0 %v857
  %v4546 = vpop.f32.mrf.mxu0
  %v4547 = vadd.f32 0.0, %v4546
  %v4548 = vpop.f32.mrf.mxu0
  %v4549 = vadd.f32 0.0, %v4548
  %v4550 = vpop.f32.mrf.mxu0
  %v4551 = vadd.f32 0.0, %v4550
  %v4552 = vpop.f32.mrf.mxu0
  %v4553 = vadd.f32 0.0, %v4552
  %4554 = vmatprep.mubr.bf16.mxu0 %v876
  %4555 = vmatmul.mubr.bf16.gmra.mxu0 %v875
  %v4556 = vpop.f32.mrf.mxu0
  %v4557 = vadd.f32 0.0, %v4556
  %v4558 = vpop.f32.mrf.mxu0
  %v4559 = vadd.f32 0.0, %v4558
  %v4560 = vpop.f32.mrf.mxu0
  %v4561 = vadd.f32 0.0, %v4560
  %v4562 = vpop.f32.mrf.mxu0
  %v4563 = vadd.f32 0.0, %v4562
  %4564 = vmatprep.mubr.bf16.mxu0 %v894
  %4565 = vmatmul.mubr.bf16.gmra.mxu0 %v893
  %v4566 = vpop.f32.mrf.mxu0
  %v4567 = vadd.f32 0.0, %v4566
  %v4568 = vpop.f32.mrf.mxu0
  %v4569 = vadd.f32 0.0, %v4568
  %v4570 = vpop.f32.mrf.mxu0
  %v4571 = vpop.f32.mrf.mxu0
  %4572 = vdwg.mxu0
  %4573 = vmatprep.subr.bf16.mxu0 %v2806
  %4574 = vmatpush1.bf16.msra.mxu0 %v2805
  %4575 = vmatprep.subr.bf16.mxu0 %v2802
  %4576 = vmatpush1.bf16.msra.mxu0 %v2801
  %4577 = vmatprep.subr.bf16.mxu0 %v2798
  %4578 = vmatpush1.bf16.msra.mxu0 %v2797
  %4579 = vmatprep.subr.bf16.mxu0 %v2794
  %4580 = vmatpush1.bf16.msra.mxu0 %v2793
  %4581 = vmatprep.subr.bf16.mxu0 %v2790
  %4582 = vmatpush1.bf16.msra.mxu0 %v2789
  %4583 = vmatprep.subr.bf16.mxu0 %v2786
  %4584 = vmatpush1.bf16.msra.mxu0 %v2785
  %4585 = vmatprep.subr.bf16.mxu0 %v2782
  %4586 = vmatpush1.bf16.msra.mxu0 %v2781
  %4587 = vmatprep.subr.bf16.mxu0 %v2778
  %4588 = vmatpush1.bf16.msra.mxu0 %v2777
  %4589 = vmatprep.subr.bf16.mxu0 %v2838
  %4590 = vmatpush2.bf16.msra.mxu0 %v2837
  %4591 = vmatprep.subr.bf16.mxu0 %v2834
  %4592 = vmatpush2.bf16.msra.mxu0 %v2833
  %4593 = vmatprep.subr.bf16.mxu0 %v2830
  %4594 = vmatpush2.bf16.msra.mxu0 %v2829
  %4595 = vmatprep.subr.bf16.mxu0 %v2826
  %4596 = vmatpush2.bf16.msra.mxu0 %v2825
  %4597 = vmatprep.subr.bf16.mxu0 %v2822
  %4598 = vmatpush2.bf16.msra.mxu0 %v2821
  %4599 = vmatprep.subr.bf16.mxu0 %v2818
  %4600 = vmatpush2.bf16.msra.mxu0 %v2817
  %4601 = vmatprep.subr.bf16.mxu0 %v2814
  %4602 = vmatpush2.bf16.msra.mxu0 %v2813
  %4603 = vmatprep.subr.bf16.mxu0 %v2810
  %4604 = vmatpush2.bf16.msra.mxu0 %v2809
  %4605 = vmatprep.mubr.bf16.mxu0 %v842
  %4606 = vmatmul.mubr.bf16.gmra.mxu0 %v841
  %v4607 = vpop.f32.mrf.mxu0
  %v4608 = vadd.f32 %v4537, %v4607
  %v4609 = vpop.f32.mrf.mxu0
  %v4610 = vadd.f32 %v4539, %v4609
  %v4611 = vpop.f32.mrf.mxu0
  %v4612 = vadd.f32 %v4541, %v4611
  %v4613 = vpop.f32.mrf.mxu0
  %v4614 = vadd.f32 %v4543, %v4613
  %4615 = vmatprep.mubr.bf16.mxu0 %v860
  %4616 = vmatmul.mubr.bf16.gmra.mxu0 %v859
  %v4617 = vpop.f32.mrf.mxu0
  %v4618 = vadd.f32 %v4547, %v4617
  %v4619 = vpop.f32.mrf.mxu0
  %v4620 = vadd.f32 %v4549, %v4619
  %v4621 = vpop.f32.mrf.mxu0
  %v4622 = vadd.f32 %v4551, %v4621
  %v4623 = vpop.f32.mrf.mxu0
  %v4624 = vadd.f32 %v4553, %v4623
  %4625 = vmatprep.mubr.bf16.mxu0 %v878
  %4626 = vmatmul.mubr.bf16.gmra.mxu0 %v877
  %v4627 = vpop.f32.mrf.mxu0
  %v4628 = vadd.f32 %v4557, %v4627
  %v4629 = vpop.f32.mrf.mxu0
  %v4630 = vadd.f32 %v4559, %v4629
  %v4631 = vpop.f32.mrf.mxu0
  %v4632 = vadd.f32 %v4561, %v4631
  %v4633 = vpop.f32.mrf.mxu0
  %v4634 = vadd.f32 %v4563, %v4633
  %4635 = vmatprep.mubr.bf16.mxu0 %v896
  %4636 = vmatmul.mubr.bf16.gmra.mxu0 %v895
  %v4637 = vpop.f32.mrf.mxu0
  %v4638 = vadd.f32 %v4567, %v4637
  %v4639 = vpop.f32.mrf.mxu0
  %v4640 = vadd.f32 %v4569, %v4639
  %v4641 = vpop.f32.mrf.mxu0
  %v4642 = vpop.f32.mrf.mxu0
  %4643 = vdwg.mxu0
  %4644 = vmatprep.subr.bf16.mxu0 %v2870
  %4645 = vmatpush1.bf16.msra.mxu0 %v2869
  %4646 = vmatprep.subr.bf16.mxu0 %v2866
  %4647 = vmatpush1.bf16.msra.mxu0 %v2865
  %4648 = vmatprep.subr.bf16.mxu0 %v2862
  %4649 = vmatpush1.bf16.msra.mxu0 %v2861
  %4650 = vmatprep.subr.bf16.mxu0 %v2858
  %4651 = vmatpush1.bf16.msra.mxu0 %v2857
  %4652 = vmatprep.subr.bf16.mxu0 %v2854
  %4653 = vmatpush1.bf16.msra.mxu0 %v2853
  %4654 = vmatprep.subr.bf16.mxu0 %v2850
  %4655 = vmatpush1.bf16.msra.mxu0 %v2849
  %4656 = vmatprep.subr.bf16.mxu0 %v2846
  %4657 = vmatpush1.bf16.msra.mxu0 %v2845
  %4658 = vmatprep.subr.bf16.mxu0 %v2842
  %4659 = vmatpush1.bf16.msra.mxu0 %v2841
  %4660 = vmatprep.subr.bf16.mxu0 %v2902
  %4661 = vmatpush2.bf16.msra.mxu0 %v2901
  %4662 = vmatprep.subr.bf16.mxu0 %v2898
  %4663 = vmatpush2.bf16.msra.mxu0 %v2897
  %4664 = vmatprep.subr.bf16.mxu0 %v2894
  %4665 = vmatpush2.bf16.msra.mxu0 %v2893
  %4666 = vmatprep.subr.bf16.mxu0 %v2890
  %4667 = vmatpush2.bf16.msra.mxu0 %v2889
  %4668 = vmatprep.subr.bf16.mxu0 %v2886
  %4669 = vmatpush2.bf16.msra.mxu0 %v2885
  %4670 = vmatprep.subr.bf16.mxu0 %v2882
  %4671 = vmatpush2.bf16.msra.mxu0 %v2881
  %4672 = vmatprep.subr.bf16.mxu0 %v2878
  %4673 = vmatpush2.bf16.msra.mxu0 %v2877
  %4674 = vmatprep.subr.bf16.mxu0 %v2874
  %4675 = vmatpush2.bf16.msra.mxu0 %v2873
  %4676 = vmatprep.mubr.bf16.mxu0 %v844
  %4677 = vmatmul.mubr.bf16.gmra.mxu0 %v843
  %v4678 = vpop.f32.mrf.mxu0
  %v4679 = vadd.f32 %v4608, %v4678
  %v4680 = vpop.f32.mrf.mxu0
  %v4681 = vadd.f32 %v4610, %v4680
  %v4682 = vpop.f32.mrf.mxu0
  %v4683 = vadd.f32 %v4612, %v4682
  %v4684 = vpop.f32.mrf.mxu0
  %v4685 = vadd.f32 %v4614, %v4684
  %4686 = vmatprep.mubr.bf16.mxu0 %v862
  %4687 = vmatmul.mubr.bf16.gmra.mxu0 %v861
  %v4688 = vpop.f32.mrf.mxu0
  %v4689 = vadd.f32 %v4618, %v4688
  %v4690 = vpop.f32.mrf.mxu0
  %v4691 = vadd.f32 %v4620, %v4690
  %v4692 = vpop.f32.mrf.mxu0
  %v4693 = vadd.f32 %v4622, %v4692
  %v4694 = vpop.f32.mrf.mxu0
  %v4695 = vadd.f32 %v4624, %v4694
  %4696 = vmatprep.mubr.bf16.mxu0 %v880
  %4697 = vmatmul.mubr.bf16.gmra.mxu0 %v879
  %v4698 = vpop.f32.mrf.mxu0
  %v4699 = vadd.f32 %v4628, %v4698
  %v4700 = vpop.f32.mrf.mxu0
  %v4701 = vadd.f32 %v4630, %v4700
  %v4702 = vpop.f32.mrf.mxu0
  %v4703 = vadd.f32 %v4632, %v4702
  %v4704 = vpop.f32.mrf.mxu0
  %v4705 = vadd.f32 %v4634, %v4704
  %4706 = vmatprep.mubr.bf16.mxu0 %v898
  %4707 = vmatmul.mubr.bf16.gmra.mxu0 %v897
  %v4708 = vpop.f32.mrf.mxu0
  %v4709 = vadd.f32 %v4638, %v4708
  %v4710 = vpop.f32.mrf.mxu0
  %v4711 = vadd.f32 %v4640, %v4710
  %v4712 = vpop.f32.mrf.mxu0
  %v4713 = vpop.f32.mrf.mxu0
  %4714 = vdwg.mxu0
  %4715 = vmatprep.subr.bf16.mxu0 %v2934
  %4716 = vmatpush1.bf16.msra.mxu0 %v2933
  %4717 = vmatprep.subr.bf16.mxu0 %v2930
  %4718 = vmatpush1.bf16.msra.mxu0 %v2929
  %4719 = vmatprep.subr.bf16.mxu0 %v2926
  %4720 = vmatpush1.bf16.msra.mxu0 %v2925
  %4721 = vmatprep.subr.bf16.mxu0 %v2922
  %4722 = vmatpush1.bf16.msra.mxu0 %v2921
  %4723 = vmatprep.subr.bf16.mxu0 %v2918
  %4724 = vmatpush1.bf16.msra.mxu0 %v2917
  %4725 = vmatprep.subr.bf16.mxu0 %v2914
  %4726 = vmatpush1.bf16.msra.mxu0 %v2913
  %4727 = vmatprep.subr.bf16.mxu0 %v2910
  %4728 = vmatpush1.bf16.msra.mxu0 %v2909
  %4729 = vmatprep.subr.bf16.mxu0 %v2906
  %4730 = vmatpush1.bf16.msra.mxu0 %v2905
  %4731 = vmatprep.subr.bf16.mxu0 %v2966
  %4732 = vmatpush2.bf16.msra.mxu0 %v2965
  %4733 = vmatprep.subr.bf16.mxu0 %v2962
  %4734 = vmatpush2.bf16.msra.mxu0 %v2961
  %4735 = vmatprep.subr.bf16.mxu0 %v2958
  %4736 = vmatpush2.bf16.msra.mxu0 %v2957
  %4737 = vmatprep.subr.bf16.mxu0 %v2954
  %4738 = vmatpush2.bf16.msra.mxu0 %v2953
  %4739 = vmatprep.subr.bf16.mxu0 %v2950
  %4740 = vmatpush2.bf16.msra.mxu0 %v2949
  %4741 = vmatprep.subr.bf16.mxu0 %v2946
  %4742 = vmatpush2.bf16.msra.mxu0 %v2945
  %4743 = vmatprep.subr.bf16.mxu0 %v2942
  %4744 = vmatpush2.bf16.msra.mxu0 %v2941
  %4745 = vmatprep.subr.bf16.mxu0 %v2938
  %4746 = vmatpush2.bf16.msra.mxu0 %v2937
  %4747 = vmatprep.mubr.bf16.mxu0 %v846
  %4748 = vmatmul.mubr.bf16.gmra.mxu0 %v845
  %v4749 = vpop.f32.mrf.mxu0
  %v4750 = vadd.f32 %v4679, %v4749
  %v4751 = vpop.f32.mrf.mxu0
  %v4752 = vadd.f32 %v4681, %v4751
  %v4753 = vpop.f32.mrf.mxu0
  %v4754 = vadd.f32 %v4683, %v4753
  %v4755 = vpop.f32.mrf.mxu0
  %v4756 = vadd.f32 %v4685, %v4755
  %4757 = vmatprep.mubr.bf16.mxu0 %v864
  %4758 = vmatmul.mubr.bf16.gmra.mxu0 %v863
  %v4759 = vpop.f32.mrf.mxu0
  %v4760 = vadd.f32 %v4689, %v4759
  %v4761 = vpop.f32.mrf.mxu0
  %v4762 = vadd.f32 %v4691, %v4761
  %v4763 = vpop.f32.mrf.mxu0
  %v4764 = vadd.f32 %v4693, %v4763
  %v4765 = vpop.f32.mrf.mxu0
  %v4766 = vadd.f32 %v4695, %v4765
  %4767 = vmatprep.mubr.bf16.mxu0 %v882
  %4768 = vmatmul.mubr.bf16.gmra.mxu0 %v881
  %v4769 = vpop.f32.mrf.mxu0
  %v4770 = vadd.f32 %v4699, %v4769
  %v4771 = vpop.f32.mrf.mxu0
  %v4772 = vadd.f32 %v4701, %v4771
  %v4773 = vpop.f32.mrf.mxu0
  %v4774 = vadd.f32 %v4703, %v4773
  %v4775 = vpop.f32.mrf.mxu0
  %v4776 = vadd.f32 %v4705, %v4775
  %4777 = vmatprep.mubr.bf16.mxu0 %v900
  %4778 = vmatmul.mubr.bf16.gmra.mxu0 %v899
  %v4779 = vpop.f32.mrf.mxu0
  %v4780 = vadd.f32 %v4709, %v4779
  %v4781 = vpop.f32.mrf.mxu0
  %v4782 = vadd.f32 %v4711, %v4781
  %v4783 = vpop.f32.mrf.mxu0
  %v4784 = vpop.f32.mrf.mxu0
  %4785 = vdwg.mxu0
  %4786 = vmatprep.subr.bf16.mxu0 %v2998
  %4787 = vmatpush1.bf16.msra.mxu0 %v2997
  %4788 = vmatprep.subr.bf16.mxu0 %v2994
  %4789 = vmatpush1.bf16.msra.mxu0 %v2993
  %4790 = vmatprep.subr.bf16.mxu0 %v2990
  %4791 = vmatpush1.bf16.msra.mxu0 %v2989
  %4792 = vmatprep.subr.bf16.mxu0 %v2986
  %4793 = vmatpush1.bf16.msra.mxu0 %v2985
  %4794 = vmatprep.subr.bf16.mxu0 %v2982
  %4795 = vmatpush1.bf16.msra.mxu0 %v2981
  %4796 = vmatprep.subr.bf16.mxu0 %v2978
  %4797 = vmatpush1.bf16.msra.mxu0 %v2977
  %4798 = vmatprep.subr.bf16.mxu0 %v2974
  %4799 = vmatpush1.bf16.msra.mxu0 %v2973
  %4800 = vmatprep.subr.bf16.mxu0 %v2970
  %4801 = vmatpush1.bf16.msra.mxu0 %v2969
  %4802 = vmatprep.subr.bf16.mxu0 %v3030
  %4803 = vmatpush2.bf16.msra.mxu0 %v3029
  %4804 = vmatprep.subr.bf16.mxu0 %v3026
  %4805 = vmatpush2.bf16.msra.mxu0 %v3025
  %4806 = vmatprep.subr.bf16.mxu0 %v3022
  %4807 = vmatpush2.bf16.msra.mxu0 %v3021
  %4808 = vmatprep.subr.bf16.mxu0 %v3018
  %4809 = vmatpush2.bf16.msra.mxu0 %v3017
  %4810 = vmatprep.subr.bf16.mxu0 %v3014
  %4811 = vmatpush2.bf16.msra.mxu0 %v3013
  %4812 = vmatprep.subr.bf16.mxu0 %v3010
  %4813 = vmatpush2.bf16.msra.mxu0 %v3009
  %4814 = vmatprep.subr.bf16.mxu0 %v3006
  %4815 = vmatpush2.bf16.msra.mxu0 %v3005
  %4816 = vmatprep.subr.bf16.mxu0 %v3002
  %4817 = vmatpush2.bf16.msra.mxu0 %v3001
  %4818 = vmatprep.mubr.bf16.mxu0 %v848
  %4819 = vmatmul.mubr.bf16.gmra.mxu0 %v847
  %v4820 = vpop.f32.mrf.mxu0
  %v4821 = vadd.f32 %v4750, %v4820
  %v4822 = vpop.f32.mrf.mxu0
  %v4823 = vadd.f32 %v4752, %v4822
  %v4824 = vpop.f32.mrf.mxu0
  %v4825 = vadd.f32 %v4754, %v4824
  %v4826 = vpop.f32.mrf.mxu0
  %v4827 = vadd.f32 %v4756, %v4826
  %4828 = vmatprep.mubr.bf16.mxu0 %v866
  %4829 = vmatmul.mubr.bf16.gmra.mxu0 %v865
  %v4830 = vpop.f32.mrf.mxu0
  %v4831 = vadd.f32 %v4760, %v4830
  %v4832 = vpop.f32.mrf.mxu0
  %v4833 = vadd.f32 %v4762, %v4832
  %v4834 = vpop.f32.mrf.mxu0
  %v4835 = vadd.f32 %v4764, %v4834
  %v4836 = vpop.f32.mrf.mxu0
  %v4837 = vadd.f32 %v4766, %v4836
  %4838 = vmatprep.mubr.bf16.mxu0 %v884
  %4839 = vmatmul.mubr.bf16.gmra.mxu0 %v883
  %v4840 = vpop.f32.mrf.mxu0
  %v4841 = vadd.f32 %v4770, %v4840
  %v4842 = vpop.f32.mrf.mxu0
  %v4843 = vadd.f32 %v4772, %v4842
  %v4844 = vpop.f32.mrf.mxu0
  %v4845 = vadd.f32 %v4774, %v4844
  %v4846 = vpop.f32.mrf.mxu0
  %v4847 = vadd.f32 %v4776, %v4846
  %4848 = vmatprep.mubr.bf16.mxu0 %v902
  %4849 = vmatmul.mubr.bf16.gmra.mxu0 %v901
  %v4850 = vpop.f32.mrf.mxu0
  %v4851 = vadd.f32 %v4780, %v4850
  %v4852 = vpop.f32.mrf.mxu0
  %v4853 = vadd.f32 %v4782, %v4852
  %v4854 = vpop.f32.mrf.mxu0
  %v4855 = vpop.f32.mrf.mxu0
  %4856 = vdwg.mxu0
  %4857 = vmatprep.subr.bf16.mxu0 %v3062
  %4858 = vmatpush1.bf16.msra.mxu0 %v3061
  %4859 = vmatprep.subr.bf16.mxu0 %v3058
  %4860 = vmatpush1.bf16.msra.mxu0 %v3057
  %4861 = vmatprep.subr.bf16.mxu0 %v3054
  %4862 = vmatpush1.bf16.msra.mxu0 %v3053
  %4863 = vmatprep.subr.bf16.mxu0 %v3050
  %4864 = vmatpush1.bf16.msra.mxu0 %v3049
  %4865 = vmatprep.subr.bf16.mxu0 %v3046
  %4866 = vmatpush1.bf16.msra.mxu0 %v3045
  %4867 = vmatprep.subr.bf16.mxu0 %v3042
  %4868 = vmatpush1.bf16.msra.mxu0 %v3041
  %4869 = vmatprep.subr.bf16.mxu0 %v3038
  %4870 = vmatpush1.bf16.msra.mxu0 %v3037
  %4871 = vmatprep.subr.bf16.mxu0 %v3034
  %4872 = vmatpush1.bf16.msra.mxu0 %v3033
  %4873 = vmatprep.subr.bf16.mxu0 %v3094
  %4874 = vmatpush2.bf16.msra.mxu0 %v3093
  %4875 = vmatprep.subr.bf16.mxu0 %v3090
  %4876 = vmatpush2.bf16.msra.mxu0 %v3089
  %4877 = vmatprep.subr.bf16.mxu0 %v3086
  %4878 = vmatpush2.bf16.msra.mxu0 %v3085
  %4879 = vmatprep.subr.bf16.mxu0 %v3082
  %4880 = vmatpush2.bf16.msra.mxu0 %v3081
  %4881 = vmatprep.subr.bf16.mxu0 %v3078
  %4882 = vmatpush2.bf16.msra.mxu0 %v3077
  %4883 = vmatprep.subr.bf16.mxu0 %v3074
  %4884 = vmatpush2.bf16.msra.mxu0 %v3073
  %4885 = vmatprep.subr.bf16.mxu0 %v3070
  %4886 = vmatpush2.bf16.msra.mxu0 %v3069
  %4887 = vmatprep.subr.bf16.mxu0 %v3066
  %4888 = vmatpush2.bf16.msra.mxu0 %v3065
  %4889 = vmatprep.mubr.bf16.mxu0 %v850
  %4890 = vmatmul.mubr.bf16.gmra.mxu0 %v849
  %v4891 = vpop.f32.mrf.mxu0
  %v4892 = vadd.f32 %v4821, %v4891
  %v4893 = vpop.f32.mrf.mxu0
  %v4894 = vadd.f32 %v4823, %v4893
  %v4895 = vpop.f32.mrf.mxu0
  %v4896 = vadd.f32 %v4825, %v4895
  %v4897 = vpop.f32.mrf.mxu0
  %v4898 = vadd.f32 %v4827, %v4897
  %4899 = vmatprep.mubr.bf16.mxu0 %v868
  %4900 = vmatmul.mubr.bf16.gmra.mxu0 %v867
  %v4901 = vpop.f32.mrf.mxu0
  %v4902 = vadd.f32 %v4831, %v4901
  %v4903 = vpop.f32.mrf.mxu0
  %v4904 = vadd.f32 %v4833, %v4903
  %v4905 = vpop.f32.mrf.mxu0
  %v4906 = vadd.f32 %v4835, %v4905
  %v4907 = vpop.f32.mrf.mxu0
  %v4908 = vadd.f32 %v4837, %v4907
  %4909 = vmatprep.mubr.bf16.mxu0 %v886
  %4910 = vmatmul.mubr.bf16.gmra.mxu0 %v885
  %v4911 = vpop.f32.mrf.mxu0
  %v4912 = vadd.f32 %v4841, %v4911
  %v4913 = vpop.f32.mrf.mxu0
  %v4914 = vadd.f32 %v4843, %v4913
  %v4915 = vpop.f32.mrf.mxu0
  %v4916 = vadd.f32 %v4845, %v4915
  %v4917 = vpop.f32.mrf.mxu0
  %v4918 = vadd.f32 %v4847, %v4917
  %4919 = vmatprep.mubr.bf16.mxu0 %v904
  %4920 = vmatmul.mubr.bf16.gmra.mxu0 %v903
  %v4921 = vpop.f32.mrf.mxu0
  %v4922 = vadd.f32 %v4851, %v4921
  %v4923 = vpop.f32.mrf.mxu0
  %v4924 = vadd.f32 %v4853, %v4923
  %v4925 = vpop.f32.mrf.mxu0
  %v4926 = vpop.f32.mrf.mxu0
  %4927 = vdwg.mxu0
  %4928 = vmatprep.subr.bf16.mxu0 %v3126
  %4929 = vmatpush1.bf16.msra.mxu0 %v3125
  %4930 = vmatprep.subr.bf16.mxu0 %v3122
  %4931 = vmatpush1.bf16.msra.mxu0 %v3121
  %4932 = vmatprep.subr.bf16.mxu0 %v3118
  %4933 = vmatpush1.bf16.msra.mxu0 %v3117
  %4934 = vmatprep.subr.bf16.mxu0 %v3114
  %4935 = vmatpush1.bf16.msra.mxu0 %v3113
  %4936 = vmatprep.subr.bf16.mxu0 %v3110
  %4937 = vmatpush1.bf16.msra.mxu0 %v3109
  %4938 = vmatprep.subr.bf16.mxu0 %v3106
  %4939 = vmatpush1.bf16.msra.mxu0 %v3105
  %4940 = vmatprep.subr.bf16.mxu0 %v3102
  %4941 = vmatpush1.bf16.msra.mxu0 %v3101
  %4942 = vmatprep.subr.bf16.mxu0 %v3098
  %4943 = vmatpush1.bf16.msra.mxu0 %v3097
  %4944 = vmatprep.subr.bf16.mxu0 %v3158
  %4945 = vmatpush2.bf16.msra.mxu0 %v3157
  %4946 = vmatprep.subr.bf16.mxu0 %v3154
  %4947 = vmatpush2.bf16.msra.mxu0 %v3153
  %4948 = vmatprep.subr.bf16.mxu0 %v3150
  %4949 = vmatpush2.bf16.msra.mxu0 %v3149
  %4950 = vmatprep.subr.bf16.mxu0 %v3146
  %4951 = vmatpush2.bf16.msra.mxu0 %v3145
  %4952 = vmatprep.subr.bf16.mxu0 %v3142
  %4953 = vmatpush2.bf16.msra.mxu0 %v3141
  %4954 = vmatprep.subr.bf16.mxu0 %v3138
  %4955 = vmatpush2.bf16.msra.mxu0 %v3137
  %4956 = vmatprep.subr.bf16.mxu0 %v3134
  %4957 = vmatpush2.bf16.msra.mxu0 %v3133
  %4958 = vmatprep.subr.bf16.mxu0 %v3130
  %4959 = vmatpush2.bf16.msra.mxu0 %v3129
  %4960 = vmatprep.mubr.bf16.mxu0 %v852
  %4961 = vmatmul.mubr.bf16.gmra.mxu0 %v851
  %v4962 = vpop.f32.mrf.mxu0
  %v4963 = vadd.f32 %v4892, %v4962
  %v4964 = vpop.f32.mrf.mxu0
  %v4965 = vadd.f32 %v4894, %v4964
  %v4966 = vpop.f32.mrf.mxu0
  %v4967 = vadd.f32 %v4896, %v4966
  %v4968 = vpop.f32.mrf.mxu0
  %v4969 = vadd.f32 %v4898, %v4968
  %4970 = vmatprep.mubr.bf16.mxu0 %v870
  %4971 = vmatmul.mubr.bf16.gmra.mxu0 %v869
  %v4972 = vpop.f32.mrf.mxu0
  %v4973 = vadd.f32 %v4902, %v4972
  %v4974 = vpop.f32.mrf.mxu0
  %v4975 = vadd.f32 %v4904, %v4974
  %v4976 = vpop.f32.mrf.mxu0
  %v4977 = vadd.f32 %v4906, %v4976
  %v4978 = vpop.f32.mrf.mxu0
  %v4979 = vadd.f32 %v4908, %v4978
  %4980 = vmatprep.mubr.bf16.mxu0 %v888
  %4981 = vmatmul.mubr.bf16.gmra.mxu0 %v887
  %v4982 = vpop.f32.mrf.mxu0
  %v4983 = vadd.f32 %v4912, %v4982
  %v4984 = vpop.f32.mrf.mxu0
  %v4985 = vadd.f32 %v4914, %v4984
  %v4986 = vpop.f32.mrf.mxu0
  %v4987 = vadd.f32 %v4916, %v4986
  %v4988 = vpop.f32.mrf.mxu0
  %v4989 = vadd.f32 %v4918, %v4988
  %4990 = vmatprep.mubr.bf16.mxu0 %v906
  %4991 = vmatmul.mubr.bf16.gmra.mxu0 %v905
  %v4992 = vpop.f32.mrf.mxu0
  %v4993 = vadd.f32 %v4922, %v4992
  %v4994 = vpop.f32.mrf.mxu0
  %v4995 = vadd.f32 %v4924, %v4994
  %v4996 = vpop.f32.mrf.mxu0
  %v4997 = vpop.f32.mrf.mxu0
  %4998 = vdwg.mxu0
  %4999 = vmatprep.subr.bf16.mxu0 %v3190
  %5000 = vmatpush1.bf16.msra.mxu0 %v3189
  %5001 = vmatprep.subr.bf16.mxu0 %v3186
  %5002 = vmatpush1.bf16.msra.mxu0 %v3185
  %5003 = vmatprep.subr.bf16.mxu0 %v3182
  %5004 = vmatpush1.bf16.msra.mxu0 %v3181
  %5005 = vmatprep.subr.bf16.mxu0 %v3178
  %5006 = vmatpush1.bf16.msra.mxu0 %v3177
  %5007 = vmatprep.subr.bf16.mxu0 %v3174
  %5008 = vmatpush1.bf16.msra.mxu0 %v3173
  %5009 = vmatprep.subr.bf16.mxu0 %v3170
  %5010 = vmatpush1.bf16.msra.mxu0 %v3169
  %5011 = vmatprep.subr.bf16.mxu0 %v3166
  %5012 = vmatpush1.bf16.msra.mxu0 %v3165
  %5013 = vmatprep.subr.bf16.mxu0 %v3162
  %5014 = vmatpush1.bf16.msra.mxu0 %v3161
  %5015 = vmatprep.subr.bf16.mxu0 %v3222
  %5016 = vmatpush2.bf16.msra.mxu0 %v3221
  %5017 = vmatprep.subr.bf16.mxu0 %v3218
  %5018 = vmatpush2.bf16.msra.mxu0 %v3217
  %5019 = vmatprep.subr.bf16.mxu0 %v3214
  %5020 = vmatpush2.bf16.msra.mxu0 %v3213
  %5021 = vmatprep.subr.bf16.mxu0 %v3210
  %5022 = vmatpush2.bf16.msra.mxu0 %v3209
  %5023 = vmatprep.subr.bf16.mxu0 %v3206
  %5024 = vmatpush2.bf16.msra.mxu0 %v3205
  %5025 = vmatprep.subr.bf16.mxu0 %v3202
  %5026 = vmatpush2.bf16.msra.mxu0 %v3201
  %5027 = vmatprep.subr.bf16.mxu0 %v3198
  %5028 = vmatpush2.bf16.msra.mxu0 %v3197
  %5029 = vmatprep.subr.bf16.mxu0 %v3194
  %5030 = vmatpush2.bf16.msra.mxu0 %v3193
  %5031 = vmatprep.mubr.bf16.mxu0 %v854
  %5032 = vmatmul.mubr.bf16.gmra.mxu0 %v853
  %v5033 = vpop.f32.mrf.mxu0
  %v5034 = vadd.f32 %v4963, %v5033
  %v5035 = vpop.f32.mrf.mxu0
  %v5036 = vadd.f32 %v4965, %v5035
  %v5037 = vpop.f32.mrf.mxu0
  %v5038 = vadd.f32 %v4967, %v5037
  %v5039 = vpop.f32.mrf.mxu0
  %v5040 = vadd.f32 %v4969, %v5039
  %5041 = vmatprep.mubr.bf16.mxu0 %v872
  %5042 = vmatmul.mubr.bf16.gmra.mxu0 %v871
  %v5043 = vpop.f32.mrf.mxu0
  %v5044 = vadd.f32 %v4973, %v5043
  %v5045 = vpop.f32.mrf.mxu0
  %v5046 = vadd.f32 %v4975, %v5045
  %v5047 = vpop.f32.mrf.mxu0
  %v5048 = vadd.f32 %v4977, %v5047
  %v5049 = vpop.f32.mrf.mxu0
  %v5050 = vadd.f32 %v4979, %v5049
  %5051 = vmatprep.mubr.bf16.mxu0 %v890
  %5052 = vmatmul.mubr.bf16.gmra.mxu0 %v889
  %v5053 = vpop.f32.mrf.mxu0
  %v5054 = vadd.f32 %v4983, %v5053
  %v5055 = vpop.f32.mrf.mxu0
  %v5056 = vadd.f32 %v4985, %v5055
  %v5057 = vpop.f32.mrf.mxu0
  %v5058 = vadd.f32 %v4987, %v5057
  %v5059 = vpop.f32.mrf.mxu0
  %v5060 = vadd.f32 %v4989, %v5059
  %5061 = vmatprep.mubr.bf16.mxu0 %v908
  %5062 = vmatmul.mubr.bf16.gmra.mxu0 %v907
  %v5063 = vpop.f32.mrf.mxu0
  %v5064 = vadd.f32 %v4993, %v5063
  %v5065 = vpop.f32.mrf.mxu0
  %v5066 = vadd.f32 %v4995, %v5065
  %v5067 = vpop.f32.mrf.mxu0
  %v5068 = vpop.f32.mrf.mxu0
  %5069 = vdwg.mxu0
  %5070 = vmatprep.subr.bf16.mxu0 %v3254
  %5071 = vmatpush1.bf16.msra.mxu0 %v3253
  %5072 = vmatprep.subr.bf16.mxu0 %v3250
  %5073 = vmatpush1.bf16.msra.mxu0 %v3249
  %5074 = vmatprep.subr.bf16.mxu0 %v3246
  %5075 = vmatpush1.bf16.msra.mxu0 %v3245
  %5076 = vmatprep.subr.bf16.mxu0 %v3242
  %5077 = vmatpush1.bf16.msra.mxu0 %v3241
  %5078 = vmatprep.subr.bf16.mxu0 %v3238
  %5079 = vmatpush1.bf16.msra.mxu0 %v3237
  %5080 = vmatprep.subr.bf16.mxu0 %v3234
  %5081 = vmatpush1.bf16.msra.mxu0 %v3233
  %5082 = vmatprep.subr.bf16.mxu0 %v3230
  %5083 = vmatpush1.bf16.msra.mxu0 %v3229
  %5084 = vmatprep.subr.bf16.mxu0 %v3226
  %5085 = vmatpush1.bf16.msra.mxu0 %v3225
  %5086 = vmatprep.subr.bf16.mxu0 %v3286
  %5087 = vmatpush2.bf16.msra.mxu0 %v3285
  %5088 = vmatprep.subr.bf16.mxu0 %v3282
  %5089 = vmatpush2.bf16.msra.mxu0 %v3281
  %5090 = vmatprep.subr.bf16.mxu0 %v3278
  %5091 = vmatpush2.bf16.msra.mxu0 %v3277
  %5092 = vmatprep.subr.bf16.mxu0 %v3274
  %5093 = vmatpush2.bf16.msra.mxu0 %v3273
  %5094 = vmatprep.subr.bf16.mxu0 %v3270
  %5095 = vmatpush2.bf16.msra.mxu0 %v3269
  %5096 = vmatprep.subr.bf16.mxu0 %v3266
  %5097 = vmatpush2.bf16.msra.mxu0 %v3265
  %5098 = vmatprep.subr.bf16.mxu0 %v3262
  %5099 = vmatpush2.bf16.msra.mxu0 %v3261
  %5100 = vmatprep.subr.bf16.mxu0 %v3258
  %5101 = vmatpush2.bf16.msra.mxu0 %v3257
  %5102 = vmatprep.mubr.bf16.mxu0 %v856
  %5103 = vmatmul.mubr.bf16.gmra.mxu0 %v855
  %v5104 = vpop.f32.mrf.mxu0
  %v5105 = vadd.f32 %v5034, %v5104
  %v5106 = vpop.f32.mrf.mxu0
  %v5107 = vadd.f32 %v5036, %v5106
  %v5108 = vpop.f32.mrf.mxu0
  %v5109 = vadd.f32 %v5038, %v5108
  %v5110 = vpop.f32.mrf.mxu0
  %v5111 = vadd.f32 %v5040, %v5110
  %5112 = vmatprep.mubr.bf16.mxu0 %v874
  %5113 = vmatmul.mubr.bf16.gmra.mxu0 %v873
  %v5114 = vpop.f32.mrf.mxu0
  %v5115 = vadd.f32 %v5044, %v5114
  %v5116 = vpop.f32.mrf.mxu0
  %v5117 = vadd.f32 %v5046, %v5116
  %v5118 = vpop.f32.mrf.mxu0
  %v5119 = vadd.f32 %v5048, %v5118
  %v5120 = vpop.f32.mrf.mxu0
  %v5121 = vadd.f32 %v5050, %v5120
  %5122 = vmatprep.mubr.bf16.mxu0 %v892
  %5123 = vmatmul.mubr.bf16.gmra.mxu0 %v891
  %v5124 = vpop.f32.mrf.mxu0
  %v5125 = vadd.f32 %v5054, %v5124
  %v5126 = vpop.f32.mrf.mxu0
  %v5127 = vadd.f32 %v5056, %v5126
  %v5128 = vpop.f32.mrf.mxu0
  %v5129 = vadd.f32 %v5058, %v5128
  %v5130 = vpop.f32.mrf.mxu0
  %v5131 = vadd.f32 %v5060, %v5130
  %5132 = vmatprep.mubr.bf16.mxu0 %v910
  %5133 = vmatmul.mubr.bf16.gmra.mxu0 %v909
  %v5134 = vpop.f32.mrf.mxu0
  %v5135 = vadd.f32 %v5064, %v5134
  %v5136 = vpop.f32.mrf.mxu0
  %v5137 = vadd.f32 %v5066, %v5136
  %v5138 = vpop.f32.mrf.mxu0
  %v5139 = vpop.f32.mrf.mxu0
  %5140 = vdwg.mxu0
  %5141 = vst [vmem:[%s2] sm:$0xff] %v4466
  %5142 = vst [vmem:[%s2 + $0x8] sm:$0xff] %v4468
  %5143 = vst [vmem:[%s2 + $0x10] sm:$0xff] %v5105
  %5144 = vst [vmem:[%s2 + $0x18] sm:$0xff] %v5107
  %5145 = vst [vmem:[%s2 + $0x20] sm:$0xff] %v4470
  %5146 = vst [vmem:[%s2 + $0x28] sm:$0xff] %v4472
  %5147 = vst [vmem:[%s2 + $0x30] sm:$0xff] %v5109
  %5148 = vst [vmem:[%s2 + $0x38] sm:$0xff] %v5111
  %5149 = vst [vmem:[%s2 + $0x40] sm:$0xff] %v4476
  %5150 = vst [vmem:[%s2 + $0x48] sm:$0xff] %v4478
  %5151 = vst [vmem:[%s2 + $0x50] sm:$0xff] %v5115
  %5152 = vst [vmem:[%s2 + $0x58] sm:$0xff] %v5117
  %5153 = vst [vmem:[%s2 + $0x60] sm:$0xff] %v4480
  %5154 = vst [vmem:[%s2 + $0x68] sm:$0xff] %v4482
  %5155 = vst [vmem:[%s2 + $0x70] sm:$0xff] %v5119
  %5156 = vst [vmem:[%s2 + $0x78] sm:$0xff] %v5121
  %5157 = vst [vmem:[%s2 + $0x80] sm:$0xff] %v4486
  %5158 = vst [vmem:[%s2 + $0x88] sm:$0xff] %v4488
  %5159 = vst [vmem:[%s2 + $0x90] sm:$0xff] %v5125
  %5160 = vst [vmem:[%s2 + $0x98] sm:$0xff] %v5127
  %5161 = vst [vmem:[%s2 + $0xa0] sm:$0xff] %v4490
  %5162 = vst [vmem:[%s2 + $0xa8] sm:$0xff] %v4492
  %5163 = vst [vmem:[%s2 + $0xb0] sm:$0xff] %v5129
  %5164 = vst [vmem:[%s2 + $0xb8] sm:$0xff] %v5131
  %5165 = vst [vmem:[%s2 + $0xc0] sm:$0xff] %v4496
  %5166 = vst [vmem:[%s2 + $0xc8] sm:$0xff] %v4498
  %5167 = vst [vmem:[%s2 + $0xd0] sm:$0xff] %v5135
  %5168 = vst [vmem:[%s2 + $0xd8] sm:$0xff] %v5137
  // Predicated region
  $region10: #{kernel_generated_5_forward.1} parent=0 // pred_check
    _
  $region11: #{kernel_generated_5_forward.1} parent=0 // pred_check_branch
    %5170 = sbr.rel (0) target = $region13
  $region12: #{kernel_generated_5_forward.1} parent=0 // pred_region
    _
  $region13: #{kernel_generated_5_forward.1} parent=0 // pred_fallthru
    _
  // Predicated region
  $region14: #{kernel_generated_5_forward.1} parent=0 // pred_check
    _
  $region15: #{kernel_generated_5_forward.1} parent=0 // pred_check_branch
    %5172 = sbr.rel (0) target = $region17
  $region16: #{kernel_generated_5_forward.1} parent=0 // pred_region
    _
  $region17: #{kernel_generated_5_forward.1} parent=0 // pred_fallthru
    _

</llo_original>
